<compile_context>
chip_gen: v7x
topology: tpu7x:2x2x1
jax: 0.10.0
libtpu: 0.0.40
codegen_flags: <defaults>
</compile_context>

<pallas_src>
import functools
import math

import jax
import jax.numpy as jnp
from jax.experimental import pallas as pl
from jax.experimental.pallas import tpu as pltpu


# ---------------------------------------------------------------------------
# Shared math helpers (used by both the kernel and the pure-JAX reference)
# ---------------------------------------------------------------------------
def _gelu_tanh(x):
    # tanh approximation of GELU (PyTorch F.gelu defaults to the erf form; the
    # approximation deviates by at most ~1e-3).
    # TODO(synk): switch to exact erf-based GELU if lax.erf lowering is available.
    c = 0.7978845608028654  # sqrt(2/pi)
    return 0.5 * x * (1.0 + jnp.tanh(c * (x + 0.044715 * x * x * x)))


def _layer_norm(h, gamma, beta, eps):
    mu = jnp.mean(h, axis=-1, keepdims=True)
    var = jnp.mean(jnp.square(h - mu), axis=-1, keepdims=True)
    return (h - mu) * jax.lax.rsqrt(var + eps) * gamma + beta


# ---------------------------------------------------------------------------
# Fused DecoderBlock kernel: one grid step == one batch element
# ---------------------------------------------------------------------------
def _decoder_block_kernel(
    x_ref, mask_ref,
    wqkv_ref, bqkv_ref, wo_ref, bo_ref,
    g1_ref, be1_ref, w1_ref, b1_ref, w2_ref, b2_ref, g2_ref, be2_ref,
    o_ref, *, n_heads, use_bf16, eps,
):
    x = x_ref[0].astype(jnp.float32)          # (S, D)
    mask = mask_ref[...]                      # (S, S) additive mask (0 / -1e9)
    D = x.shape[1]
    d_head = D // n_heads
    scale = 1.0 / math.sqrt(d_head)

    cast = (lambda a: a.astype(jnp.bfloat16)) if use_bf16 else (lambda a: a)

    def mm(a, b):                             # a @ b, f32 accumulate on MXU
        return jnp.dot(cast(a), cast(b), preferred_element_type=jnp.float32)

    def mm_t(a, b):                           # a @ b.T, f32 accumulate on MXU
        return jax.lax.dot_general(
            cast(a), cast(b), (((1,), (1,)), ((), ())),
            preferred_element_type=jnp.float32)

    # ---- Multi-head self-attention -----------------------------------------
    # Single lane-dense fused projection for Q, K, V of all heads.
    qkv = mm(x, wqkv_ref[...]) + bqkv_ref[...]              # (S, 3*D)
    q = qkv[:, 0 * D:1 * D]                                  # (S, D)
    k = qkv[:, 1 * D:2 * D]                                  # (S, D)
    v = qkv[:, 2 * D:3 * D]                                  # (S, D)

    ctx_heads = []
    for h in range(n_heads):                  # n_heads is small & static
        lo, hi = h * d_head, (h + 1) * d_head
        qh, kh, vh = q[:, lo:hi], k[:, lo:hi], v[:, lo:hi]   # (S, d_head)
        s = mm_t(qh, kh) * scale + mask                      # (S, S)
        s = s - jnp.max(s, axis=-1, keepdims=True)
        p = jnp.exp(s)
        inv = pl.reciprocal(jnp.sum(p, axis=-1, keepdims=True), approx=use_bf16)
        p = p * inv
        ctx_heads.append(mm(p, vh))                          # (S, d_head)
    ctx = jnp.concatenate(ctx_heads, axis=-1)                # (S, D)
    attn = mm(ctx, wo_ref[...]) + bo_ref[...]                # (S, D) lane-dense proj

    # ---- residual + LayerNorm 1 ---------------------------------------------
    x1 = _layer_norm(x + attn, g1_ref[...], be1_ref[...], eps)

    # ---- FeedForwardNetwork: Linear -> GELU -> Linear -> Dropout(identity) --
    f = _gelu_tanh(mm(x1, w1_ref[...]) + b1_ref[...])        # (S, hidden)
    f = mm(f, w2_ref[...]) + b2_ref[...]                     # (S, D)
    # nn.Dropout(ffn_dropout): identity in inference mode (no PRNG used).

    # ---- residual + LayerNorm 2 ---------------------------------------------
    x2 = _layer_norm(x1 + f, g2_ref[...], be2_ref[...], eps)
    o_ref[0] = x2.astype(o_ref.dtype)


# ---------------------------------------------------------------------------
# Public wrapper
# ---------------------------------------------------------------------------
def _full_spec(shape):
    ndim = len(shape)
    return pl.BlockSpec(shape, lambda b: (0,) * ndim)


def decoder_block(x, params, *, n_heads, mask=None, use_bf16_matmul=False, eps=1e-5):
    """x: [B, S, d_model].  mask: None, boolean [S, S] (True = attend), or an additive
    float [S, S] mask.  Returns [B, S, d_model] (matches DecoderBlock.forward)."""
    B, S, D = x.shape
    if mask is None:
        mask_add = jnp.zeros((S, S), jnp.float32)
    elif mask.dtype == jnp.bool_:
        mask_add = jnp.where(mask, 0.0, -1e9).astype(jnp.float32)
    else:
        mask_add = mask.astype(jnp.float32)

    kernel = functools.partial(
        _decoder_block_kernel, n_heads=n_heads, use_bf16=use_bf16_matmul, eps=eps)

    in_specs = [pl.BlockSpec((1, S, D), lambda b: (b, 0, 0)),   # x (per batch element)
                _full_spec(mask_add.shape)]                     # additive mask (shared)
    in_specs += [_full_spec(p.shape) for p in params]           # all weights, resident

    return pl.pallas_call(
        kernel,
        out_shape=jax.ShapeDtypeStruct((B, S, D), x.dtype),
        grid=(B,),
        in_specs=in_specs,
        out_specs=pl.BlockSpec((1, S, D), lambda b: (b, 0, 0)),
        compiler_params=pltpu.CompilerParams(
            dimension_semantics=("parallel",)),   # v7x: batch splits across the 2 TCs
    )(x, mask_add, *params)


# ---------------------------------------------------------------------------
# Deterministic parameter init (fused QKV layout)
# ---------------------------------------------------------------------------
def init_params(key, *, d_model, hidden_dim, n_heads):
    del n_heads  # layout is head-agnostic: heads are contiguous column groups
    ks = jax.random.split(key, 5)
    sd = 1.0 / math.sqrt(d_model)
    sh = 1.0 / math.sqrt(hidden_dim)
    wqkv = jax.random.normal(ks[0], (d_model, 3 * d_model), jnp.float32) * sd
    bqkv = jax.random.normal(ks[1], (1, 3 * d_model), jnp.float32) * 0.02
    wo = jax.random.normal(ks[2], (d_model, d_model), jnp.float32) * sd
    bo = jnp.zeros((1, d_model), jnp.float32)
    g1 = jnp.ones((1, d_model), jnp.float32)
    be1 = jnp.zeros((1, d_model), jnp.float32)
    w1 = jax.random.normal(ks[3], (d_model, hidden_dim), jnp.float32) * sd
    b1 = jnp.zeros((1, hidden_dim), jnp.float32)
    w2 = jax.random.normal(ks[4], (hidden_dim, d_model), jnp.float32) * sh
    b2 = jnp.zeros((1, d_model), jnp.float32)
    g2 = jnp.ones((1, d_model), jnp.float32)
    be2 = jnp.zeros((1, d_model), jnp.float32)
    return (wqkv, bqkv, wo, bo, g1, be1, w1, b1, w2, b2, g2, be2)


# ---------------------------------------------------------------------------
# Pure-JAX reference (same math) for a correctness check
# ---------------------------------------------------------------------------
def _ref_decoder_block(x, params, *, n_heads, mask=None, eps=1e-5):
    B, S, D = x.shape
    wqkv, bqkv, wo, bo, g1, be1, w1, b1, w2, b2, g2, be2 = params
    d_head = D // n_heads
    if mask is None:
        mask_add = jnp.zeros((S, S), jnp.float32)
    elif mask.dtype == jnp.bool_:
        mask_add = jnp.where(mask, 0.0, -1e9).astype(jnp.float32)
    else:
        mask_add = mask.astype(jnp.float32)

    qkv = x @ wqkv + bqkv[None]                      # (B, S, 3D)
    q, k, v = jnp.split(qkv, 3, axis=-1)
    q = q.reshape(B, S, n_heads, d_head).transpose(0, 2, 1, 3)
    k = k.reshape(B, S, n_heads, d_head).transpose(0, 2, 1, 3)
    v = v.reshape(B, S, n_heads, d_head).transpose(0, 2, 1, 3)
    s = jnp.einsum("bhse,bhte->bhst", q, k) / math.sqrt(d_head) + mask_add[None, None]
    p = jax.nn.softmax(s, axis=-1)
    ctx = jnp.einsum("bhst,bhte->bhse", p, v)
    ctx = ctx.transpose(0, 2, 1, 3).reshape(B, S, D)
    attn = ctx @ wo + bo[None]
    x1 = _layer_norm(x + attn, g1, be1, eps)
    f = _gelu_tanh(x1 @ w1 + b1[None])
    f = f @ w2 + b2[None]
    return _layer_norm(x1 + f, g2, be2, eps)


if __name__ == "__main__":
    # Small but lane-friendly shapes: d_model multiple of 128, seq multiple of 8.
    B, S, D, HID, NH = 2, 64, 128, 256, 4

    key = jax.random.PRNGKey(0)
    key, kx = jax.random.split(key)
    x = jax.random.normal(kx, (B, S, D), jnp.float32)
    params = init_params(key, d_model=D, hidden_dim=HID, n_heads=NH)
    causal_mask = jnp.tril(jnp.ones((S, S), dtype=jnp.bool_))   # decoder causal mask

    # f32 matmul path: must match the pure-JAX reference.
    out = decoder_block(x, params, n_heads=NH, mask=causal_mask)
    jax.block_until_ready(out)
    ref = _ref_decoder_block(x, params, n_heads=NH, mask=causal_mask)
    assert out.shape == (B, S, D)
    assert bool(jnp.all(jnp.isfinite(out)))
    assert jnp.allclose(out, ref, atol=3e-2, rtol=3e-2), float(jnp.max(jnp.abs(out - ref)))

    # bf16-operand / f32-accumulate MXU fast path (v6e/v7x) -- looser tolerance.
    out_bf16 = decoder_block(x, params, n_heads=NH, mask=causal_mask, use_bf16_matmul=True)
    jax.block_until_ready(out_bf16)
    assert out_bf16.shape == (B, S, D)
    assert jnp.allclose(out_bf16, ref, atol=1.5e-1, rtol=1.5e-1)

    print("KERNEL_OK")
</pallas_src>

<mosaic_0001>
module attributes {stable_mosaic.version = 11 : i64} {
  func.func @_decoder_block_kernel(%arg0: i32, %arg1: memref<1x64x128xf32, #tpu.memory_space<vmem>>, %arg2: memref<64x64xf32, #tpu.memory_space<vmem>>, %arg3: memref<128x384xf32, #tpu.memory_space<vmem>>, %arg4: memref<1x384xf32, #tpu.memory_space<vmem>>, %arg5: memref<128x128xf32, #tpu.memory_space<vmem>>, %arg6: memref<1x128xf32, #tpu.memory_space<vmem>>, %arg7: memref<1x128xf32, #tpu.memory_space<vmem>>, %arg8: memref<1x128xf32, #tpu.memory_space<vmem>>, %arg9: memref<128x256xf32, #tpu.memory_space<vmem>>, %arg10: memref<1x256xf32, #tpu.memory_space<vmem>>, %arg11: memref<256x128xf32, #tpu.memory_space<vmem>>, %arg12: memref<1x128xf32, #tpu.memory_space<vmem>>, %arg13: memref<1x128xf32, #tpu.memory_space<vmem>>, %arg14: memref<1x128xf32, #tpu.memory_space<vmem>>, %arg15: memref<1x64x128xf32, #tpu.memory_space<vmem>>) attributes {dimension_semantics = [#tpu.dimension_semantics<parallel>], iteration_bounds = array<i64: 2>, scalar_prefetch = 0 : i64, scratch_operands = 0 : i64, tpu.core_type = #tpu.core_type<tc>, window_params = [{transform_indices = @transform_0, window_bounds = array<i64: 1, 64, 128>}, {pipeline_mode = #tpu.pipeline_mode<synchronous>, transform_indices = @transform_1, window_bounds = array<i64: 64, 64>}, {pipeline_mode = #tpu.pipeline_mode<synchronous>, transform_indices = @transform_2, window_bounds = array<i64: 128, 384>}, {pipeline_mode = #tpu.pipeline_mode<synchronous>, transform_indices = @transform_3, window_bounds = array<i64: 1, 384>}, {pipeline_mode = #tpu.pipeline_mode<synchronous>, transform_indices = @transform_4, window_bounds = array<i64: 128, 128>}, {pipeline_mode = #tpu.pipeline_mode<synchronous>, transform_indices = @transform_5, window_bounds = array<i64: 1, 128>}, {pipeline_mode = #tpu.pipeline_mode<synchronous>, transform_indices = @transform_6, window_bounds = array<i64: 1, 128>}, {pipeline_mode = #tpu.pipeline_mode<synchronous>, transform_indices = @transform_7, window_bounds = array<i64: 1, 128>}, {pipeline_mode = #tpu.pipeline_mode<synchronous>, transform_indices = @transform_8, window_bounds = array<i64: 128, 256>}, {pipeline_mode = #tpu.pipeline_mode<synchronous>, transform_indices = @transform_9, window_bounds = array<i64: 1, 256>}, {pipeline_mode = #tpu.pipeline_mode<synchronous>, transform_indices = @transform_10, window_bounds = array<i64: 256, 128>}, {pipeline_mode = #tpu.pipeline_mode<synchronous>, transform_indices = @transform_11, window_bounds = array<i64: 1, 128>}, {pipeline_mode = #tpu.pipeline_mode<synchronous>, transform_indices = @transform_12, window_bounds = array<i64: 1, 128>}, {pipeline_mode = #tpu.pipeline_mode<synchronous>, transform_indices = @transform_13, window_bounds = array<i64: 1, 128>}, {transform_indices = @transform_14, window_bounds = array<i64: 1, 64, 128>}]} {
    %c0 = arith.constant 0 : index
    %c0_0 = arith.constant 0 : index
    %c0_1 = arith.constant 0 : index
    %0 = vector.load %arg1[%c0, %c0_0, %c0_1] : memref<1x64x128xf32, #tpu.memory_space<vmem>>, vector<1x64x128xf32>
    %1 = vector.shape_cast %0 : vector<1x64x128xf32> to vector<64x128xf32>
    %c0_2 = arith.constant 0 : index
    %c0_3 = arith.constant 0 : index
    %2 = vector.load %arg2[%c0_2, %c0_3] : memref<64x64xf32, #tpu.memory_space<vmem>>, vector<64x64xf32>
    %c0_4 = arith.constant 0 : index
    %c0_5 = arith.constant 0 : index
    %3 = vector.load %arg3[%c0_4, %c0_5] : memref<128x384xf32, #tpu.memory_space<vmem>>, vector<128x384xf32>
    %cst = arith.constant dense<0.000000e+00> : vector<64x384xf32>
    %4 = tpu.matmul %1, %3, %cst {dimension_numbers = #tpu.dot_dimension_numbers<[1], [0], [0], [1], [0, 0, 1, 1], [], []>} : vector<64x128xf32>, vector<128x384xf32>, vector<64x384xf32> -> vector<64x384xf32>
    %c0_6 = arith.constant 0 : index
    %c0_7 = arith.constant 0 : index
    %5 = vector.load %arg4[%c0_6, %c0_7] : memref<1x384xf32, #tpu.memory_space<vmem>>, vector<1x384xf32>
    %6 = vector.broadcast %5 : vector<1x384xf32> to vector<64x384xf32>
    %7 = arith.addf %4, %6 : vector<64x384xf32>
    %8 = vector.extract_strided_slice %7 {offsets = [0, 0], sizes = [64, 128], strides = [1, 1]} : vector<64x384xf32> to vector<64x128xf32>
    %9 = vector.extract_strided_slice %7 {offsets = [0, 128], sizes = [64, 128], strides = [1, 1]} : vector<64x384xf32> to vector<64x128xf32>
    %10 = vector.extract_strided_slice %7 {offsets = [0, 256], sizes = [64, 128], strides = [1, 1]} : vector<64x384xf32> to vector<64x128xf32>
    %11 = vector.extract_strided_slice %8 {offsets = [0, 0], sizes = [64, 32], strides = [1, 1]} : vector<64x128xf32> to vector<64x32xf32>
    %12 = vector.extract_strided_slice %9 {offsets = [0, 0], sizes = [64, 32], strides = [1, 1]} : vector<64x128xf32> to vector<64x32xf32>
    %13 = vector.extract_strided_slice %10 {offsets = [0, 0], sizes = [64, 32], strides = [1, 1]} : vector<64x128xf32> to vector<64x32xf32>
    %cst_8 = arith.constant dense<0.000000e+00> : vector<64x64xf32>
    %14 = tpu.matmul %11, %12, %cst_8 {dimension_numbers = #tpu.dot_dimension_numbers<[1], [1], [0], [0], [0, 0, 1, 0], [], []>} : vector<64x32xf32>, vector<64x32xf32>, vector<64x64xf32> -> vector<64x64xf32>
    %cst_9 = arith.constant 0.176776692 : f32
    %15 = vector.broadcast %cst_9 : f32 to vector<64x64xf32>
    %16 = arith.mulf %14, %15 : vector<64x64xf32>
    %17 = arith.addf %16, %2 : vector<64x64xf32>
    %cst_10 = arith.constant dense<0xFF800000> : vector<64xf32>
    %18 = vector.multi_reduction <maximumf>, %17, %cst_10 [1] : vector<64x64xf32> to vector<64xf32>
    %19 = vector.shape_cast %18 : vector<64xf32> to vector<64x1xf32>
    %20 = vector.broadcast %19 : vector<64x1xf32> to vector<64x64xf32>
    %21 = arith.subf %17, %20 : vector<64x64xf32>
    %22 = math.exp %21 : vector<64x64xf32>
    %cst_11 = arith.constant dense<0.000000e+00> : vector<64xf32>
    %23 = vector.multi_reduction <add>, %22, %cst_11 [1] : vector<64x64xf32> to vector<64xf32>
    %24 = vector.shape_cast %23 : vector<64xf32> to vector<64x1xf32>
    %25 = tpu.reciprocal %24 : vector<64x1xf32> -> vector<64x1xf32>
    %26 = vector.broadcast %25 : vector<64x1xf32> to vector<64x64xf32>
    %27 = arith.mulf %22, %26 : vector<64x64xf32>
    %cst_12 = arith.constant dense<0.000000e+00> : vector<64x32xf32>
    %28 = tpu.matmul %27, %13, %cst_12 {dimension_numbers = #tpu.dot_dimension_numbers<[1], [0], [0], [1], [0, 0, 1, 1], [], []>} : vector<64x64xf32>, vector<64x32xf32>, vector<64x32xf32> -> vector<64x32xf32>
    %29 = vector.extract_strided_slice %8 {offsets = [0, 32], sizes = [64, 32], strides = [1, 1]} : vector<64x128xf32> to vector<64x32xf32>
    %30 = vector.extract_strided_slice %9 {offsets = [0, 32], sizes = [64, 32], strides = [1, 1]} : vector<64x128xf32> to vector<64x32xf32>
    %31 = vector.extract_strided_slice %10 {offsets = [0, 32], sizes = [64, 32], strides = [1, 1]} : vector<64x128xf32> to vector<64x32xf32>
    %cst_13 = arith.constant dense<0.000000e+00> : vector<64x64xf32>
    %32 = tpu.matmul %29, %30, %cst_13 {dimension_numbers = #tpu.dot_dimension_numbers<[1], [1], [0], [0], [0, 0, 1, 0], [], []>} : vector<64x32xf32>, vector<64x32xf32>, vector<64x64xf32> -> vector<64x64xf32>
    %cst_14 = arith.constant 0.176776692 : f32
    %33 = vector.broadcast %cst_14 : f32 to vector<64x64xf32>
    %34 = arith.mulf %32, %33 : vector<64x64xf32>
    %35 = arith.addf %34, %2 : vector<64x64xf32>
    %cst_15 = arith.constant dense<0xFF800000> : vector<64xf32>
    %36 = vector.multi_reduction <maximumf>, %35, %cst_15 [1] : vector<64x64xf32> to vector<64xf32>
    %37 = vector.shape_cast %36 : vector<64xf32> to vector<64x1xf32>
    %38 = vector.broadcast %37 : vector<64x1xf32> to vector<64x64xf32>
    %39 = arith.subf %35, %38 : vector<64x64xf32>
    %40 = math.exp %39 : vector<64x64xf32>
    %cst_16 = arith.constant dense<0.000000e+00> : vector<64xf32>
    %41 = vector.multi_reduction <add>, %40, %cst_16 [1] : vector<64x64xf32> to vector<64xf32>
    %42 = vector.shape_cast %41 : vector<64xf32> to vector<64x1xf32>
    %43 = tpu.reciprocal %42 : vector<64x1xf32> -> vector<64x1xf32>
    %44 = vector.broadcast %43 : vector<64x1xf32> to vector<64x64xf32>
    %45 = arith.mulf %40, %44 : vector<64x64xf32>
    %cst_17 = arith.constant dense<0.000000e+00> : vector<64x32xf32>
    %46 = tpu.matmul %45, %31, %cst_17 {dimension_numbers = #tpu.dot_dimension_numbers<[1], [0], [0], [1], [0, 0, 1, 1], [], []>} : vector<64x64xf32>, vector<64x32xf32>, vector<64x32xf32> -> vector<64x32xf32>
    %47 = vector.extract_strided_slice %8 {offsets = [0, 64], sizes = [64, 32], strides = [1, 1]} : vector<64x128xf32> to vector<64x32xf32>
    %48 = vector.extract_strided_slice %9 {offsets = [0, 64], sizes = [64, 32], strides = [1, 1]} : vector<64x128xf32> to vector<64x32xf32>
    %49 = vector.extract_strided_slice %10 {offsets = [0, 64], sizes = [64, 32], strides = [1, 1]} : vector<64x128xf32> to vector<64x32xf32>
    %cst_18 = arith.constant dense<0.000000e+00> : vector<64x64xf32>
    %50 = tpu.matmul %47, %48, %cst_18 {dimension_numbers = #tpu.dot_dimension_numbers<[1], [1], [0], [0], [0, 0, 1, 0], [], []>} : vector<64x32xf32>, vector<64x32xf32>, vector<64x64xf32> -> vector<64x64xf32>
    %cst_19 = arith.constant 0.176776692 : f32
    %51 = vector.broadcast %cst_19 : f32 to vector<64x64xf32>
    %52 = arith.mulf %50, %51 : vector<64x64xf32>
    %53 = arith.addf %52, %2 : vector<64x64xf32>
    %cst_20 = arith.constant dense<0xFF800000> : vector<64xf32>
    %54 = vector.multi_reduction <maximumf>, %53, %cst_20 [1] : vector<64x64xf32> to vector<64xf32>
    %55 = vector.shape_cast %54 : vector<64xf32> to vector<64x1xf32>
    %56 = vector.broadcast %55 : vector<64x1xf32> to vector<64x64xf32>
    %57 = arith.subf %53, %56 : vector<64x64xf32>
    %58 = math.exp %57 : vector<64x64xf32>
    %cst_21 = arith.constant dense<0.000000e+00> : vector<64xf32>
    %59 = vector.multi_reduction <add>, %58, %cst_21 [1] : vector<64x64xf32> to vector<64xf32>
    %60 = vector.shape_cast %59 : vector<64xf32> to vector<64x1xf32>
    %61 = tpu.reciprocal %60 : vector<64x1xf32> -> vector<64x1xf32>
    %62 = vector.broadcast %61 : vector<64x1xf32> to vector<64x64xf32>
    %63 = arith.mulf %58, %62 : vector<64x64xf32>
    %cst_22 = arith.constant dense<0.000000e+00> : vector<64x32xf32>
    %64 = tpu.matmul %63, %49, %cst_22 {dimension_numbers = #tpu.dot_dimension_numbers<[1], [0], [0], [1], [0, 0, 1, 1], [], []>} : vector<64x64xf32>, vector<64x32xf32>, vector<64x32xf32> -> vector<64x32xf32>
    %65 = vector.extract_strided_slice %8 {offsets = [0, 96], sizes = [64, 32], strides = [1, 1]} : vector<64x128xf32> to vector<64x32xf32>
    %66 = vector.extract_strided_slice %9 {offsets = [0, 96], sizes = [64, 32], strides = [1, 1]} : vector<64x128xf32> to vector<64x32xf32>
    %67 = vector.extract_strided_slice %10 {offsets = [0, 96], sizes = [64, 32], strides = [1, 1]} : vector<64x128xf32> to vector<64x32xf32>
    %cst_23 = arith.constant dense<0.000000e+00> : vector<64x64xf32>
    %68 = tpu.matmul %65, %66, %cst_23 {dimension_numbers = #tpu.dot_dimension_numbers<[1], [1], [0], [0], [0, 0, 1, 0], [], []>} : vector<64x32xf32>, vector<64x32xf32>, vector<64x64xf32> -> vector<64x64xf32>
    %cst_24 = arith.constant 0.176776692 : f32
    %69 = vector.broadcast %cst_24 : f32 to vector<64x64xf32>
    %70 = arith.mulf %68, %69 : vector<64x64xf32>
    %71 = arith.addf %70, %2 : vector<64x64xf32>
    %cst_25 = arith.constant dense<0xFF800000> : vector<64xf32>
    %72 = vector.multi_reduction <maximumf>, %71, %cst_25 [1] : vector<64x64xf32> to vector<64xf32>
    %73 = vector.shape_cast %72 : vector<64xf32> to vector<64x1xf32>
    %74 = vector.broadcast %73 : vector<64x1xf32> to vector<64x64xf32>
    %75 = arith.subf %71, %74 : vector<64x64xf32>
    %76 = math.exp %75 : vector<64x64xf32>
    %cst_26 = arith.constant dense<0.000000e+00> : vector<64xf32>
    %77 = vector.multi_reduction <add>, %76, %cst_26 [1] : vector<64x64xf32> to vector<64xf32>
    %78 = vector.shape_cast %77 : vector<64xf32> to vector<64x1xf32>
    %79 = tpu.reciprocal %78 : vector<64x1xf32> -> vector<64x1xf32>
    %80 = vector.broadcast %79 : vector<64x1xf32> to vector<64x64xf32>
    %81 = arith.mulf %76, %80 : vector<64x64xf32>
    %cst_27 = arith.constant dense<0.000000e+00> : vector<64x32xf32>
    %82 = tpu.matmul %81, %67, %cst_27 {dimension_numbers = #tpu.dot_dimension_numbers<[1], [0], [0], [1], [0, 0, 1, 1], [], []>} : vector<64x64xf32>, vector<64x32xf32>, vector<64x32xf32> -> vector<64x32xf32>
    %83 = tpu.concatenate %28, %46, %64, %82 in 1 : vector<64x32xf32>, vector<64x32xf32>, vector<64x32xf32>, vector<64x32xf32> -> vector<64x128xf32>
    %c0_28 = arith.constant 0 : index
    %c0_29 = arith.constant 0 : index
    %84 = vector.load %arg5[%c0_28, %c0_29] : memref<128x128xf32, #tpu.memory_space<vmem>>, vector<128x128xf32>
    %cst_30 = arith.constant dense<0.000000e+00> : vector<64x128xf32>
    %85 = tpu.matmul %83, %84, %cst_30 {dimension_numbers = #tpu.dot_dimension_numbers<[1], [0], [0], [1], [0, 0, 1, 1], [], []>} : vector<64x128xf32>, vector<128x128xf32>, vector<64x128xf32> -> vector<64x128xf32>
    %c0_31 = arith.constant 0 : index
    %c0_32 = arith.constant 0 : index
    %86 = vector.load %arg6[%c0_31, %c0_32] : memref<1x128xf32, #tpu.memory_space<vmem>>, vector<1x128xf32>
    %87 = vector.broadcast %86 : vector<1x128xf32> to vector<64x128xf32>
    %88 = arith.addf %85, %87 : vector<64x128xf32>
    %89 = arith.addf %1, %88 : vector<64x128xf32>
    %c0_33 = arith.constant 0 : index
    %c0_34 = arith.constant 0 : index
    %90 = vector.load %arg7[%c0_33, %c0_34] : memref<1x128xf32, #tpu.memory_space<vmem>>, vector<1x128xf32>
    %c0_35 = arith.constant 0 : index
    %c0_36 = arith.constant 0 : index
    %91 = vector.load %arg8[%c0_35, %c0_36] : memref<1x128xf32, #tpu.memory_space<vmem>>, vector<1x128xf32>
    %cst_37 = arith.constant dense<0.000000e+00> : vector<64xf32>
    %92 = vector.multi_reduction <add>, %89, %cst_37 [1] : vector<64x128xf32> to vector<64xf32>
    %93 = vector.shape_cast %92 : vector<64xf32> to vector<64x1xf32>
    %cst_38 = arith.constant 1.280000e+02 : f32
    %94 = vector.broadcast %cst_38 : f32 to vector<64x1xf32>
    %95 = arith.divf %93, %94 : vector<64x1xf32>
    %96 = vector.broadcast %95 : vector<64x1xf32> to vector<64x128xf32>
    %97 = arith.subf %89, %96 : vector<64x128xf32>
    %98 = arith.mulf %97, %97 : vector<64x128xf32>
    %cst_39 = arith.constant dense<0.000000e+00> : vector<64xf32>
    %99 = vector.multi_reduction <add>, %98, %cst_39 [1] : vector<64x128xf32> to vector<64xf32>
    %100 = vector.shape_cast %99 : vector<64xf32> to vector<64x1xf32>
    %cst_40 = arith.constant 1.280000e+02 : f32
    %101 = vector.broadcast %cst_40 : f32 to vector<64x1xf32>
    %102 = arith.divf %100, %101 : vector<64x1xf32>
    %103 = vector.broadcast %95 : vector<64x1xf32> to vector<64x128xf32>
    %104 = arith.subf %89, %103 : vector<64x128xf32>
    %cst_41 = arith.constant 9.99999974E-6 : f32
    %105 = vector.broadcast %cst_41 : f32 to vector<64x1xf32>
    %106 = arith.addf %102, %105 : vector<64x1xf32>
    %107 = math.rsqrt %106 : vector<64x1xf32>
    %108 = vector.broadcast %107 : vector<64x1xf32> to vector<64x128xf32>
    %109 = arith.mulf %104, %108 : vector<64x128xf32>
    %110 = vector.broadcast %90 : vector<1x128xf32> to vector<64x128xf32>
    %111 = arith.mulf %109, %110 : vector<64x128xf32>
    %112 = vector.broadcast %91 : vector<1x128xf32> to vector<64x128xf32>
    %113 = arith.addf %111, %112 : vector<64x128xf32>
    %c0_42 = arith.constant 0 : index
    %c0_43 = arith.constant 0 : index
    %114 = vector.load %arg9[%c0_42, %c0_43] : memref<128x256xf32, #tpu.memory_space<vmem>>, vector<128x256xf32>
    %cst_44 = arith.constant dense<0.000000e+00> : vector<64x256xf32>
    %115 = tpu.matmul %113, %114, %cst_44 {dimension_numbers = #tpu.dot_dimension_numbers<[1], [0], [0], [1], [0, 0, 1, 1], [], []>} : vector<64x128xf32>, vector<128x256xf32>, vector<64x256xf32> -> vector<64x256xf32>
    %c0_45 = arith.constant 0 : index
    %c0_46 = arith.constant 0 : index
    %116 = vector.load %arg10[%c0_45, %c0_46] : memref<1x256xf32, #tpu.memory_space<vmem>>, vector<1x256xf32>
    %117 = vector.broadcast %116 : vector<1x256xf32> to vector<64x256xf32>
    %118 = arith.addf %115, %117 : vector<64x256xf32>
    %cst_47 = arith.constant 5.000000e-01 : f32
    %119 = vector.broadcast %cst_47 : f32 to vector<64x256xf32>
    %120 = arith.mulf %119, %118 : vector<64x256xf32>
    %cst_48 = arith.constant 4.471500e-02 : f32
    %121 = vector.broadcast %cst_48 : f32 to vector<64x256xf32>
    %122 = arith.mulf %121, %118 : vector<64x256xf32>
    %123 = arith.mulf %122, %118 : vector<64x256xf32>
    %124 = arith.mulf %123, %118 : vector<64x256xf32>
    %125 = arith.addf %118, %124 : vector<64x256xf32>
    %cst_49 = arith.constant 0.797884583 : f32
    %126 = vector.broadcast %cst_49 : f32 to vector<64x256xf32>
    %127 = arith.mulf %126, %125 : vector<64x256xf32>
    %128 = math.tanh %127 : vector<64x256xf32>
    %cst_50 = arith.constant 1.000000e+00 : f32
    %129 = vector.broadcast %cst_50 : f32 to vector<64x256xf32>
    %130 = arith.addf %129, %128 : vector<64x256xf32>
    %131 = arith.mulf %120, %130 : vector<64x256xf32>
    %c0_51 = arith.constant 0 : index
    %c0_52 = arith.constant 0 : index
    %132 = vector.load %arg11[%c0_51, %c0_52] : memref<256x128xf32, #tpu.memory_space<vmem>>, vector<256x128xf32>
    %cst_53 = arith.constant dense<0.000000e+00> : vector<64x128xf32>
    %133 = tpu.matmul %131, %132, %cst_53 {dimension_numbers = #tpu.dot_dimension_numbers<[1], [0], [0], [1], [0, 0, 1, 1], [], []>} : vector<64x256xf32>, vector<256x128xf32>, vector<64x128xf32> -> vector<64x128xf32>
    %c0_54 = arith.constant 0 : index
    %c0_55 = arith.constant 0 : index
    %134 = vector.load %arg12[%c0_54, %c0_55] : memref<1x128xf32, #tpu.memory_space<vmem>>, vector<1x128xf32>
    %135 = vector.broadcast %134 : vector<1x128xf32> to vector<64x128xf32>
    %136 = arith.addf %133, %135 : vector<64x128xf32>
    %137 = arith.addf %113, %136 : vector<64x128xf32>
    %c0_56 = arith.constant 0 : index
    %c0_57 = arith.constant 0 : index
    %138 = vector.load %arg13[%c0_56, %c0_57] : memref<1x128xf32, #tpu.memory_space<vmem>>, vector<1x128xf32>
    %c0_58 = arith.constant 0 : index
    %c0_59 = arith.constant 0 : index
    %139 = vector.load %arg14[%c0_58, %c0_59] : memref<1x128xf32, #tpu.memory_space<vmem>>, vector<1x128xf32>
    %cst_60 = arith.constant dense<0.000000e+00> : vector<64xf32>
    %140 = vector.multi_reduction <add>, %137, %cst_60 [1] : vector<64x128xf32> to vector<64xf32>
    %141 = vector.shape_cast %140 : vector<64xf32> to vector<64x1xf32>
    %cst_61 = arith.constant 1.280000e+02 : f32
    %142 = vector.broadcast %cst_61 : f32 to vector<64x1xf32>
    %143 = arith.divf %141, %142 : vector<64x1xf32>
    %144 = vector.broadcast %143 : vector<64x1xf32> to vector<64x128xf32>
    %145 = arith.subf %137, %144 : vector<64x128xf32>
    %146 = arith.mulf %145, %145 : vector<64x128xf32>
    %cst_62 = arith.constant dense<0.000000e+00> : vector<64xf32>
    %147 = vector.multi_reduction <add>, %146, %cst_62 [1] : vector<64x128xf32> to vector<64xf32>
    %148 = vector.shape_cast %147 : vector<64xf32> to vector<64x1xf32>
    %cst_63 = arith.constant 1.280000e+02 : f32
    %149 = vector.broadcast %cst_63 : f32 to vector<64x1xf32>
    %150 = arith.divf %148, %149 : vector<64x1xf32>
    %151 = vector.broadcast %143 : vector<64x1xf32> to vector<64x128xf32>
    %152 = arith.subf %137, %151 : vector<64x128xf32>
    %cst_64 = arith.constant 9.99999974E-6 : f32
    %153 = vector.broadcast %cst_64 : f32 to vector<64x1xf32>
    %154 = arith.addf %150, %153 : vector<64x1xf32>
    %155 = math.rsqrt %154 : vector<64x1xf32>
    %156 = vector.broadcast %155 : vector<64x1xf32> to vector<64x128xf32>
    %157 = arith.mulf %152, %156 : vector<64x128xf32>
    %158 = vector.broadcast %138 : vector<1x128xf32> to vector<64x128xf32>
    %159 = arith.mulf %157, %158 : vector<64x128xf32>
    %160 = vector.broadcast %139 : vector<1x128xf32> to vector<64x128xf32>
    %161 = arith.addf %159, %160 : vector<64x128xf32>
    %c0_65 = arith.constant 0 : index
    %c0_66 = arith.constant 0 : index
    %c0_67 = arith.constant 0 : index
    %162 = vector.load %arg15[%c0_65, %c0_66, %c0_67] : memref<1x64x128xf32, #tpu.memory_space<vmem>>, vector<1x64x128xf32>
    %163 = vector.shape_cast %162 : vector<1x64x128xf32> to vector<64x128xf32>
    %164 = vector.shape_cast %161 : vector<64x128xf32> to vector<1x64x128xf32>
    tpu.vector_store %arg15[%c0_65, %c0_66, %c0_67], %164 {strides = array<i32>} : memref<1x64x128xf32, #tpu.memory_space<vmem>>, vector<1x64x128xf32>,
    return
  }
  func.func @transform_0(%arg0: i32) -> (i32, i32, i32) {
    %c0_i32 = arith.constant 0 : i32
    %c0_i32_0 = arith.constant 0 : i32
    %c0_i32_1 = arith.constant 0 : i32
    return %arg0, %c0_i32, %c0_i32_0 : i32, i32, i32
  }
  func.func @transform_1(%arg0: i32) -> (i32, i32) {
    %c0_i32 = arith.constant 0 : i32
    %c0_i32_0 = arith.constant 0 : i32
    %c0_i32_1 = arith.constant 0 : i32
    return %c0_i32, %c0_i32_0 : i32, i32
  }
  func.func @transform_2(%arg0: i32) -> (i32, i32) {
    %c0_i32 = arith.constant 0 : i32
    %c0_i32_0 = arith.constant 0 : i32
    %c0_i32_1 = arith.constant 0 : i32
    return %c0_i32, %c0_i32_0 : i32, i32
  }
  func.func @transform_3(%arg0: i32) -> (i32, i32) {
    %c0_i32 = arith.constant 0 : i32
    %c0_i32_0 = arith.constant 0 : i32
    %c0_i32_1 = arith.constant 0 : i32
    return %c0_i32, %c0_i32_0 : i32, i32
  }
  func.func @transform_4(%arg0: i32) -> (i32, i32) {
    %c0_i32 = arith.constant 0 : i32
    %c0_i32_0 = arith.constant 0 : i32
    %c0_i32_1 = arith.constant 0 : i32
    return %c0_i32, %c0_i32_0 : i32, i32
  }
  func.func @transform_5(%arg0: i32) -> (i32, i32) {
    %c0_i32 = arith.constant 0 : i32
    %c0_i32_0 = arith.constant 0 : i32
    %c0_i32_1 = arith.constant 0 : i32
    return %c0_i32, %c0_i32_0 : i32, i32
  }
  func.func @transform_6(%arg0: i32) -> (i32, i32) {
    %c0_i32 = arith.constant 0 : i32
    %c0_i32_0 = arith.constant 0 : i32
    %c0_i32_1 = arith.constant 0 : i32
    return %c0_i32, %c0_i32_0 : i32, i32
  }
  func.func @transform_7(%arg0: i32) -> (i32, i32) {
    %c0_i32 = arith.constant 0 : i32
    %c0_i32_0 = arith.constant 0 : i32
    %c0_i32_1 = arith.constant 0 : i32
    return %c0_i32, %c0_i32_0 : i32, i32
  }
  func.func @transform_8(%arg0: i32) -> (i32, i32) {
    %c0_i32 = arith.constant 0 : i32
    %c0_i32_0 = arith.constant 0 : i32
    %c0_i32_1 = arith.constant 0 : i32
    return %c0_i32, %c0_i32_0 : i32, i32
  }
  func.func @transform_9(%arg0: i32) -> (i32, i32) {
    %c0_i32 = arith.constant 0 : i32
    %c0_i32_0 = arith.constant 0 : i32
    %c0_i32_1 = arith.constant 0 : i32
    return %c0_i32, %c0_i32_0 : i32, i32
  }
  func.func @transform_10(%arg0: i32) -> (i32, i32) {
    %c0_i32 = arith.constant 0 : i32
    %c0_i32_0 = arith.constant 0 : i32
    %c0_i32_1 = arith.constant 0 : i32
    return %c0_i32, %c0_i32_0 : i32, i32
  }
  func.func @transform_11(%arg0: i32) -> (i32, i32) {
    %c0_i32 = arith.constant 0 : i32
    %c0_i32_0 = arith.constant 0 : i32
    %c0_i32_1 = arith.constant 0 : i32
    return %c0_i32, %c0_i32_0 : i32, i32
  }
  func.func @transform_12(%arg0: i32) -> (i32, i32) {
    %c0_i32 = arith.constant 0 : i32
    %c0_i32_0 = arith.constant 0 : i32
    %c0_i32_1 = arith.constant 0 : i32
    return %c0_i32, %c0_i32_0 : i32, i32
  }
  func.func @transform_13(%arg0: i32) -> (i32, i32) {
    %c0_i32 = arith.constant 0 : i32
    %c0_i32_0 = arith.constant 0 : i32
    %c0_i32_1 = arith.constant 0 : i32
    return %c0_i32, %c0_i32_0 : i32, i32
  }
  func.func @transform_14(%arg0: i32) -> (i32, i32, i32) {
    %c0_i32 = arith.constant 0 : i32
    %c0_i32_0 = arith.constant 0 : i32
    %c0_i32_1 = arith.constant 0 : i32
    return %arg0, %c0_i32, %c0_i32_0 : i32, i32, i32
  }
}

</mosaic_0001>

<llo_original>
// kernel: tpu_custom_call.1
$region0: #{tpu_custom_call.1}
  #allocation0 [shape = 'u32[]', space=smem, size = 0x4, offset = 0x4, fixed_abs, tag = 'smem constant byte address 0x4 - core index']
  #allocation1 [shape = 'u32[144,128]{1,0:T(1,128)}', space=vmem, size = 0x12000, scoped, tag = 'internal scratch']
  %s0 = inlined_call_operand.hbm [shape: f32[2,64,128], index: 0, kind: input, shape index: {}]
  %s1 = inlined_call_operand.hbm [shape: f32[64,64], index: 1, kind: input, shape index: {}]
  %s2 = inlined_call_operand.hbm [shape: f32[128,384], index: 2, kind: input, shape index: {}]
  %s3 = inlined_call_operand.vmem [shape: f32[1,384], index: 3, kind: input, shape index: {}]
  %s4 = inlined_call_operand.hbm [shape: f32[128,128], index: 4, kind: input, shape index: {}]
  %s5 = inlined_call_operand.vmem [shape: f32[1,128], index: 5, kind: input, shape index: {}]
  %s6 = inlined_call_operand.vmem [shape: f32[1,128], index: 6, kind: input, shape index: {}]
  %s7 = inlined_call_operand.vmem [shape: f32[1,128], index: 7, kind: input, shape index: {}]
  %s8 = inlined_call_operand.hbm [shape: f32[128,256], index: 8, kind: input, shape index: {}]
  %s9 = inlined_call_operand.vmem [shape: f32[1,256], index: 9, kind: input, shape index: {}]
  %s10 = inlined_call_operand.hbm [shape: f32[256,128], index: 10, kind: input, shape index: {}]
  %s11 = inlined_call_operand.vmem [shape: f32[1,128], index: 11, kind: input, shape index: {}]
  %s12 = inlined_call_operand.vmem [shape: f32[1,128], index: 12, kind: input, shape index: {}]
  %s13 = inlined_call_operand.vmem [shape: f32[1,128], index: 13, kind: input, shape index: {}]
  %s14 = inlined_call_operand.hbm [shape: f32[2,64,128], index: 14, kind: output, shape index: {}]
  %s15 = sld [smem:[#allocation0]]
  $region113: #{tpu_custom_call.1} parent=0
    _
  %s17 = ssub.s32 1, %s15
  %s18 = scalar_select 0, %s17, %s15
  $region1: #{tpu_custom_call.1} parent=0
    #allocation2 [shape = 'u8[65536]{0}', space=vmem, size = 0x10000, scoped, tag = 'input window, operand 0']
    #allocation3 [shape = 's32[2]{0}', space=sflag, size = 0x8, scoped, tag = 'scoped memory for tpu_custom_call.1']
    #allocation4 [shape = 's32[2]{0}', space=sflag, size = 0x8, scoped, tag = 'scoped memory for tpu_custom_call.1']
    #allocation5 [shape = 'u8[32768]{0}', space=vmem, size = 0x8000, scoped, tag = 'input window, operand 1, single buffered']
    #allocation6 [shape = 's32[1]{0}', space=sflag, size = 0x4, scoped, tag = 'scoped memory for tpu_custom_call.1']
    #allocation7 [shape = 'u8[196608]{0}', space=vmem, size = 0x30000, scoped, tag = 'input window, operand 2, single buffered']
    #allocation8 [shape = 'u8[65536]{0}', space=vmem, size = 0x10000, scoped, tag = 'input window, operand 4, single buffered']
    #allocation9 [shape = 's32[1]{0}', space=sflag, size = 0x4, scoped, tag = 'scoped memory for tpu_custom_call.1']
    #allocation10 [shape = 'u8[131072]{0}', space=vmem, size = 0x20000, scoped, tag = 'input window, operand 8, single buffered']
    #allocation11 [shape = 'u8[131072]{0}', space=vmem, size = 0x20000, scoped, tag = 'input window, operand 10, single buffered']
    #allocation12 [shape = 's32[1]{0}', space=sflag, size = 0x4, scoped, tag = 'scoped memory for tpu_custom_call.1']
    #allocation13 [shape = 'u8[65536]{0}', space=vmem, size = 0x10000, scoped, tag = 'output window, operand 0']
    %19 = vsyncpa [#allocation3], 0
    %s20 = scalar_lea.sflag [#allocation3], 1
    %21 = vsyncpa %s20, 0
    %22 = vsyncpa [#allocation6], 0
    %23 = vsyncpa [#allocation9], 0
    %24 = vsyncpa [#allocation12], 0
    %25 = vsyncpa [#allocation4], 0
    %s26 = scalar_lea.sflag [#allocation4], 1
    %27 = vsyncpa %s26, 0
    loop: start=0, step=1, limit=4
    $region2: #{tpu_custom_call.1} parent=1 // loop_pre_header
      _
    $region3: #{tpu_custom_call.1} parent=1 // loop_header
      %s29 = sphi 0, %s33
      %p30 = scmp.ge.s32.totalorder %s29, 4
      %s39 = sphi 0, %s41
      %s42 = sphi 0, %s39
      %s43 = sphi 0, %s42
      %s59 = sphi 0, %s43
      %s63 = sphi 0, %s63
      %s65 = sphi 0, %s63
      %s66 = sphi 0, %s65
      %s80 = sphi 0, %s66
      %s84 = sphi 0, %s84
      %s86 = sphi 0, %s84
      %s87 = sphi 0, %s86
      %s101 = sphi 0, %s87
      %s105 = sphi 0, %s105
      %s107 = sphi 0, %s105
      %s108 = sphi 0, %s107
      %s122 = sphi 0, %s108
      %s126 = sphi 0, %s126
      %s128 = sphi 0, %s126
      %s129 = sphi 0, %s128
      %s143 = sphi 0, %s129
      %s147 = sphi 0, %s147
      %s149 = sphi 0, %s147
      %s150 = sphi 0, %s149
      %s164 = sphi 0, %s150
      %s168 = sphi 0, %s168
      %s170 = sphi 0, %s168
      %s171 = sphi 0, %s170
      %s185 = sphi 0, %s171
      %s189 = sphi 0, %s189
      %s191 = sphi 0, %s189
      %s192 = sphi 0, %s191
      %s206 = sphi 0, %s192
      %s210 = sphi 0, %s210
      %s212 = sphi 0, %s210
      %s213 = sphi 0, %s212
      %s227 = sphi 0, %s213
      %s231 = sphi 0, %s231
      %s233 = sphi 0, %s231
      %s234 = sphi 0, %s233
      %s248 = sphi 0, %s234
      %s252 = sphi 0, %s252
      %s254 = sphi 0, %s252
      %s255 = sphi 0, %s254
      %s269 = sphi 0, %s255
      %s273 = sphi 0, %s273
      %s275 = sphi 0, %s273
      %s276 = sphi 0, %s275
      %s290 = sphi 0, %s276
      %s294 = sphi 0, %s294
      %s296 = sphi 0, %s294
      %s297 = sphi 0, %s296
      %s311 = sphi 0, %s297
      %s315 = sphi 0, %s315
      %s317 = sphi 0, %s315
      %s318 = sphi 0, %s317
      %s332 = sphi 0, %s318
      %s338 = sphi 0, %s340
      %s341 = sphi 0, %s338
      %s342 = sphi 0, %s341
      %s358 = sphi 0, %s342
    $region4: #{tpu_custom_call.1} parent=1 // loop_header_branch
      %32 = sbr.rel (%p30) target = $region8
    $region5: #{tpu_custom_call.1} parent=1 // loop_body
      %s34 = ssub.s32 %s29, 1
      %s35 = ssub.s32 %s29, 2
      %s36 = sadd.s32 %s29, 1
      %s37 = ssub.s32 %s29, %s36
      %p38 = scmp.eq.s32.totalorder %s37, 0
      %s40 = sadd.s32 %s39, 1
      %s41 = scalar_select %p38, %s39, %s40
      %p44 = pneg %p38
      %p45 = scmp.eq.s32.totalorder %s29, 1
      %p46 = por %p44, %p45
      %p47 = scmp.ne.s32.totalorder %s39, %s42
      %p48 = scmp.eq.s32.totalorder %s29, 0
      %p49 = por %p47, %p48
      %p50 = scmp.ne.s32.totalorder %s39, %s42
      %p51 = scmp.eq.s32.totalorder %s34, 1
      %p52 = por %p50, %p51
      %p53 = scmp.ne.s32.totalorder %s42, %s43
      %p54 = scmp.eq.s32.totalorder %s34, 0
      %p55 = por %p53, %p54
      %p56 = scmp.ne.s32.totalorder %s42, %s43
      %p57 = scmp.eq.s32.totalorder %s35, 1
      %p58 = por %p56, %p57
      %p60 = scmp.ne.s32.totalorder %s43, %s59
      %p61 = scmp.eq.s32.totalorder %s35, 0
      %p62 = por %p60, %p61
      %s64 = sadd.s32 %s63, 1
      %p67 = scmp.eq.s32.totalorder %s29, 1
      %p68 = scmp.ne.s32.totalorder %s63, %s65
      %p69 = scmp.eq.s32.totalorder %s29, 0
      %p70 = por %p68, %p69
      %p71 = scmp.ne.s32.totalorder %s63, %s65
      %p72 = scmp.eq.s32.totalorder %s34, 1
      %p73 = por %p71, %p72
      %p74 = scmp.ne.s32.totalorder %s65, %s66
      %p75 = scmp.eq.s32.totalorder %s34, 0
      %p76 = por %p74, %p75
      %p77 = scmp.ne.s32.totalorder %s65, %s66
      %p78 = scmp.eq.s32.totalorder %s35, 1
      %p79 = por %p77, %p78
      %p81 = scmp.ne.s32.totalorder %s66, %s80
      %p82 = scmp.eq.s32.totalorder %s35, 0
      %p83 = por %p81, %p82
      %s85 = sadd.s32 %s84, 1
      %p88 = scmp.eq.s32.totalorder %s29, 1
      %p89 = scmp.ne.s32.totalorder %s84, %s86
      %p90 = scmp.eq.s32.totalorder %s29, 0
      %p91 = por %p89, %p90
      %p92 = scmp.ne.s32.totalorder %s84, %s86
      %p93 = scmp.eq.s32.totalorder %s34, 1
      %p94 = por %p92, %p93
      %p95 = scmp.ne.s32.totalorder %s86, %s87
      %p96 = scmp.eq.s32.totalorder %s34, 0
      %p97 = por %p95, %p96
      %p98 = scmp.ne.s32.totalorder %s86, %s87
      %p99 = scmp.eq.s32.totalorder %s35, 1
      %p100 = por %p98, %p99
      %p102 = scmp.ne.s32.totalorder %s87, %s101
      %p103 = scmp.eq.s32.totalorder %s35, 0
      %p104 = por %p102, %p103
      %s106 = sadd.s32 %s105, 1
      %p109 = scmp.eq.s32.totalorder %s29, 1
      %p110 = scmp.ne.s32.totalorder %s105, %s107
      %p111 = scmp.eq.s32.totalorder %s29, 0
      %p112 = por %p110, %p111
      %p113 = scmp.ne.s32.totalorder %s105, %s107
      %p114 = scmp.eq.s32.totalorder %s34, 1
      %p115 = por %p113, %p114
      %p116 = scmp.ne.s32.totalorder %s107, %s108
      %p117 = scmp.eq.s32.totalorder %s34, 0
      %p118 = por %p116, %p117
      %p119 = scmp.ne.s32.totalorder %s107, %s108
      %p120 = scmp.eq.s32.totalorder %s35, 1
      %p121 = por %p119, %p120
      %p123 = scmp.ne.s32.totalorder %s108, %s122
      %p124 = scmp.eq.s32.totalorder %s35, 0
      %p125 = por %p123, %p124
      %s127 = sadd.s32 %s126, 1
      %p130 = scmp.eq.s32.totalorder %s29, 1
      %p131 = scmp.ne.s32.totalorder %s126, %s128
      %p132 = scmp.eq.s32.totalorder %s29, 0
      %p133 = por %p131, %p132
      %p134 = scmp.ne.s32.totalorder %s126, %s128
      %p135 = scmp.eq.s32.totalorder %s34, 1
      %p136 = por %p134, %p135
      %p137 = scmp.ne.s32.totalorder %s128, %s129
      %p138 = scmp.eq.s32.totalorder %s34, 0
      %p139 = por %p137, %p138
      %p140 = scmp.ne.s32.totalorder %s128, %s129
      %p141 = scmp.eq.s32.totalorder %s35, 1
      %p142 = por %p140, %p141
      %p144 = scmp.ne.s32.totalorder %s129, %s143
      %p145 = scmp.eq.s32.totalorder %s35, 0
      %p146 = por %p144, %p145
      %s148 = sadd.s32 %s147, 1
      %p151 = scmp.eq.s32.totalorder %s29, 1
      %p152 = scmp.ne.s32.totalorder %s147, %s149
      %p153 = scmp.eq.s32.totalorder %s29, 0
      %p154 = por %p152, %p153
      %p155 = scmp.ne.s32.totalorder %s147, %s149
      %p156 = scmp.eq.s32.totalorder %s34, 1
      %p157 = por %p155, %p156
      %p158 = scmp.ne.s32.totalorder %s149, %s150
      %p159 = scmp.eq.s32.totalorder %s34, 0
      %p160 = por %p158, %p159
      %p161 = scmp.ne.s32.totalorder %s149, %s150
      %p162 = scmp.eq.s32.totalorder %s35, 1
      %p163 = por %p161, %p162
      %p165 = scmp.ne.s32.totalorder %s150, %s164
      %p166 = scmp.eq.s32.totalorder %s35, 0
      %p167 = por %p165, %p166
      %s169 = sadd.s32 %s168, 1
      %p172 = scmp.eq.s32.totalorder %s29, 1
      %p173 = scmp.ne.s32.totalorder %s168, %s170
      %p174 = scmp.eq.s32.totalorder %s29, 0
      %p175 = por %p173, %p174
      %p176 = scmp.ne.s32.totalorder %s168, %s170
      %p177 = scmp.eq.s32.totalorder %s34, 1
      %p178 = por %p176, %p177
      %p179 = scmp.ne.s32.totalorder %s170, %s171
      %p180 = scmp.eq.s32.totalorder %s34, 0
      %p181 = por %p179, %p180
      %p182 = scmp.ne.s32.totalorder %s170, %s171
      %p183 = scmp.eq.s32.totalorder %s35, 1
      %p184 = por %p182, %p183
      %p186 = scmp.ne.s32.totalorder %s171, %s185
      %p187 = scmp.eq.s32.totalorder %s35, 0
      %p188 = por %p186, %p187
      %s190 = sadd.s32 %s189, 1
      %p193 = scmp.eq.s32.totalorder %s29, 1
      %p194 = scmp.ne.s32.totalorder %s189, %s191
      %p195 = scmp.eq.s32.totalorder %s29, 0
      %p196 = por %p194, %p195
      %p197 = scmp.ne.s32.totalorder %s189, %s191
      %p198 = scmp.eq.s32.totalorder %s34, 1
      %p199 = por %p197, %p198
      %p200 = scmp.ne.s32.totalorder %s191, %s192
      %p201 = scmp.eq.s32.totalorder %s34, 0
      %p202 = por %p200, %p201
      %p203 = scmp.ne.s32.totalorder %s191, %s192
      %p204 = scmp.eq.s32.totalorder %s35, 1
      %p205 = por %p203, %p204
      %p207 = scmp.ne.s32.totalorder %s192, %s206
      %p208 = scmp.eq.s32.totalorder %s35, 0
      %p209 = por %p207, %p208
      %s211 = sadd.s32 %s210, 1
      %p214 = scmp.eq.s32.totalorder %s29, 1
      %p215 = scmp.ne.s32.totalorder %s210, %s212
      %p216 = scmp.eq.s32.totalorder %s29, 0
      %p217 = por %p215, %p216
      %p218 = scmp.ne.s32.totalorder %s210, %s212
      %p219 = scmp.eq.s32.totalorder %s34, 1
      %p220 = por %p218, %p219
      %p221 = scmp.ne.s32.totalorder %s212, %s213
      %p222 = scmp.eq.s32.totalorder %s34, 0
      %p223 = por %p221, %p222
      %p224 = scmp.ne.s32.totalorder %s212, %s213
      %p225 = scmp.eq.s32.totalorder %s35, 1
      %p226 = por %p224, %p225
      %p228 = scmp.ne.s32.totalorder %s213, %s227
      %p229 = scmp.eq.s32.totalorder %s35, 0
      %p230 = por %p228, %p229
      %s232 = sadd.s32 %s231, 1
      %p235 = scmp.eq.s32.totalorder %s29, 1
      %p236 = scmp.ne.s32.totalorder %s231, %s233
      %p237 = scmp.eq.s32.totalorder %s29, 0
      %p238 = por %p236, %p237
      %p239 = scmp.ne.s32.totalorder %s231, %s233
      %p240 = scmp.eq.s32.totalorder %s34, 1
      %p241 = por %p239, %p240
      %p242 = scmp.ne.s32.totalorder %s233, %s234
      %p243 = scmp.eq.s32.totalorder %s34, 0
      %p244 = por %p242, %p243
      %p245 = scmp.ne.s32.totalorder %s233, %s234
      %p246 = scmp.eq.s32.totalorder %s35, 1
      %p247 = por %p245, %p246
      %p249 = scmp.ne.s32.totalorder %s234, %s248
      %p250 = scmp.eq.s32.totalorder %s35, 0
      %p251 = por %p249, %p250
      %s253 = sadd.s32 %s252, 1
      %p256 = scmp.eq.s32.totalorder %s29, 1
      %p257 = scmp.ne.s32.totalorder %s252, %s254
      %p258 = scmp.eq.s32.totalorder %s29, 0
      %p259 = por %p257, %p258
      %p260 = scmp.ne.s32.totalorder %s252, %s254
      %p261 = scmp.eq.s32.totalorder %s34, 1
      %p262 = por %p260, %p261
      %p263 = scmp.ne.s32.totalorder %s254, %s255
      %p264 = scmp.eq.s32.totalorder %s34, 0
      %p265 = por %p263, %p264
      %p266 = scmp.ne.s32.totalorder %s254, %s255
      %p267 = scmp.eq.s32.totalorder %s35, 1
      %p268 = por %p266, %p267
      %p270 = scmp.ne.s32.totalorder %s255, %s269
      %p271 = scmp.eq.s32.totalorder %s35, 0
      %p272 = por %p270, %p271
      %s274 = sadd.s32 %s273, 1
      %p277 = scmp.eq.s32.totalorder %s29, 1
      %p278 = scmp.ne.s32.totalorder %s273, %s275
      %p279 = scmp.eq.s32.totalorder %s29, 0
      %p280 = por %p278, %p279
      %p281 = scmp.ne.s32.totalorder %s273, %s275
      %p282 = scmp.eq.s32.totalorder %s34, 1
      %p283 = por %p281, %p282
      %p284 = scmp.ne.s32.totalorder %s275, %s276
      %p285 = scmp.eq.s32.totalorder %s34, 0
      %p286 = por %p284, %p285
      %p287 = scmp.ne.s32.totalorder %s275, %s276
      %p288 = scmp.eq.s32.totalorder %s35, 1
      %p289 = por %p287, %p288
      %p291 = scmp.ne.s32.totalorder %s276, %s290
      %p292 = scmp.eq.s32.totalorder %s35, 0
      %p293 = por %p291, %p292
      %s295 = sadd.s32 %s294, 1
      %p298 = scmp.eq.s32.totalorder %s29, 1
      %p299 = scmp.ne.s32.totalorder %s294, %s296
      %p300 = scmp.eq.s32.totalorder %s29, 0
      %p301 = por %p299, %p300
      %p302 = scmp.ne.s32.totalorder %s294, %s296
      %p303 = scmp.eq.s32.totalorder %s34, 1
      %p304 = por %p302, %p303
      %p305 = scmp.ne.s32.totalorder %s296, %s297
      %p306 = scmp.eq.s32.totalorder %s34, 0
      %p307 = por %p305, %p306
      %p308 = scmp.ne.s32.totalorder %s296, %s297
      %p309 = scmp.eq.s32.totalorder %s35, 1
      %p310 = por %p308, %p309
      %p312 = scmp.ne.s32.totalorder %s297, %s311
      %p313 = scmp.eq.s32.totalorder %s35, 0
      %p314 = por %p312, %p313
      %s316 = sadd.s32 %s315, 1
      %p319 = scmp.eq.s32.totalorder %s29, 1
      %p320 = scmp.ne.s32.totalorder %s315, %s317
      %p321 = scmp.eq.s32.totalorder %s29, 0
      %p322 = por %p320, %p321
      %p323 = scmp.ne.s32.totalorder %s315, %s317
      %p324 = scmp.eq.s32.totalorder %s34, 1
      %p325 = por %p323, %p324
      %p326 = scmp.ne.s32.totalorder %s317, %s318
      %p327 = scmp.eq.s32.totalorder %s34, 0
      %p328 = por %p326, %p327
      %p329 = scmp.ne.s32.totalorder %s317, %s318
      %p330 = scmp.eq.s32.totalorder %s35, 1
      %p331 = por %p329, %p330
      %p333 = scmp.ne.s32.totalorder %s318, %s332
      %p334 = scmp.eq.s32.totalorder %s35, 0
      %p335 = por %p333, %p334
      %s336 = ssub.s32 %s29, %s36
      %p337 = scmp.eq.s32.totalorder %s336, 0
      %s339 = sadd.s32 %s338, 1
      %s340 = scalar_select %p337, %s338, %s339
      %p343 = pneg %p337
      %p344 = scmp.eq.s32.totalorder %s29, 1
      %p345 = por %p343, %p344
      %p346 = scmp.ne.s32.totalorder %s338, %s341
      %p347 = scmp.eq.s32.totalorder %s29, 0
      %p348 = por %p346, %p347
      %p349 = scmp.ne.s32.totalorder %s338, %s341
      %p350 = scmp.eq.s32.totalorder %s34, 1
      %p351 = por %p349, %p350
      %p352 = scmp.ne.s32.totalorder %s341, %s342
      %p353 = scmp.eq.s32.totalorder %s34, 0
      %p354 = por %p352, %p353
      %p355 = scmp.ne.s32.totalorder %s341, %s342
      %p356 = scmp.eq.s32.totalorder %s35, 1
      %p357 = por %p355, %p356
      %p359 = scmp.ne.s32.totalorder %s342, %s358
      %p360 = scmp.eq.s32.totalorder %s35, 0
      %p361 = por %p359, %p360
      %p362 = scmp.le.s32.totalorder 1, %s29
      %p363 = scmp.lt.s32.totalorder %s29, 3
      %p364 = pnand %p362, %p363
      %p365 = pneg %p364
      // Predicated region
      $region9: #{tpu_custom_call.1} parent=5 // pred_check
        _
      $region10: #{tpu_custom_call.1} parent=5 // pred_check_branch
        %367 = sbr.rel (%p364) target = $region12
      $region11: #{tpu_custom_call.1} parent=5 // pred_region
        %s368 = ssub.s32 %s29, 1
        // Predicated region
        $region13: #{tpu_custom_call.1} parent=11 // pred_check
          %p369 = pneg %p76
        $region14: #{tpu_custom_call.1} parent=11 // pred_check_branch
          %371 = sbr.rel (%p369) target = $region16
        $region15: #{tpu_custom_call.1} parent=11 // pred_region
          %s373 = ssub.s32 1024, 1024
          %374 = vsyncadd [#allocation6], %s373
          %s375 = sshll.u32 [#allocation5], 4
          %s376 = int_to_ptr.vmem [resolvable:$true] %s375
          %381 = dma.hbm_to_vmem [thread:$0]  %s1, 1024, %s376, [#allocation6], 128, 128, 8
        $region16: #{tpu_custom_call.1} parent=11 // pred_fallthru
          _
        // Predicated region
        $region17: #{tpu_custom_call.1} parent=11 // pred_check
          %p382 = pneg %p97
        $region18: #{tpu_custom_call.1} parent=11 // pred_check_branch
          %384 = sbr.rel (%p382) target = $region20
        $region19: #{tpu_custom_call.1} parent=11 // pred_region
          %s386 = ssub.s32 6144, 6144
          %387 = vsyncadd [#allocation6], %s386
          %s388 = sshll.u32 [#allocation7], 4
          %s389 = int_to_ptr.vmem [resolvable:$true] %s388
          %394 = dma.hbm_to_vmem [thread:$0]  %s2, 6144, %s389, [#allocation6], 384, 384, 24
        $region20: #{tpu_custom_call.1} parent=11 // pred_fallthru
          _
        // Predicated region
        $region21: #{tpu_custom_call.1} parent=11 // pred_check
          %p395 = pneg %p118
        $region22: #{tpu_custom_call.1} parent=11 // pred_check_branch
          %397 = sbr.rel (%p395) target = $region24
        $region23: #{tpu_custom_call.1} parent=11 // pred_region
          _
        $region24: #{tpu_custom_call.1} parent=11 // pred_fallthru
          _
        // Predicated region
        $region25: #{tpu_custom_call.1} parent=11 // pred_check
          %p398 = pneg %p139
        $region26: #{tpu_custom_call.1} parent=11 // pred_check_branch
          %400 = sbr.rel (%p398) target = $region28
        $region27: #{tpu_custom_call.1} parent=11 // pred_region
          %s402 = ssub.s32 2048, 2048
          %403 = vsyncadd [#allocation9], %s402
          %s404 = sshll.u32 [#allocation8], 4
          %s405 = int_to_ptr.vmem [resolvable:$true] %s404
          %410 = dma.hbm_to_vmem [thread:$0]  %s4, 2048, %s405, [#allocation9], 128, 128, 8
        $region28: #{tpu_custom_call.1} parent=11 // pred_fallthru
          _
        // Predicated region
        $region29: #{tpu_custom_call.1} parent=11 // pred_check
          %p411 = pneg %p160
        $region30: #{tpu_custom_call.1} parent=11 // pred_check_branch
          %413 = sbr.rel (%p411) target = $region32
        $region31: #{tpu_custom_call.1} parent=11 // pred_region
          _
        $region32: #{tpu_custom_call.1} parent=11 // pred_fallthru
          _
        // Predicated region
        $region33: #{tpu_custom_call.1} parent=11 // pred_check
          %p414 = pneg %p181
        $region34: #{tpu_custom_call.1} parent=11 // pred_check_branch
          %416 = sbr.rel (%p414) target = $region36
        $region35: #{tpu_custom_call.1} parent=11 // pred_region
          _
        $region36: #{tpu_custom_call.1} parent=11 // pred_fallthru
          _
        // Predicated region
        $region37: #{tpu_custom_call.1} parent=11 // pred_check
          %p417 = pneg %p202
        $region38: #{tpu_custom_call.1} parent=11 // pred_check_branch
          %419 = sbr.rel (%p417) target = $region40
        $region39: #{tpu_custom_call.1} parent=11 // pred_region
          _
        $region40: #{tpu_custom_call.1} parent=11 // pred_fallthru
          _
        // Predicated region
        $region41: #{tpu_custom_call.1} parent=11 // pred_check
          %p420 = pneg %p223
        $region42: #{tpu_custom_call.1} parent=11 // pred_check_branch
          %422 = sbr.rel (%p420) target = $region44
        $region43: #{tpu_custom_call.1} parent=11 // pred_region
          %s424 = ssub.s32 4096, 4096
          %425 = vsyncadd [#allocation9], %s424
          %s426 = sshll.u32 [#allocation10], 4
          %s427 = int_to_ptr.vmem [resolvable:$true] %s426
          %432 = dma.hbm_to_vmem [thread:$0]  %s8, 4096, %s427, [#allocation9], 256, 256, 16
        $region44: #{tpu_custom_call.1} parent=11 // pred_fallthru
          _
        // Predicated region
        $region45: #{tpu_custom_call.1} parent=11 // pred_check
          %p433 = pneg %p244
        $region46: #{tpu_custom_call.1} parent=11 // pred_check_branch
          %435 = sbr.rel (%p433) target = $region48
        $region47: #{tpu_custom_call.1} parent=11 // pred_region
          _
        $region48: #{tpu_custom_call.1} parent=11 // pred_fallthru
          _
        // Predicated region
        $region49: #{tpu_custom_call.1} parent=11 // pred_check
          %p436 = pneg %p265
        $region50: #{tpu_custom_call.1} parent=11 // pred_check_branch
          %438 = sbr.rel (%p436) target = $region52
        $region51: #{tpu_custom_call.1} parent=11 // pred_region
          %s440 = ssub.s32 4096, 4096
          %441 = vsyncadd [#allocation12], %s440
          %s442 = sshll.u32 [#allocation11], 4
          %s443 = int_to_ptr.vmem [resolvable:$true] %s442
          %448 = dma.hbm_to_vmem [thread:$0]  %s10, 4096, %s443, [#allocation12], 128, 128, 8
        $region52: #{tpu_custom_call.1} parent=11 // pred_fallthru
          _
        // Predicated region
        $region53: #{tpu_custom_call.1} parent=11 // pred_check
          %p449 = pneg %p286
        $region54: #{tpu_custom_call.1} parent=11 // pred_check_branch
          %451 = sbr.rel (%p449) target = $region56
        $region55: #{tpu_custom_call.1} parent=11 // pred_region
          _
        $region56: #{tpu_custom_call.1} parent=11 // pred_fallthru
          _
        // Predicated region
        $region57: #{tpu_custom_call.1} parent=11 // pred_check
          %p452 = pneg %p307
        $region58: #{tpu_custom_call.1} parent=11 // pred_check_branch
          %454 = sbr.rel (%p452) target = $region60
        $region59: #{tpu_custom_call.1} parent=11 // pred_region
          _
        $region60: #{tpu_custom_call.1} parent=11 // pred_fallthru
          _
        // Predicated region
        $region61: #{tpu_custom_call.1} parent=11 // pred_check
          %p455 = pneg %p328
        $region62: #{tpu_custom_call.1} parent=11 // pred_check_branch
          %457 = sbr.rel (%p455) target = $region64
        $region63: #{tpu_custom_call.1} parent=11 // pred_region
          _
        $region64: #{tpu_custom_call.1} parent=11 // pred_fallthru
          _
      $region12: #{tpu_custom_call.1} parent=5 // pred_fallthru
        _
      %p458 = scmp.lt.s32.totalorder %s29, 2
      // Predicated region
      $region65: #{tpu_custom_call.1} parent=5 // pred_check
        %p459 = pneg %p458
      $region66: #{tpu_custom_call.1} parent=5 // pred_check_branch
        %461 = sbr.rel (%p459) target = $region68
      $region67: #{tpu_custom_call.1} parent=5 // pred_region
        // Predicated region
        $region69: #{tpu_custom_call.1} parent=67 // pred_check
          %p462 = pneg %p49
        $region70: #{tpu_custom_call.1} parent=67 // pred_check_branch
          %464 = sbr.rel (%p462) target = $region72
        $region71: #{tpu_custom_call.1} parent=67 // pred_region
          %s465 = sand.u32 %s39, 1
          %s466 = scalar_lea.sflag [#allocation3], %s465
          %s467 = sand.u32 %s39, 1
          %s468 = smul.addr %s467, 64
          %s469 = scalar_lea.vmem [#allocation2], %s468
          %s471 = ssub.s32 1024, 1024
          %472 = vsyncadd %s466, %s471
          %s473 = smul.addr %s29, 8
          %s474 = smul.addr %s473, 128
          %s475 = scalar_lea.hbm %s0, %s474
          %s476 = sshll.u32 %s469, 4
          %s477 = int_to_ptr.vmem [resolvable:$true] %s476
          %482 = dma.hbm_to_vmem [thread:$0]  %s475, 1024, %s477, %s466, 128, 128, 8
        $region72: #{tpu_custom_call.1} parent=67 // pred_fallthru
          _
      $region68: #{tpu_custom_call.1} parent=5 // pred_fallthru
        _
      %p483 = scmp.le.s32.totalorder 1, %s29
      %p484 = scmp.lt.s32.totalorder %s29, 3
      %p485 = pnand %p483, %p484
      %p486 = pneg %p485
      // Predicated region
      $region73: #{tpu_custom_call.1} parent=5 // pred_check
        _
      $region74: #{tpu_custom_call.1} parent=5 // pred_check_branch
        %488 = sbr.rel (%p485) target = $region76
      $region75: #{tpu_custom_call.1} parent=5 // pred_region
        %s489 = ssub.s32 %s29, 1
        %s490 = sand.u32 %s42, 1
        %s491 = scalar_lea.sflag [#allocation3], %s490
        %s492 = sand.u32 %s42, 1
        %s493 = smul.addr %s492, 64
        %s494 = scalar_lea.vmem [#allocation2], %s493
        // Predicated region
        $region77: #{tpu_custom_call.1} parent=75 // pred_check
          %p495 = pneg %p55
        $region78: #{tpu_custom_call.1} parent=75 // pred_check_branch
          %497 = sbr.rel (%p495) target = $region80
        $region79: #{tpu_custom_call.1} parent=75 // pred_region
          %498 = dma.done %s491, 1024
        $region80: #{tpu_custom_call.1} parent=75 // pred_fallthru
          _
        // Predicated region
        $region81: #{tpu_custom_call.1} parent=75 // pred_check
          %p499 = pneg %p76
        $region82: #{tpu_custom_call.1} parent=75 // pred_check_branch
          %501 = sbr.rel (%p499) target = $region84
        $region83: #{tpu_custom_call.1} parent=75 // pred_region
          %502 = dma.done [#allocation6], 1024
        $region84: #{tpu_custom_call.1} parent=75 // pred_fallthru
          _
        // Predicated region
        $region85: #{tpu_custom_call.1} parent=75 // pred_check
          %p503 = pneg %p97
        $region86: #{tpu_custom_call.1} parent=75 // pred_check_branch
          %505 = sbr.rel (%p503) target = $region88
        $region87: #{tpu_custom_call.1} parent=75 // pred_region
          %506 = dma.done [#allocation6], 6144
        $region88: #{tpu_custom_call.1} parent=75 // pred_fallthru
          _
        // Predicated region
        $region89: #{tpu_custom_call.1} parent=75 // pred_check
          %p507 = pneg %p139
        $region90: #{tpu_custom_call.1} parent=75 // pred_check_branch
          %509 = sbr.rel (%p507) target = $region92
        $region91: #{tpu_custom_call.1} parent=75 // pred_region
          %510 = dma.done [#allocation9], 2048
        $region92: #{tpu_custom_call.1} parent=75 // pred_fallthru
          _
        // Predicated region
        $region93: #{tpu_custom_call.1} parent=75 // pred_check
          %p511 = pneg %p223
        $region94: #{tpu_custom_call.1} parent=75 // pred_check_branch
          %513 = sbr.rel (%p511) target = $region96
        $region95: #{tpu_custom_call.1} parent=75 // pred_region
          %514 = dma.done [#allocation9], 4096
        $region96: #{tpu_custom_call.1} parent=75 // pred_fallthru
          _
        // Predicated region
        $region97: #{tpu_custom_call.1} parent=75 // pred_check
          %p515 = pneg %p265
        $region98: #{tpu_custom_call.1} parent=75 // pred_check_branch
          %517 = sbr.rel (%p515) target = $region100
        $region99: #{tpu_custom_call.1} parent=75 // pred_region
          %518 = dma.done [#allocation12], 4096
        $region100: #{tpu_custom_call.1} parent=75 // pred_fallthru
          _
        %s519 = sand.u32 %s42, 1
        %s520 = scalar_lea.sflag [#allocation3], %s519
        %s521 = sand.u32 %s42, 1
        %s522 = smul.addr %s521, 64
        %s523 = scalar_lea.vmem [#allocation2], %s522
        %p524 = pneg %p55
        %p525 = pneg %p52
        %p526 = pneg %p76
        %p527 = pneg %p73
        %p528 = pneg %p97
        %p529 = pneg %p94
        %p530 = pneg %p118
        %p531 = pneg %p115
        %p532 = pneg %p139
        %p533 = pneg %p136
        %p534 = pneg %p160
        %p535 = pneg %p157
        %p536 = pneg %p181
        %p537 = pneg %p178
        %p538 = pneg %p202
        %p539 = pneg %p199
        %p540 = pneg %p223
        %p541 = pneg %p220
        %p542 = pneg %p244
        %p543 = pneg %p241
        %p544 = pneg %p265
        %p545 = pneg %p262
        %p546 = pneg %p286
        %p547 = pneg %p283
        %p548 = pneg %p307
        %p549 = pneg %p304
        %p550 = pneg %p328
        %p551 = pneg %p325
        %p552 = pneg %p354
        %p553 = pneg %p351
        %s554 = sand.u32 %s341, 1
        %s555 = scalar_lea.sflag [#allocation4], %s554
        %s556 = sand.u32 %s341, 1
        %s557 = smul.addr %s556, 64
        %s558 = scalar_lea.vmem [#allocation13], %s557
        %v559 = vld [vmem:[%s494] sm:$0xff]
        %v560 = vld [vmem:[%s494 + $0x8] sm:$0xff]
        %v561 = vld [vmem:[%s494 + $0x10] sm:$0xff]
        %v562 = vld [vmem:[%s494 + $0x18] sm:$0xff]
        %v563 = vld [vmem:[%s494 + $0x20] sm:$0xff]
        %v564 = vld [vmem:[%s494 + $0x28] sm:$0xff]
        %v565 = vld [vmem:[%s494 + $0x30] sm:$0xff]
        %v566 = vld [vmem:[%s494 + $0x38] sm:$0xff]
        %v567 = vld [vmem:[#allocation5] sm:$0xff]
        %v568 = vld [vmem:[#allocation5 + $0x8] sm:$0xff]
        %v569 = vld [vmem:[#allocation5 + $0x10] sm:$0xff]
        %v570 = vld [vmem:[#allocation5 + $0x18] sm:$0xff]
        %v571 = vld [vmem:[#allocation5 + $0x20] sm:$0xff]
        %v572 = vld [vmem:[#allocation5 + $0x28] sm:$0xff]
        %v573 = vld [vmem:[#allocation5 + $0x30] sm:$0xff]
        %v574 = vld [vmem:[#allocation5 + $0x38] sm:$0xff]
        %v575 = vld [vmem:[#allocation7] sm:$0xff]
        %v576 = vld [vmem:[#allocation7 + $0x8] sm:$0xff]
        %v577 = vld [vmem:[#allocation7 + $0x10] sm:$0xff]
        %v578 = vld [vmem:[#allocation7 + $0x18] sm:$0xff]
        %v579 = vld [vmem:[#allocation7 + $0x20] sm:$0xff]
        %v580 = vld [vmem:[#allocation7 + $0x28] sm:$0xff]
        %v581 = vld [vmem:[#allocation7 + $0x30] sm:$0xff]
        %v582 = vld [vmem:[#allocation7 + $0x38] sm:$0xff]
        %v583 = vld [vmem:[#allocation7 + $0x40] sm:$0xff]
        %v584 = vld [vmem:[#allocation7 + $0x48] sm:$0xff]
        %v585 = vld [vmem:[#allocation7 + $0x50] sm:$0xff]
        %v586 = vld [vmem:[#allocation7 + $0x58] sm:$0xff]
        %v587 = vld [vmem:[#allocation7 + $0x60] sm:$0xff]
        %v588 = vld [vmem:[#allocation7 + $0x68] sm:$0xff]
        %v589 = vld [vmem:[#allocation7 + $0x70] sm:$0xff]
        %v590 = vld [vmem:[#allocation7 + $0x78] sm:$0xff]
        %v591 = vld [vmem:[#allocation7 + $0x80] sm:$0xff]
        %v592 = vld [vmem:[#allocation7 + $0x88] sm:$0xff]
        %v593 = vld [vmem:[#allocation7 + $0x90] sm:$0xff]
        %v594 = vld [vmem:[#allocation7 + $0x98] sm:$0xff]
        %v595 = vld [vmem:[#allocation7 + $0xa0] sm:$0xff]
        %v596 = vld [vmem:[#allocation7 + $0xa8] sm:$0xff]
        %v597 = vld [vmem:[#allocation7 + $0xb0] sm:$0xff]
        %v598 = vld [vmem:[#allocation7 + $0xb8] sm:$0xff]
        %v599 = vld [vmem:[#allocation7 + $0xc0] sm:$0xff]
        %v600 = vld [vmem:[#allocation7 + $0xc8] sm:$0xff]
        %v601 = vld [vmem:[#allocation7 + $0xd0] sm:$0xff]
        %v602 = vld [vmem:[#allocation7 + $0xd8] sm:$0xff]
        %v603 = vld [vmem:[#allocation7 + $0xe0] sm:$0xff]
        %v604 = vld [vmem:[#allocation7 + $0xe8] sm:$0xff]
        %v605 = vld [vmem:[#allocation7 + $0xf0] sm:$0xff]
        %v606 = vld [vmem:[#allocation7 + $0xf8] sm:$0xff]
        %v607 = vld [vmem:[#allocation7 + $0x100] sm:$0xff]
        %v608 = vld [vmem:[#allocation7 + $0x108] sm:$0xff]
        %v609 = vld [vmem:[#allocation7 + $0x110] sm:$0xff]
        %v610 = vld [vmem:[#allocation7 + $0x118] sm:$0xff]
        %v611 = vld [vmem:[#allocation7 + $0x120] sm:$0xff]
        %v612 = vld [vmem:[#allocation7 + $0x128] sm:$0xff]
        %v613 = vld [vmem:[#allocation7 + $0x130] sm:$0xff]
        %v614 = vld [vmem:[#allocation7 + $0x138] sm:$0xff]
        %v615 = vld [vmem:[#allocation7 + $0x140] sm:$0xff]
        %v616 = vld [vmem:[#allocation7 + $0x148] sm:$0xff]
        %v617 = vld [vmem:[#allocation7 + $0x150] sm:$0xff]
        %v618 = vld [vmem:[#allocation7 + $0x158] sm:$0xff]
        %v619 = vld [vmem:[#allocation7 + $0x160] sm:$0xff]
        %v620 = vld [vmem:[#allocation7 + $0x168] sm:$0xff]
        %v621 = vld [vmem:[#allocation7 + $0x170] sm:$0xff]
        %v622 = vld [vmem:[#allocation7 + $0x178] sm:$0xff]
        %v623 = vld [vmem:[%s3] sm:$0x7]
        %v625 = vlaneseq
        %v626 = vshrl.u32 %v625, 7
        %v627 = vsub.s32 0, %v626
        %v628 = vrot.slane %v623, %v627
        %v629 = vlaneseq
        %v630 = vshrl.u32 %v629, 7
        %v631 = vsub.s32 1, %v630
        %v632 = vrot.slane %v623, %v631
        %v633 = vlaneseq
        %v634 = vshrl.u32 %v633, 7
        %v635 = vsub.s32 2, %v634
        %v636 = vrot.slane %v623, %v635
        %640 = vmatprep.subr.mxu0 %v576
        %641 = vmatpush1.msra.mxu0 %v575
        %642 = vmatprep.subr.mxu0 %v579
        %643 = vmatpush1.msra.mxu0 %v578
        %644 = vmatprep.subr.mxu0 %v582
        %645 = vmatpush1.msra.mxu0 %v581
        %646 = vmatprep.subr.mxu0 %v585
        %647 = vmatpush1.msra.mxu0 %v584
        %648 = vmatprep.subr.mxu0 %v588
        %649 = vmatpush1.msra.mxu0 %v587
        %650 = vmatprep.subr.mxu0 %v591
        %651 = vmatpush1.msra.mxu0 %v590
        %652 = vmatprep.subr.mxu0 %v594
        %653 = vmatpush1.msra.mxu0 %v593
        %654 = vmatprep.subr.mxu0 %v597
        %655 = vmatpush1.msra.mxu0 %v596
        %656 = vmatprep.subr.mxu0 %v600
        %657 = vmatpush1.msra.mxu0 %v599
        %658 = vmatprep.subr.mxu0 %v603
        %659 = vmatpush1.msra.mxu0 %v602
        %660 = vmatprep.subr.mxu0 %v606
        %661 = vmatpush1.msra.mxu0 %v605
        %662 = vmatprep.subr.mxu0 %v609
        %663 = vmatpush1.msra.mxu0 %v608
        %664 = vmatprep.subr.mxu0 %v612
        %665 = vmatpush1.msra.mxu0 %v611
        %666 = vmatprep.subr.mxu0 %v615
        %667 = vmatpush1.msra.mxu0 %v614
        %668 = vmatprep.subr.mxu0 %v618
        %669 = vmatpush1.msra.mxu0 %v617
        %670 = vmatprep.subr.mxu0 %v621
        %671 = vmatpush1.msra.mxu0 %v620
        %672 = vmatprep.subr.mxu0 0.0
        %673 = vmatpush1.msra.mxu0 0.0
        %674 = vmatprep.subr.mxu0 0.0
        %675 = vmatpush1.msra.mxu0 0.0
        %676 = vmatprep.subr.mxu0 0.0
        %677 = vmatpush1.msra.mxu0 0.0
        %678 = vmatprep.subr.mxu0 0.0
        %679 = vmatpush1.msra.mxu0 0.0
        %680 = vmatprep.subr.mxu0 0.0
        %681 = vmatpush1.msra.mxu0 0.0
        %682 = vmatprep.subr.mxu0 0.0
        %683 = vmatpush1.msra.mxu0 0.0
        %684 = vmatprep.subr.mxu0 0.0
        %685 = vmatpush1.msra.mxu0 0.0
        %686 = vmatprep.subr.mxu0 0.0
        %687 = vmatpush1.msra.mxu0 0.0
        %688 = vmatprep.subr.mxu0 0.0
        %689 = vmatpush1.msra.mxu0 0.0
        %690 = vmatprep.subr.mxu0 0.0
        %691 = vmatpush1.msra.mxu0 0.0
        %692 = vmatprep.subr.mxu0 0.0
        %693 = vmatpush1.msra.mxu0 0.0
        %694 = vmatprep.subr.mxu0 0.0
        %695 = vmatpush1.msra.mxu0 0.0
        %696 = vmatprep.subr.mxu0 0.0
        %697 = vmatpush1.msra.mxu0 0.0
        %698 = vmatprep.subr.mxu0 0.0
        %699 = vmatpush1.msra.mxu0 0.0
        %700 = vmatprep.subr.mxu0 0.0
        %701 = vmatpush1.msra.mxu0 0.0
        %702 = vmatprep.subr.mxu0 0.0
        %703 = vmatpush1.msra.mxu0 0.0
        %704 = vmatprep.mubr.f32.mxu0 0.0
        %705 = vmatmul.mubr.f32.gmra.mrb[0].mxu0 %v559
        %v706 = vpop.f32.mrb[0].mxu0
        %v707 = vadd.f32 %v628, %v706
        %v708 = vpop.f32.mrb[0].mxu0
        %v709 = vadd.f32 %v632, %v708
        %710 = vmatprep.mubr.f32.mxu0 0.0
        %711 = vmatmul.mubr.f32.gmra.mrb[0].mxu0 %v560
        %v712 = vpop.f32.mrb[0].mxu0
        %v713 = vadd.f32 %v628, %v712
        %v714 = vpop.f32.mrb[0].mxu0
        %v715 = vadd.f32 %v632, %v714
        %716 = vmatprep.mubr.f32.mxu0 0.0
        %717 = vmatmul.mubr.f32.gmra.mrb[0].mxu0 %v561
        %v718 = vpop.f32.mrb[0].mxu0
        %v719 = vadd.f32 %v628, %v718
        %v720 = vpop.f32.mrb[0].mxu0
        %v721 = vadd.f32 %v632, %v720
        %722 = vmatprep.mubr.f32.mxu0 0.0
        %723 = vmatmul.mubr.f32.gmra.mrb[0].mxu0 %v562
        %v724 = vpop.f32.mrb[0].mxu0
        %v725 = vadd.f32 %v628, %v724
        %v726 = vpop.f32.mrb[0].mxu0
        %v727 = vadd.f32 %v632, %v726
        %728 = vmatprep.mubr.f32.mxu0 0.0
        %729 = vmatmul.mubr.f32.gmra.mrb[0].mxu0 %v563
        %v730 = vpop.f32.mrb[0].mxu0
        %v731 = vadd.f32 %v628, %v730
        %v732 = vpop.f32.mrb[0].mxu0
        %v733 = vadd.f32 %v632, %v732
        %734 = vmatprep.mubr.f32.mxu0 0.0
        %735 = vmatmul.mubr.f32.gmra.mrb[0].mxu0 %v564
        %v736 = vpop.f32.mrb[0].mxu0
        %v737 = vadd.f32 %v628, %v736
        %v738 = vpop.f32.mrb[0].mxu0
        %v739 = vadd.f32 %v632, %v738
        %740 = vmatprep.mubr.f32.mxu0 0.0
        %741 = vmatmul.mubr.f32.gmra.mrb[0].mxu0 %v565
        %v742 = vpop.f32.mrb[0].mxu0
        %v743 = vadd.f32 %v628, %v742
        %v744 = vpop.f32.mrb[0].mxu0
        %v745 = vadd.f32 %v632, %v744
        %746 = vmatprep.mubr.f32.mxu0 0.0
        %747 = vmatmul.mubr.f32.gmra.mrb[0].mxu0 %v566
        %v748 = vpop.f32.mrb[0].mxu0
        %v749 = vadd.f32 %v628, %v748
        %v750 = vpop.f32.mrb[0].mxu0
        %v751 = vadd.f32 %v632, %v750
        %752 = vdwg.mxu0
        %753 = vmatprep.subr.mxu0 0.0
        %754 = vmatpush1.msra.mxu0 %v577
        %755 = vmatprep.subr.mxu0 0.0
        %756 = vmatpush1.msra.mxu0 %v580
        %757 = vmatprep.subr.mxu0 0.0
        %758 = vmatpush1.msra.mxu0 %v583
        %759 = vmatprep.subr.mxu0 0.0
        %760 = vmatpush1.msra.mxu0 %v586
        %761 = vmatprep.subr.mxu0 0.0
        %762 = vmatpush1.msra.mxu0 %v589
        %763 = vmatprep.subr.mxu0 0.0
        %764 = vmatpush1.msra.mxu0 %v592
        %765 = vmatprep.subr.mxu0 0.0
        %766 = vmatpush1.msra.mxu0 %v595
        %767 = vmatprep.subr.mxu0 0.0
        %768 = vmatpush1.msra.mxu0 %v598
        %769 = vmatprep.subr.mxu0 0.0
        %770 = vmatpush1.msra.mxu0 %v601
        %771 = vmatprep.subr.mxu0 0.0
        %772 = vmatpush1.msra.mxu0 %v604
        %773 = vmatprep.subr.mxu0 0.0
        %774 = vmatpush1.msra.mxu0 %v607
        %775 = vmatprep.subr.mxu0 0.0
        %776 = vmatpush1.msra.mxu0 %v610
        %777 = vmatprep.subr.mxu0 0.0
        %778 = vmatpush1.msra.mxu0 %v613
        %779 = vmatprep.subr.mxu0 0.0
        %780 = vmatpush1.msra.mxu0 %v616
        %781 = vmatprep.subr.mxu0 0.0
        %782 = vmatpush1.msra.mxu0 %v619
        %783 = vmatprep.subr.mxu0 0.0
        %784 = vmatpush1.msra.mxu0 %v622
        %785 = vmatprep.subr.mxu0 0.0
        %786 = vmatpush1.msra.mxu0 0.0
        %787 = vmatprep.subr.mxu0 0.0
        %788 = vmatpush1.msra.mxu0 0.0
        %789 = vmatprep.subr.mxu0 0.0
        %790 = vmatpush1.msra.mxu0 0.0
        %791 = vmatprep.subr.mxu0 0.0
        %792 = vmatpush1.msra.mxu0 0.0
        %793 = vmatprep.subr.mxu0 0.0
        %794 = vmatpush1.msra.mxu0 0.0
        %795 = vmatprep.subr.mxu0 0.0
        %796 = vmatpush1.msra.mxu0 0.0
        %797 = vmatprep.subr.mxu0 0.0
        %798 = vmatpush1.msra.mxu0 0.0
        %799 = vmatprep.subr.mxu0 0.0
        %800 = vmatpush1.msra.mxu0 0.0
        %801 = vmatprep.subr.mxu0 0.0
        %802 = vmatpush1.msra.mxu0 0.0
        %803 = vmatprep.subr.mxu0 0.0
        %804 = vmatpush1.msra.mxu0 0.0
        %805 = vmatprep.subr.mxu0 0.0
        %806 = vmatpush1.msra.mxu0 0.0
        %807 = vmatprep.subr.mxu0 0.0
        %808 = vmatpush1.msra.mxu0 0.0
        %809 = vmatprep.subr.mxu0 0.0
        %810 = vmatpush1.msra.mxu0 0.0
        %811 = vmatprep.subr.mxu0 0.0
        %812 = vmatpush1.msra.mxu0 0.0
        %813 = vmatprep.subr.mxu0 0.0
        %814 = vmatpush1.msra.mxu0 0.0
        %815 = vmatprep.subr.mxu0 0.0
        %816 = vmatpush1.msra.mxu0 0.0
        %817 = vmatprep.mubr.f32.mxu0 0.0
        %818 = vmatmul.mubr.f32.gmra.mrb[0].mxu0 %v559
        %v819 = vpop.f32.mrb[0].mxu0
        %v820 = vadd.f32 %v636, %v819
        %v821 = vpop.f32.mrb[0].mxu0
        %822 = vmatprep.mubr.f32.mxu0 0.0
        %823 = vmatmul.mubr.f32.gmra.mrb[0].mxu0 %v560
        %v824 = vpop.f32.mrb[0].mxu0
        %v825 = vadd.f32 %v636, %v824
        %v826 = vpop.f32.mrb[0].mxu0
        %827 = vmatprep.mubr.f32.mxu0 0.0
        %828 = vmatmul.mubr.f32.gmra.mrb[0].mxu0 %v561
        %v829 = vpop.f32.mrb[0].mxu0
        %v830 = vadd.f32 %v636, %v829
        %v831 = vpop.f32.mrb[0].mxu0
        %832 = vmatprep.mubr.f32.mxu0 0.0
        %833 = vmatmul.mubr.f32.gmra.mrb[0].mxu0 %v562
        %v834 = vpop.f32.mrb[0].mxu0
        %v835 = vadd.f32 %v636, %v834
        %v836 = vpop.f32.mrb[0].mxu0
        %837 = vmatprep.mubr.f32.mxu0 0.0
        %838 = vmatmul.mubr.f32.gmra.mrb[0].mxu0 %v563
        %v839 = vpop.f32.mrb[0].mxu0
        %v840 = vadd.f32 %v636, %v839
        %v841 = vpop.f32.mrb[0].mxu0
        %842 = vmatprep.mubr.f32.mxu0 0.0
        %843 = vmatmul.mubr.f32.gmra.mrb[0].mxu0 %v564
        %v844 = vpop.f32.mrb[0].mxu0
        %v845 = vadd.f32 %v636, %v844
        %v846 = vpop.f32.mrb[0].mxu0
        %847 = vmatprep.mubr.f32.mxu0 0.0
        %848 = vmatmul.mubr.f32.gmra.mrb[0].mxu0 %v565
        %v849 = vpop.f32.mrb[0].mxu0
        %v850 = vadd.f32 %v636, %v849
        %v851 = vpop.f32.mrb[0].mxu0
        %852 = vmatprep.mubr.f32.mxu0 0.0
        %853 = vmatmul.mubr.f32.gmra.mrb[0].mxu0 %v566
        %v854 = vpop.f32.mrb[0].mxu0
        %v855 = vadd.f32 %v636, %v854
        %v856 = vpop.f32.mrb[0].mxu0
        %857 = vdwg.mxu0
        %vm858 = vcmask 261120
        %v860 = vsel %vm858, %v707, 0
        %v863 = vsel %vm858, %v713, 0
        %v866 = vsel %vm858, %v719, 0
        %v869 = vsel %vm858, %v725, 0
        %v872 = vsel %vm858, %v731, 0
        %v875 = vsel %vm858, %v737, 0
        %v878 = vsel %vm858, %v743, 0
        %v881 = vsel %vm858, %v749, 0
        %v884 = vsel %vm858, %v709, 0
        %v887 = vsel %vm858, %v715, 0
        %v890 = vsel %vm858, %v721, 0
        %v893 = vsel %vm858, %v727, 0
        %v896 = vsel %vm858, %v733, 0
        %v899 = vsel %vm858, %v739, 0
        %v902 = vsel %vm858, %v745, 0
        %v905 = vsel %vm858, %v751, 0
        %907 = vmatprep.subr.mxu0 0.0
        %908 = vmatpush1.xpose.msra.mxu0 %v884
        %909 = vmatprep.subr.mxu0 0.0
        %910 = vmatpush1.xpose.msra.mxu0 %v887
        %911 = vmatprep.subr.mxu0 0.0
        %912 = vmatpush1.xpose.msra.mxu0 %v890
        %913 = vmatprep.subr.mxu0 0.0
        %914 = vmatpush1.xpose.msra.mxu0 %v893
        %915 = vmatprep.subr.mxu0 0.0
        %916 = vmatpush1.xpose.msra.mxu0 %v896
        %917 = vmatprep.subr.mxu0 0.0
        %918 = vmatpush1.xpose.msra.mxu0 %v899
        %919 = vmatprep.subr.mxu0 0.0
        %920 = vmatpush1.xpose.msra.mxu0 %v902
        %921 = vmatprep.subr.mxu0 0.0
        %922 = vmatpush1.xpose.msra.mxu0 %v905
        %923 = vmatprep.subr.mxu0 0.0
        %924 = vmatpush1.xpose.msra.mxu0 0.0
        %925 = vmatprep.subr.mxu0 0.0
        %926 = vmatpush1.xpose.msra.mxu0 0.0
        %927 = vmatprep.subr.mxu0 0.0
        %928 = vmatpush1.xpose.msra.mxu0 0.0
        %929 = vmatprep.subr.mxu0 0.0
        %930 = vmatpush1.xpose.msra.mxu0 0.0
        %931 = vmatprep.subr.mxu0 0.0
        %932 = vmatpush1.xpose.msra.mxu0 0.0
        %933 = vmatprep.subr.mxu0 0.0
        %934 = vmatpush1.xpose.msra.mxu0 0.0
        %935 = vmatprep.subr.mxu0 0.0
        %936 = vmatpush1.xpose.msra.mxu0 0.0
        %937 = vmatprep.subr.mxu0 0.0
        %938 = vmatpush1.xpose.msra.mxu0 0.0
        %939 = vmatprep.subr.mxu0 0.0
        %940 = vmatpush1.xpose.msra.mxu0 0.0
        %941 = vmatprep.subr.mxu0 0.0
        %942 = vmatpush1.xpose.msra.mxu0 0.0
        %943 = vmatprep.subr.mxu0 0.0
        %944 = vmatpush1.xpose.msra.mxu0 0.0
        %945 = vmatprep.subr.mxu0 0.0
        %946 = vmatpush1.xpose.msra.mxu0 0.0
        %947 = vmatprep.subr.mxu0 0.0
        %948 = vmatpush1.xpose.msra.mxu0 0.0
        %949 = vmatprep.subr.mxu0 0.0
        %950 = vmatpush1.xpose.msra.mxu0 0.0
        %951 = vmatprep.subr.mxu0 0.0
        %952 = vmatpush1.xpose.msra.mxu0 0.0
        %953 = vmatprep.subr.mxu0 0.0
        %954 = vmatpush1.xpose.msra.mxu0 0.0
        %955 = vmatprep.subr.mxu0 0.0
        %956 = vmatpush1.xpose.msra.mxu0 0.0
        %957 = vmatprep.subr.mxu0 0.0
        %958 = vmatpush1.xpose.msra.mxu0 0.0
        %959 = vmatprep.subr.mxu0 0.0
        %960 = vmatpush1.xpose.msra.mxu0 0.0
        %961 = vmatprep.subr.mxu0 0.0
        %962 = vmatpush1.xpose.msra.mxu0 0.0
        %963 = vmatprep.subr.mxu0 0.0
        %964 = vmatpush1.xpose.msra.mxu0 0.0
        %965 = vmatprep.subr.mxu0 0.0
        %966 = vmatpush1.xpose.msra.mxu0 0.0
        %967 = vmatprep.subr.mxu0 0.0
        %968 = vmatpush1.xpose.msra.mxu0 0.0
        %969 = vmatprep.subr.mxu0 0.0
        %970 = vmatpush1.xpose.msra.mxu0 0.0
        %971 = vmatprep.mubr.f32.mxu0 0.0
        %972 = vmatmul.mubr.f32.gmra.mrb[0].mxu0 %v860
        %v973 = vpop.f32.mrb[0].mxu0
        %v974 = vadd.f32 0.0, %v973
        %v975 = vpop.f32.mrb[0].mxu0
        %976 = vmatprep.mubr.f32.mxu0 0.0
        %977 = vmatmul.mubr.f32.gmra.mrb[0].mxu0 %v863
        %v978 = vpop.f32.mrb[0].mxu0
        %v979 = vadd.f32 0.0, %v978
        %v980 = vpop.f32.mrb[0].mxu0
        %981 = vmatprep.mubr.f32.mxu0 0.0
        %982 = vmatmul.mubr.f32.gmra.mrb[0].mxu0 %v866
        %v983 = vpop.f32.mrb[0].mxu0
        %v984 = vadd.f32 0.0, %v983
        %v985 = vpop.f32.mrb[0].mxu0
        %986 = vmatprep.mubr.f32.mxu0 0.0
        %987 = vmatmul.mubr.f32.gmra.mrb[0].mxu0 %v869
        %v988 = vpop.f32.mrb[0].mxu0
        %v989 = vadd.f32 0.0, %v988
        %v990 = vpop.f32.mrb[0].mxu0
        %991 = vmatprep.mubr.f32.mxu0 0.0
        %992 = vmatmul.mubr.f32.gmra.mrb[0].mxu0 %v872
        %v993 = vpop.f32.mrb[0].mxu0
        %v994 = vadd.f32 0.0, %v993
        %v995 = vpop.f32.mrb[0].mxu0
        %996 = vmatprep.mubr.f32.mxu0 0.0
        %997 = vmatmul.mubr.f32.gmra.mrb[0].mxu0 %v875
        %v998 = vpop.f32.mrb[0].mxu0
        %v999 = vadd.f32 0.0, %v998
        %v1000 = vpop.f32.mrb[0].mxu0
        %1001 = vmatprep.mubr.f32.mxu0 0.0
        %1002 = vmatmul.mubr.f32.gmra.mrb[0].mxu0 %v878
        %v1003 = vpop.f32.mrb[0].mxu0
        %v1004 = vadd.f32 0.0, %v1003
        %v1005 = vpop.f32.mrb[0].mxu0
        %1006 = vmatprep.mubr.f32.mxu0 0.0
        %1007 = vmatmul.mubr.f32.gmra.mrb[0].mxu0 %v881
        %v1008 = vpop.f32.mrb[0].mxu0
        %v1009 = vadd.f32 0.0, %v1008
        %v1010 = vpop.f32.mrb[0].mxu0
        %1011 = vdwg.mxu0
        %v1012 = vmul.f32 %v974, 0.17677669
        %v1013 = vmul.f32 %v979, 0.17677669
        %v1014 = vmul.f32 %v984, 0.17677669
        %v1015 = vmul.f32 %v989, 0.17677669
        %v1016 = vmul.f32 %v994, 0.17677669
        %v1017 = vmul.f32 %v999, 0.17677669
        %v1018 = vmul.f32 %v1004, 0.17677669
        %v1019 = vmul.f32 %v1009, 0.17677669
        %v1020 = vadd.f32 %v1012, %v567
        %v1021 = vadd.f32 %v1013, %v568
        %v1022 = vadd.f32 %v1014, %v569
        %v1023 = vadd.f32 %v1015, %v570
        %v1024 = vadd.f32 %v1016, %v571
        %v1025 = vadd.f32 %v1017, %v572
        %v1026 = vadd.f32 %v1018, %v573
        %v1027 = vadd.f32 %v1019, %v574
        %vm1028 = vcmask 523264
        %v1029 = vsel %vm1028, %v1020, -inf
        %1030 = vmax.xlane.f32.xlu0 %v1029
        %v1031 = vpop.xlane.xlu0 %1030
        %v1032 = vsel %vm1028, %v1021, -inf
        %1033 = vmax.xlane.f32.xlu0 %v1032
        %v1034 = vpop.xlane.xlu0 %1033
        %v1035 = vsel %vm1028, %v1022, -inf
        %1036 = vmax.xlane.f32.xlu0 %v1035
        %v1037 = vpop.xlane.xlu0 %1036
        %v1038 = vsel %vm1028, %v1023, -inf
        %1039 = vmax.xlane.f32.xlu0 %v1038
        %v1040 = vpop.xlane.xlu0 %1039
        %v1041 = vsel %vm1028, %v1024, -inf
        %1042 = vmax.xlane.f32.xlu0 %v1041
        %v1043 = vpop.xlane.xlu0 %1042
        %v1044 = vsel %vm1028, %v1025, -inf
        %1045 = vmax.xlane.f32.xlu0 %v1044
        %v1046 = vpop.xlane.xlu0 %1045
        %v1047 = vsel %vm1028, %v1026, -inf
        %1048 = vmax.xlane.f32.xlu0 %v1047
        %v1049 = vpop.xlane.xlu0 %1048
        %v1050 = vsel %vm1028, %v1027, -inf
        %1051 = vmax.xlane.f32.xlu0 %v1050
        %v1052 = vpop.xlane.xlu0 %1051
        %v1053 = vsub.f32 %v1020, %v1031
        %v1054 = vsub.f32 %v1021, %v1034
        %v1055 = vsub.f32 %v1022, %v1037
        %v1056 = vsub.f32 %v1023, %v1040
        %v1057 = vsub.f32 %v1024, %v1043
        %v1058 = vsub.f32 %v1025, %v1046
        %v1059 = vsub.f32 %v1026, %v1049
        %v1060 = vsub.f32 %v1027, %v1052
        %v1061 = vmul.f32 %v1053, 1.442695
        %v1062 = vpow.pop %v1061
        %v1063 = vmul.f32 %v1054, 1.442695
        %v1064 = vpow.pop %v1063
        %v1065 = vmul.f32 %v1055, 1.442695
        %v1066 = vpow.pop %v1065
        %v1067 = vmul.f32 %v1056, 1.442695
        %v1068 = vpow.pop %v1067
        %v1069 = vmul.f32 %v1057, 1.442695
        %v1070 = vpow.pop %v1069
        %v1071 = vmul.f32 %v1058, 1.442695
        %v1072 = vpow.pop %v1071
        %v1073 = vmul.f32 %v1059, 1.442695
        %v1074 = vpow.pop %v1073
        %v1075 = vmul.f32 %v1060, 1.442695
        %v1076 = vpow.pop %v1075
        %v1077 = vsel %vm1028, %v1062, 0.0
        %1078 = vadd.xlane.f32.xlu0 %v1077
        %v1079 = vpop.xlane.xlu0 %1078
        %v1080 = vsel %vm1028, %v1064, 0.0
        %1081 = vadd.xlane.f32.xlu0 %v1080
        %v1082 = vpop.xlane.xlu0 %1081
        %v1083 = vsel %vm1028, %v1066, 0.0
        %1084 = vadd.xlane.f32.xlu0 %v1083
        %v1085 = vpop.xlane.xlu0 %1084
        %v1086 = vsel %vm1028, %v1068, 0.0
        %1087 = vadd.xlane.f32.xlu0 %v1086
        %v1088 = vpop.xlane.xlu0 %1087
        %v1089 = vsel %vm1028, %v1070, 0.0
        %1090 = vadd.xlane.f32.xlu0 %v1089
        %v1091 = vpop.xlane.xlu0 %1090
        %v1092 = vsel %vm1028, %v1072, 0.0
        %1093 = vadd.xlane.f32.xlu0 %v1092
        %v1094 = vpop.xlane.xlu0 %1093
        %v1095 = vsel %vm1028, %v1074, 0.0
        %1096 = vadd.xlane.f32.xlu0 %v1095
        %v1097 = vpop.xlane.xlu0 %1096
        %v1098 = vsel %vm1028, %v1076, 0.0
        %1099 = vadd.xlane.f32.xlu0 %v1098
        %v1100 = vpop.xlane.xlu0 %1099
        %v1101 = vrcp.pop %v1079
        %v1102 = vrcp.pop %v1082
        %v1103 = vrcp.pop %v1085
        %v1104 = vrcp.pop %v1088
        %v1105 = vrcp.pop %v1091
        %v1106 = vrcp.pop %v1094
        %v1107 = vrcp.pop %v1097
        %v1108 = vrcp.pop %v1100
        %v1109 = vmul.f32 %v1062, %v1101
        %v1110 = vmul.f32 %v1064, %v1102
        %v1111 = vmul.f32 %v1066, %v1103
        %v1112 = vmul.f32 %v1068, %v1104
        %v1113 = vmul.f32 %v1070, %v1105
        %v1114 = vmul.f32 %v1072, %v1106
        %v1115 = vmul.f32 %v1074, %v1107
        %v1116 = vmul.f32 %v1076, %v1108
        %v1118 = vsel %vm1028, %v1109, 0
        %v1121 = vsel %vm1028, %v1110, 0
        %v1124 = vsel %vm1028, %v1111, 0
        %v1127 = vsel %vm1028, %v1112, 0
        %v1130 = vsel %vm1028, %v1113, 0
        %v1133 = vsel %vm1028, %v1114, 0
        %v1136 = vsel %vm1028, %v1115, 0
        %v1139 = vsel %vm1028, %v1116, 0
        %1141 = vmatprep.subr.mxu0 0.0
        %1142 = vmatpush1.msra.mxu0 %v820
        %1143 = vmatprep.subr.mxu0 0.0
        %1144 = vmatpush1.msra.mxu0 %v825
        %1145 = vmatprep.subr.mxu0 0.0
        %1146 = vmatpush1.msra.mxu0 %v830
        %1147 = vmatprep.subr.mxu0 0.0
        %1148 = vmatpush1.msra.mxu0 %v835
        %1149 = vmatprep.subr.mxu0 0.0
        %1150 = vmatpush1.msra.mxu0 %v840
        %1151 = vmatprep.subr.mxu0 0.0
        %1152 = vmatpush1.msra.mxu0 %v845
        %1153 = vmatprep.subr.mxu0 0.0
        %1154 = vmatpush1.msra.mxu0 %v850
        %1155 = vmatprep.subr.mxu0 0.0
        %1156 = vmatpush1.msra.mxu0 %v855
        %1157 = vmatprep.subr.mxu0 0.0
        %1158 = vmatpush1.msra.mxu0 0.0
        %1159 = vmatprep.subr.mxu0 0.0
        %1160 = vmatpush1.msra.mxu0 0.0
        %1161 = vmatprep.subr.mxu0 0.0
        %1162 = vmatpush1.msra.mxu0 0.0
        %1163 = vmatprep.subr.mxu0 0.0
        %1164 = vmatpush1.msra.mxu0 0.0
        %1165 = vmatprep.subr.mxu0 0.0
        %1166 = vmatpush1.msra.mxu0 0.0
        %1167 = vmatprep.subr.mxu0 0.0
        %1168 = vmatpush1.msra.mxu0 0.0
        %1169 = vmatprep.subr.mxu0 0.0
        %1170 = vmatpush1.msra.mxu0 0.0
        %1171 = vmatprep.subr.mxu0 0.0
        %1172 = vmatpush1.msra.mxu0 0.0
        %1173 = vmatprep.subr.mxu0 0.0
        %1174 = vmatpush1.msra.mxu0 0.0
        %1175 = vmatprep.subr.mxu0 0.0
        %1176 = vmatpush1.msra.mxu0 0.0
        %1177 = vmatprep.subr.mxu0 0.0
        %1178 = vmatpush1.msra.mxu0 0.0
        %1179 = vmatprep.subr.mxu0 0.0
        %1180 = vmatpush1.msra.mxu0 0.0
        %1181 = vmatprep.subr.mxu0 0.0
        %1182 = vmatpush1.msra.mxu0 0.0
        %1183 = vmatprep.subr.mxu0 0.0
        %1184 = vmatpush1.msra.mxu0 0.0
        %1185 = vmatprep.subr.mxu0 0.0
        %1186 = vmatpush1.msra.mxu0 0.0
        %1187 = vmatprep.subr.mxu0 0.0
        %1188 = vmatpush1.msra.mxu0 0.0
        %1189 = vmatprep.subr.mxu0 0.0
        %1190 = vmatpush1.msra.mxu0 0.0
        %1191 = vmatprep.subr.mxu0 0.0
        %1192 = vmatpush1.msra.mxu0 0.0
        %1193 = vmatprep.subr.mxu0 0.0
        %1194 = vmatpush1.msra.mxu0 0.0
        %1195 = vmatprep.subr.mxu0 0.0
        %1196 = vmatpush1.msra.mxu0 0.0
        %1197 = vmatprep.subr.mxu0 0.0
        %1198 = vmatpush1.msra.mxu0 0.0
        %1199 = vmatprep.subr.mxu0 0.0
        %1200 = vmatpush1.msra.mxu0 0.0
        %1201 = vmatprep.subr.mxu0 0.0
        %1202 = vmatpush1.msra.mxu0 0.0
        %1203 = vmatprep.subr.mxu0 0.0
        %1204 = vmatpush1.msra.mxu0 0.0
        %1205 = vmatprep.mubr.f32.mxu0 0.0
        %1206 = vmatmul.mubr.f32.gmra.mrb[0].mxu0 %v1118
        %v1207 = vpop.f32.mrb[0].mxu0
        %v1208 = vadd.f32 0.0, %v1207
        %v1209 = vpop.f32.mrb[0].mxu0
        %1210 = vmatprep.mubr.f32.mxu0 0.0
        %1211 = vmatmul.mubr.f32.gmra.mrb[0].mxu0 %v1121
        %v1212 = vpop.f32.mrb[0].mxu0
        %v1213 = vadd.f32 0.0, %v1212
        %v1214 = vpop.f32.mrb[0].mxu0
        %1215 = vmatprep.mubr.f32.mxu0 0.0
        %1216 = vmatmul.mubr.f32.gmra.mrb[0].mxu0 %v1124
        %v1217 = vpop.f32.mrb[0].mxu0
        %v1218 = vadd.f32 0.0, %v1217
        %v1219 = vpop.f32.mrb[0].mxu0
        %1220 = vmatprep.mubr.f32.mxu0 0.0
        %1221 = vmatmul.mubr.f32.gmra.mrb[0].mxu0 %v1127
        %v1222 = vpop.f32.mrb[0].mxu0
        %v1223 = vadd.f32 0.0, %v1222
        %v1224 = vpop.f32.mrb[0].mxu0
        %1225 = vmatprep.mubr.f32.mxu0 0.0
        %1226 = vmatmul.mubr.f32.gmra.mrb[0].mxu0 %v1130
        %v1227 = vpop.f32.mrb[0].mxu0
        %v1228 = vadd.f32 0.0, %v1227
        %v1229 = vpop.f32.mrb[0].mxu0
        %1230 = vmatprep.mubr.f32.mxu0 0.0
        %1231 = vmatmul.mubr.f32.gmra.mrb[0].mxu0 %v1133
        %v1232 = vpop.f32.mrb[0].mxu0
        %v1233 = vadd.f32 0.0, %v1232
        %v1234 = vpop.f32.mrb[0].mxu0
        %1235 = vmatprep.mubr.f32.mxu0 0.0
        %1236 = vmatmul.mubr.f32.gmra.mrb[0].mxu0 %v1136
        %v1237 = vpop.f32.mrb[0].mxu0
        %v1238 = vadd.f32 0.0, %v1237
        %v1239 = vpop.f32.mrb[0].mxu0
        %1240 = vmatprep.mubr.f32.mxu0 0.0
        %1241 = vmatmul.mubr.f32.gmra.mrb[0].mxu0 %v1139
        %v1242 = vpop.f32.mrb[0].mxu0
        %v1243 = vadd.f32 0.0, %v1242
        %v1244 = vpop.f32.mrb[0].mxu0
        %1245 = vdwg.mxu0
        %1246 = vrot.lane.b32.xlu0 %v707, 96
        %v1247 = vpop.permute.xlu0 %1246
        %1248 = vrot.lane.b32.xlu0 %v713, 96
        %v1249 = vpop.permute.xlu0 %1248
        %1250 = vrot.lane.b32.xlu0 %v719, 96
        %v1251 = vpop.permute.xlu0 %1250
        %1252 = vrot.lane.b32.xlu0 %v725, 96
        %v1253 = vpop.permute.xlu0 %1252
        %1254 = vrot.lane.b32.xlu0 %v731, 96
        %v1255 = vpop.permute.xlu0 %1254
        %1256 = vrot.lane.b32.xlu0 %v737, 96
        %v1257 = vpop.permute.xlu0 %1256
        %1258 = vrot.lane.b32.xlu0 %v743, 96
        %v1259 = vpop.permute.xlu0 %1258
        %1260 = vrot.lane.b32.xlu0 %v749, 96
        %v1261 = vpop.permute.xlu0 %1260
        %1262 = vrot.lane.b32.xlu0 %v709, 96
        %v1263 = vpop.permute.xlu0 %1262
        %1264 = vrot.lane.b32.xlu0 %v715, 96
        %v1265 = vpop.permute.xlu0 %1264
        %1266 = vrot.lane.b32.xlu0 %v721, 96
        %v1267 = vpop.permute.xlu0 %1266
        %1268 = vrot.lane.b32.xlu0 %v727, 96
        %v1269 = vpop.permute.xlu0 %1268
        %1270 = vrot.lane.b32.xlu0 %v733, 96
        %v1271 = vpop.permute.xlu0 %1270
        %1272 = vrot.lane.b32.xlu0 %v739, 96
        %v1273 = vpop.permute.xlu0 %1272
        %1274 = vrot.lane.b32.xlu0 %v745, 96
        %v1275 = vpop.permute.xlu0 %1274
        %1276 = vrot.lane.b32.xlu0 %v751, 96
        %v1277 = vpop.permute.xlu0 %1276
        %v1278 = vsel %vm858, %v1247, 0
        %v1280 = vsel %vm858, %v1249, 0
        %v1282 = vsel %vm858, %v1251, 0
        %v1284 = vsel %vm858, %v1253, 0
        %v1286 = vsel %vm858, %v1255, 0
        %v1288 = vsel %vm858, %v1257, 0
        %v1290 = vsel %vm858, %v1259, 0
        %v1292 = vsel %vm858, %v1261, 0
        %v1294 = vsel %vm858, %v1263, 0
        %v1296 = vsel %vm858, %v1265, 0
        %v1298 = vsel %vm858, %v1267, 0
        %v1300 = vsel %vm858, %v1269, 0
        %v1302 = vsel %vm858, %v1271, 0
        %v1304 = vsel %vm858, %v1273, 0
        %v1306 = vsel %vm858, %v1275, 0
        %v1308 = vsel %vm858, %v1277, 0
        %1310 = vmatprep.subr.mxu0 0.0
        %1311 = vmatpush1.xpose.msra.mxu0 %v1294
        %1312 = vmatprep.subr.mxu0 0.0
        %1313 = vmatpush1.xpose.msra.mxu0 %v1296
        %1314 = vmatprep.subr.mxu0 0.0
        %1315 = vmatpush1.xpose.msra.mxu0 %v1298
        %1316 = vmatprep.subr.mxu0 0.0
        %1317 = vmatpush1.xpose.msra.mxu0 %v1300
        %1318 = vmatprep.subr.mxu0 0.0
        %1319 = vmatpush1.xpose.msra.mxu0 %v1302
        %1320 = vmatprep.subr.mxu0 0.0
        %1321 = vmatpush1.xpose.msra.mxu0 %v1304
        %1322 = vmatprep.subr.mxu0 0.0
        %1323 = vmatpush1.xpose.msra.mxu0 %v1306
        %1324 = vmatprep.subr.mxu0 0.0
        %1325 = vmatpush1.xpose.msra.mxu0 %v1308
        %1326 = vmatprep.subr.mxu0 0.0
        %1327 = vmatpush1.xpose.msra.mxu0 0.0
        %1328 = vmatprep.subr.mxu0 0.0
        %1329 = vmatpush1.xpose.msra.mxu0 0.0
        %1330 = vmatprep.subr.mxu0 0.0
        %1331 = vmatpush1.xpose.msra.mxu0 0.0
        %1332 = vmatprep.subr.mxu0 0.0
        %1333 = vmatpush1.xpose.msra.mxu0 0.0
        %1334 = vmatprep.subr.mxu0 0.0
        %1335 = vmatpush1.xpose.msra.mxu0 0.0
        %1336 = vmatprep.subr.mxu0 0.0
        %1337 = vmatpush1.xpose.msra.mxu0 0.0
        %1338 = vmatprep.subr.mxu0 0.0
        %1339 = vmatpush1.xpose.msra.mxu0 0.0
        %1340 = vmatprep.subr.mxu0 0.0
        %1341 = vmatpush1.xpose.msra.mxu0 0.0
        %1342 = vmatprep.subr.mxu0 0.0
        %1343 = vmatpush1.xpose.msra.mxu0 0.0
        %1344 = vmatprep.subr.mxu0 0.0
        %1345 = vmatpush1.xpose.msra.mxu0 0.0
        %1346 = vmatprep.subr.mxu0 0.0
        %1347 = vmatpush1.xpose.msra.mxu0 0.0
        %1348 = vmatprep.subr.mxu0 0.0
        %1349 = vmatpush1.xpose.msra.mxu0 0.0
        %1350 = vmatprep.subr.mxu0 0.0
        %1351 = vmatpush1.xpose.msra.mxu0 0.0
        %1352 = vmatprep.subr.mxu0 0.0
        %1353 = vmatpush1.xpose.msra.mxu0 0.0
        %1354 = vmatprep.subr.mxu0 0.0
        %1355 = vmatpush1.xpose.msra.mxu0 0.0
        %1356 = vmatprep.subr.mxu0 0.0
        %1357 = vmatpush1.xpose.msra.mxu0 0.0
        %1358 = vmatprep.subr.mxu0 0.0
        %1359 = vmatpush1.xpose.msra.mxu0 0.0
        %1360 = vmatprep.subr.mxu0 0.0
        %1361 = vmatpush1.xpose.msra.mxu0 0.0
        %1362 = vmatprep.subr.mxu0 0.0
        %1363 = vmatpush1.xpose.msra.mxu0 0.0
        %1364 = vmatprep.subr.mxu0 0.0
        %1365 = vmatpush1.xpose.msra.mxu0 0.0
        %1366 = vmatprep.subr.mxu0 0.0
        %1367 = vmatpush1.xpose.msra.mxu0 0.0
        %1368 = vmatprep.subr.mxu0 0.0
        %1369 = vmatpush1.xpose.msra.mxu0 0.0
        %1370 = vmatprep.subr.mxu0 0.0
        %1371 = vmatpush1.xpose.msra.mxu0 0.0
        %1372 = vmatprep.subr.mxu0 0.0
        %1373 = vmatpush1.xpose.msra.mxu0 0.0
        %1374 = vmatprep.mubr.f32.mxu0 0.0
        %1375 = vmatmul.mubr.f32.gmra.mrb[0].mxu0 %v1278
        %v1376 = vpop.f32.mrb[0].mxu0
        %v1377 = vadd.f32 0.0, %v1376
        %v1378 = vpop.f32.mrb[0].mxu0
        %1379 = vmatprep.mubr.f32.mxu0 0.0
        %1380 = vmatmul.mubr.f32.gmra.mrb[0].mxu0 %v1280
        %v1381 = vpop.f32.mrb[0].mxu0
        %v1382 = vadd.f32 0.0, %v1381
        %v1383 = vpop.f32.mrb[0].mxu0
        %1384 = vmatprep.mubr.f32.mxu0 0.0
        %1385 = vmatmul.mubr.f32.gmra.mrb[0].mxu0 %v1282
        %v1386 = vpop.f32.mrb[0].mxu0
        %v1387 = vadd.f32 0.0, %v1386
        %v1388 = vpop.f32.mrb[0].mxu0
        %1389 = vmatprep.mubr.f32.mxu0 0.0
        %1390 = vmatmul.mubr.f32.gmra.mrb[0].mxu0 %v1284
        %v1391 = vpop.f32.mrb[0].mxu0
        %v1392 = vadd.f32 0.0, %v1391
        %v1393 = vpop.f32.mrb[0].mxu0
        %1394 = vmatprep.mubr.f32.mxu0 0.0
        %1395 = vmatmul.mubr.f32.gmra.mrb[0].mxu0 %v1286
        %v1396 = vpop.f32.mrb[0].mxu0
        %v1397 = vadd.f32 0.0, %v1396
        %v1398 = vpop.f32.mrb[0].mxu0
        %1399 = vmatprep.mubr.f32.mxu0 0.0
        %1400 = vmatmul.mubr.f32.gmra.mrb[0].mxu0 %v1288
        %v1401 = vpop.f32.mrb[0].mxu0
        %v1402 = vadd.f32 0.0, %v1401
        %v1403 = vpop.f32.mrb[0].mxu0
        %1404 = vmatprep.mubr.f32.mxu0 0.0
        %1405 = vmatmul.mubr.f32.gmra.mrb[0].mxu0 %v1290
        %v1406 = vpop.f32.mrb[0].mxu0
        %v1407 = vadd.f32 0.0, %v1406
        %v1408 = vpop.f32.mrb[0].mxu0
        %1409 = vmatprep.mubr.f32.mxu0 0.0
        %1410 = vmatmul.mubr.f32.gmra.mrb[0].mxu0 %v1292
        %v1411 = vpop.f32.mrb[0].mxu0
        %v1412 = vadd.f32 0.0, %v1411
        %v1413 = vpop.f32.mrb[0].mxu0
        %1414 = vdwg.mxu0
        %v1415 = vmul.f32 %v1377, 0.17677669
        %v1416 = vmul.f32 %v1382, 0.17677669
        %v1417 = vmul.f32 %v1387, 0.17677669
        %v1418 = vmul.f32 %v1392, 0.17677669
        %v1419 = vmul.f32 %v1397, 0.17677669
        %v1420 = vmul.f32 %v1402, 0.17677669
        %v1421 = vmul.f32 %v1407, 0.17677669
        %v1422 = vmul.f32 %v1412, 0.17677669
        %v1423 = vadd.f32 %v1415, %v567
        %v1424 = vadd.f32 %v1416, %v568
        %v1425 = vadd.f32 %v1417, %v569
        %v1426 = vadd.f32 %v1418, %v570
        %v1427 = vadd.f32 %v1419, %v571
        %v1428 = vadd.f32 %v1420, %v572
        %v1429 = vadd.f32 %v1421, %v573
        %v1430 = vadd.f32 %v1422, %v574
        %v1431 = vsel %vm1028, %v1423, -inf
        %1432 = vmax.xlane.f32.xlu0 %v1431
        %v1433 = vpop.xlane.xlu0 %1432
        %v1434 = vsel %vm1028, %v1424, -inf
        %1435 = vmax.xlane.f32.xlu0 %v1434
        %v1436 = vpop.xlane.xlu0 %1435
        %v1437 = vsel %vm1028, %v1425, -inf
        %1438 = vmax.xlane.f32.xlu0 %v1437
        %v1439 = vpop.xlane.xlu0 %1438
        %v1440 = vsel %vm1028, %v1426, -inf
        %1441 = vmax.xlane.f32.xlu0 %v1440
        %v1442 = vpop.xlane.xlu0 %1441
        %v1443 = vsel %vm1028, %v1427, -inf
        %1444 = vmax.xlane.f32.xlu0 %v1443
        %v1445 = vpop.xlane.xlu0 %1444
        %v1446 = vsel %vm1028, %v1428, -inf
        %1447 = vmax.xlane.f32.xlu0 %v1446
        %v1448 = vpop.xlane.xlu0 %1447
        %v1449 = vsel %vm1028, %v1429, -inf
        %1450 = vmax.xlane.f32.xlu0 %v1449
        %v1451 = vpop.xlane.xlu0 %1450
        %v1452 = vsel %vm1028, %v1430, -inf
        %1453 = vmax.xlane.f32.xlu0 %v1452
        %v1454 = vpop.xlane.xlu0 %1453
        %v1455 = vsub.f32 %v1423, %v1433
        %v1456 = vsub.f32 %v1424, %v1436
        %v1457 = vsub.f32 %v1425, %v1439
        %v1458 = vsub.f32 %v1426, %v1442
        %v1459 = vsub.f32 %v1427, %v1445
        %v1460 = vsub.f32 %v1428, %v1448
        %v1461 = vsub.f32 %v1429, %v1451
        %v1462 = vsub.f32 %v1430, %v1454
        %v1463 = vmul.f32 %v1455, 1.442695
        %v1464 = vpow.pop %v1463
        %v1465 = vmul.f32 %v1456, 1.442695
        %v1466 = vpow.pop %v1465
        %v1467 = vmul.f32 %v1457, 1.442695
        %v1468 = vpow.pop %v1467
        %v1469 = vmul.f32 %v1458, 1.442695
        %v1470 = vpow.pop %v1469
        %v1471 = vmul.f32 %v1459, 1.442695
        %v1472 = vpow.pop %v1471
        %v1473 = vmul.f32 %v1460, 1.442695
        %v1474 = vpow.pop %v1473
        %v1475 = vmul.f32 %v1461, 1.442695
        %v1476 = vpow.pop %v1475
        %v1477 = vmul.f32 %v1462, 1.442695
        %v1478 = vpow.pop %v1477
        %v1479 = vsel %vm1028, %v1464, 0.0
        %1480 = vadd.xlane.f32.xlu0 %v1479
        %v1481 = vpop.xlane.xlu0 %1480
        %v1482 = vsel %vm1028, %v1466, 0.0
        %1483 = vadd.xlane.f32.xlu0 %v1482
        %v1484 = vpop.xlane.xlu0 %1483
        %v1485 = vsel %vm1028, %v1468, 0.0
        %1486 = vadd.xlane.f32.xlu0 %v1485
        %v1487 = vpop.xlane.xlu0 %1486
        %v1488 = vsel %vm1028, %v1470, 0.0
        %1489 = vadd.xlane.f32.xlu0 %v1488
        %v1490 = vpop.xlane.xlu0 %1489
        %v1491 = vsel %vm1028, %v1472, 0.0
        %1492 = vadd.xlane.f32.xlu0 %v1491
        %v1493 = vpop.xlane.xlu0 %1492
        %v1494 = vsel %vm1028, %v1474, 0.0
        %1495 = vadd.xlane.f32.xlu0 %v1494
        %v1496 = vpop.xlane.xlu0 %1495
        %v1497 = vsel %vm1028, %v1476, 0.0
        %1498 = vadd.xlane.f32.xlu0 %v1497
        %v1499 = vpop.xlane.xlu0 %1498
        %v1500 = vsel %vm1028, %v1478, 0.0
        %1501 = vadd.xlane.f32.xlu0 %v1500
        %v1502 = vpop.xlane.xlu0 %1501
        %v1503 = vrcp.pop %v1481
        %v1504 = vrcp.pop %v1484
        %v1505 = vrcp.pop %v1487
        %v1506 = vrcp.pop %v1490
        %v1507 = vrcp.pop %v1493
        %v1508 = vrcp.pop %v1496
        %v1509 = vrcp.pop %v1499
        %v1510 = vrcp.pop %v1502
        %v1511 = vmul.f32 %v1464, %v1503
        %v1512 = vmul.f32 %v1466, %v1504
        %v1513 = vmul.f32 %v1468, %v1505
        %v1514 = vmul.f32 %v1470, %v1506
        %v1515 = vmul.f32 %v1472, %v1507
        %v1516 = vmul.f32 %v1474, %v1508
        %v1517 = vmul.f32 %v1476, %v1509
        %v1518 = vmul.f32 %v1478, %v1510
        %1527 = vrot.lane.b32.xlu0 %v820, 96
        %v1528 = vpop.permute.xlu0 %1527
        %1529 = vrot.lane.b32.xlu0 %v825, 96
        %v1530 = vpop.permute.xlu0 %1529
        %1531 = vrot.lane.b32.xlu0 %v830, 96
        %v1532 = vpop.permute.xlu0 %1531
        %1533 = vrot.lane.b32.xlu0 %v835, 96
        %v1534 = vpop.permute.xlu0 %1533
        %1535 = vrot.lane.b32.xlu0 %v840, 96
        %v1536 = vpop.permute.xlu0 %1535
        %1537 = vrot.lane.b32.xlu0 %v845, 96
        %v1538 = vpop.permute.xlu0 %1537
        %1539 = vrot.lane.b32.xlu0 %v850, 96
        %v1540 = vpop.permute.xlu0 %1539
        %1541 = vrot.lane.b32.xlu0 %v855, 96
        %v1542 = vpop.permute.xlu0 %1541
        %v1552 = vsel %vm1028, %v1511, 0
        %v1555 = vsel %vm1028, %v1512, 0
        %v1558 = vsel %vm1028, %v1513, 0
        %v1561 = vsel %vm1028, %v1514, 0
        %v1564 = vsel %vm1028, %v1515, 0
        %v1567 = vsel %vm1028, %v1516, 0
        %v1570 = vsel %vm1028, %v1517, 0
        %v1573 = vsel %vm1028, %v1518, 0
        %1575 = vmatprep.subr.mxu0 0.0
        %1576 = vmatpush1.msra.mxu0 %v1528
        %1577 = vmatprep.subr.mxu0 0.0
        %1578 = vmatpush1.msra.mxu0 %v1530
        %1579 = vmatprep.subr.mxu0 0.0
        %1580 = vmatpush1.msra.mxu0 %v1532
        %1581 = vmatprep.subr.mxu0 0.0
        %1582 = vmatpush1.msra.mxu0 %v1534
        %1583 = vmatprep.subr.mxu0 0.0
        %1584 = vmatpush1.msra.mxu0 %v1536
        %1585 = vmatprep.subr.mxu0 0.0
        %1586 = vmatpush1.msra.mxu0 %v1538
        %1587 = vmatprep.subr.mxu0 0.0
        %1588 = vmatpush1.msra.mxu0 %v1540
        %1589 = vmatprep.subr.mxu0 0.0
        %1590 = vmatpush1.msra.mxu0 %v1542
        %1591 = vmatprep.subr.mxu0 0.0
        %1592 = vmatpush1.msra.mxu0 0.0
        %1593 = vmatprep.subr.mxu0 0.0
        %1594 = vmatpush1.msra.mxu0 0.0
        %1595 = vmatprep.subr.mxu0 0.0
        %1596 = vmatpush1.msra.mxu0 0.0
        %1597 = vmatprep.subr.mxu0 0.0
        %1598 = vmatpush1.msra.mxu0 0.0
        %1599 = vmatprep.subr.mxu0 0.0
        %1600 = vmatpush1.msra.mxu0 0.0
        %1601 = vmatprep.subr.mxu0 0.0
        %1602 = vmatpush1.msra.mxu0 0.0
        %1603 = vmatprep.subr.mxu0 0.0
        %1604 = vmatpush1.msra.mxu0 0.0
        %1605 = vmatprep.subr.mxu0 0.0
        %1606 = vmatpush1.msra.mxu0 0.0
        %1607 = vmatprep.subr.mxu0 0.0
        %1608 = vmatpush1.msra.mxu0 0.0
        %1609 = vmatprep.subr.mxu0 0.0
        %1610 = vmatpush1.msra.mxu0 0.0
        %1611 = vmatprep.subr.mxu0 0.0
        %1612 = vmatpush1.msra.mxu0 0.0
        %1613 = vmatprep.subr.mxu0 0.0
        %1614 = vmatpush1.msra.mxu0 0.0
        %1615 = vmatprep.subr.mxu0 0.0
        %1616 = vmatpush1.msra.mxu0 0.0
        %1617 = vmatprep.subr.mxu0 0.0
        %1618 = vmatpush1.msra.mxu0 0.0
        %1619 = vmatprep.subr.mxu0 0.0
        %1620 = vmatpush1.msra.mxu0 0.0
        %1621 = vmatprep.subr.mxu0 0.0
        %1622 = vmatpush1.msra.mxu0 0.0
        %1623 = vmatprep.subr.mxu0 0.0
        %1624 = vmatpush1.msra.mxu0 0.0
        %1625 = vmatprep.subr.mxu0 0.0
        %1626 = vmatpush1.msra.mxu0 0.0
        %1627 = vmatprep.subr.mxu0 0.0
        %1628 = vmatpush1.msra.mxu0 0.0
        %1629 = vmatprep.subr.mxu0 0.0
        %1630 = vmatpush1.msra.mxu0 0.0
        %1631 = vmatprep.subr.mxu0 0.0
        %1632 = vmatpush1.msra.mxu0 0.0
        %1633 = vmatprep.subr.mxu0 0.0
        %1634 = vmatpush1.msra.mxu0 0.0
        %1635 = vmatprep.subr.mxu0 0.0
        %1636 = vmatpush1.msra.mxu0 0.0
        %1637 = vmatprep.subr.mxu0 0.0
        %1638 = vmatpush1.msra.mxu0 0.0
        %1639 = vmatprep.mubr.f32.mxu0 0.0
        %1640 = vmatmul.mubr.f32.gmra.mrb[0].mxu0 %v1552
        %v1641 = vpop.f32.mrb[0].mxu0
        %v1642 = vadd.f32 0.0, %v1641
        %v1643 = vpop.f32.mrb[0].mxu0
        %1644 = vmatprep.mubr.f32.mxu0 0.0
        %1645 = vmatmul.mubr.f32.gmra.mrb[0].mxu0 %v1555
        %v1646 = vpop.f32.mrb[0].mxu0
        %v1647 = vadd.f32 0.0, %v1646
        %v1648 = vpop.f32.mrb[0].mxu0
        %1649 = vmatprep.mubr.f32.mxu0 0.0
        %1650 = vmatmul.mubr.f32.gmra.mrb[0].mxu0 %v1558
        %v1651 = vpop.f32.mrb[0].mxu0
        %v1652 = vadd.f32 0.0, %v1651
        %v1653 = vpop.f32.mrb[0].mxu0
        %1654 = vmatprep.mubr.f32.mxu0 0.0
        %1655 = vmatmul.mubr.f32.gmra.mrb[0].mxu0 %v1561
        %v1656 = vpop.f32.mrb[0].mxu0
        %v1657 = vadd.f32 0.0, %v1656
        %v1658 = vpop.f32.mrb[0].mxu0
        %1659 = vmatprep.mubr.f32.mxu0 0.0
        %1660 = vmatmul.mubr.f32.gmra.mrb[0].mxu0 %v1564
        %v1661 = vpop.f32.mrb[0].mxu0
        %v1662 = vadd.f32 0.0, %v1661
        %v1663 = vpop.f32.mrb[0].mxu0
        %1664 = vmatprep.mubr.f32.mxu0 0.0
        %1665 = vmatmul.mubr.f32.gmra.mrb[0].mxu0 %v1567
        %v1666 = vpop.f32.mrb[0].mxu0
        %v1667 = vadd.f32 0.0, %v1666
        %v1668 = vpop.f32.mrb[0].mxu0
        %1669 = vmatprep.mubr.f32.mxu0 0.0
        %1670 = vmatmul.mubr.f32.gmra.mrb[0].mxu0 %v1570
        %v1671 = vpop.f32.mrb[0].mxu0
        %v1672 = vadd.f32 0.0, %v1671
        %v1673 = vpop.f32.mrb[0].mxu0
        %1674 = vmatprep.mubr.f32.mxu0 0.0
        %1675 = vmatmul.mubr.f32.gmra.mrb[0].mxu0 %v1573
        %v1676 = vpop.f32.mrb[0].mxu0
        %v1677 = vadd.f32 0.0, %v1676
        %v1678 = vpop.f32.mrb[0].mxu0
        %1679 = vdwg.mxu0
        %1680 = vrot.lane.b32.xlu0 %v707, 64
        %v1681 = vpop.permute.xlu0 %1680
        %1682 = vrot.lane.b32.xlu0 %v713, 64
        %v1683 = vpop.permute.xlu0 %1682
        %1684 = vrot.lane.b32.xlu0 %v719, 64
        %v1685 = vpop.permute.xlu0 %1684
        %1686 = vrot.lane.b32.xlu0 %v725, 64
        %v1687 = vpop.permute.xlu0 %1686
        %1688 = vrot.lane.b32.xlu0 %v731, 64
        %v1689 = vpop.permute.xlu0 %1688
        %1690 = vrot.lane.b32.xlu0 %v737, 64
        %v1691 = vpop.permute.xlu0 %1690
        %1692 = vrot.lane.b32.xlu0 %v743, 64
        %v1693 = vpop.permute.xlu0 %1692
        %1694 = vrot.lane.b32.xlu0 %v749, 64
        %v1695 = vpop.permute.xlu0 %1694
        %1696 = vrot.lane.b32.xlu0 %v709, 64
        %v1697 = vpop.permute.xlu0 %1696
        %1698 = vrot.lane.b32.xlu0 %v715, 64
        %v1699 = vpop.permute.xlu0 %1698
        %1700 = vrot.lane.b32.xlu0 %v721, 64
        %v1701 = vpop.permute.xlu0 %1700
        %1702 = vrot.lane.b32.xlu0 %v727, 64
        %v1703 = vpop.permute.xlu0 %1702
        %1704 = vrot.lane.b32.xlu0 %v733, 64
        %v1705 = vpop.permute.xlu0 %1704
        %1706 = vrot.lane.b32.xlu0 %v739, 64
        %v1707 = vpop.permute.xlu0 %1706
        %1708 = vrot.lane.b32.xlu0 %v745, 64
        %v1709 = vpop.permute.xlu0 %1708
        %1710 = vrot.lane.b32.xlu0 %v751, 64
        %v1711 = vpop.permute.xlu0 %1710
        %v1712 = vsel %vm858, %v1681, 0
        %v1714 = vsel %vm858, %v1683, 0
        %v1716 = vsel %vm858, %v1685, 0
        %v1718 = vsel %vm858, %v1687, 0
        %v1720 = vsel %vm858, %v1689, 0
        %v1722 = vsel %vm858, %v1691, 0
        %v1724 = vsel %vm858, %v1693, 0
        %v1726 = vsel %vm858, %v1695, 0
        %v1728 = vsel %vm858, %v1697, 0
        %v1730 = vsel %vm858, %v1699, 0
        %v1732 = vsel %vm858, %v1701, 0
        %v1734 = vsel %vm858, %v1703, 0
        %v1736 = vsel %vm858, %v1705, 0
        %v1738 = vsel %vm858, %v1707, 0
        %v1740 = vsel %vm858, %v1709, 0
        %v1742 = vsel %vm858, %v1711, 0
        %1744 = vmatprep.subr.mxu0 0.0
        %1745 = vmatpush1.xpose.msra.mxu0 %v1728
        %1746 = vmatprep.subr.mxu0 0.0
        %1747 = vmatpush1.xpose.msra.mxu0 %v1730
        %1748 = vmatprep.subr.mxu0 0.0
        %1749 = vmatpush1.xpose.msra.mxu0 %v1732
        %1750 = vmatprep.subr.mxu0 0.0
        %1751 = vmatpush1.xpose.msra.mxu0 %v1734
        %1752 = vmatprep.subr.mxu0 0.0
        %1753 = vmatpush1.xpose.msra.mxu0 %v1736
        %1754 = vmatprep.subr.mxu0 0.0
        %1755 = vmatpush1.xpose.msra.mxu0 %v1738
        %1756 = vmatprep.subr.mxu0 0.0
        %1757 = vmatpush1.xpose.msra.mxu0 %v1740
        %1758 = vmatprep.subr.mxu0 0.0
        %1759 = vmatpush1.xpose.msra.mxu0 %v1742
        %1760 = vmatprep.subr.mxu0 0.0
        %1761 = vmatpush1.xpose.msra.mxu0 0.0
        %1762 = vmatprep.subr.mxu0 0.0
        %1763 = vmatpush1.xpose.msra.mxu0 0.0
        %1764 = vmatprep.subr.mxu0 0.0
        %1765 = vmatpush1.xpose.msra.mxu0 0.0
        %1766 = vmatprep.subr.mxu0 0.0
        %1767 = vmatpush1.xpose.msra.mxu0 0.0
        %1768 = vmatprep.subr.mxu0 0.0
        %1769 = vmatpush1.xpose.msra.mxu0 0.0
        %1770 = vmatprep.subr.mxu0 0.0
        %1771 = vmatpush1.xpose.msra.mxu0 0.0
        %1772 = vmatprep.subr.mxu0 0.0
        %1773 = vmatpush1.xpose.msra.mxu0 0.0
        %1774 = vmatprep.subr.mxu0 0.0
        %1775 = vmatpush1.xpose.msra.mxu0 0.0
        %1776 = vmatprep.subr.mxu0 0.0
        %1777 = vmatpush1.xpose.msra.mxu0 0.0
        %1778 = vmatprep.subr.mxu0 0.0
        %1779 = vmatpush1.xpose.msra.mxu0 0.0
        %1780 = vmatprep.subr.mxu0 0.0
        %1781 = vmatpush1.xpose.msra.mxu0 0.0
        %1782 = vmatprep.subr.mxu0 0.0
        %1783 = vmatpush1.xpose.msra.mxu0 0.0
        %1784 = vmatprep.subr.mxu0 0.0
        %1785 = vmatpush1.xpose.msra.mxu0 0.0
        %1786 = vmatprep.subr.mxu0 0.0
        %1787 = vmatpush1.xpose.msra.mxu0 0.0
        %1788 = vmatprep.subr.mxu0 0.0
        %1789 = vmatpush1.xpose.msra.mxu0 0.0
        %1790 = vmatprep.subr.mxu0 0.0
        %1791 = vmatpush1.xpose.msra.mxu0 0.0
        %1792 = vmatprep.subr.mxu0 0.0
        %1793 = vmatpush1.xpose.msra.mxu0 0.0
        %1794 = vmatprep.subr.mxu0 0.0
        %1795 = vmatpush1.xpose.msra.mxu0 0.0
        %1796 = vmatprep.subr.mxu0 0.0
        %1797 = vmatpush1.xpose.msra.mxu0 0.0
        %1798 = vmatprep.subr.mxu0 0.0
        %1799 = vmatpush1.xpose.msra.mxu0 0.0
        %1800 = vmatprep.subr.mxu0 0.0
        %1801 = vmatpush1.xpose.msra.mxu0 0.0
        %1802 = vmatprep.subr.mxu0 0.0
        %1803 = vmatpush1.xpose.msra.mxu0 0.0
        %1804 = vmatprep.subr.mxu0 0.0
        %1805 = vmatpush1.xpose.msra.mxu0 0.0
        %1806 = vmatprep.subr.mxu0 0.0
        %1807 = vmatpush1.xpose.msra.mxu0 0.0
        %1808 = vmatprep.mubr.f32.mxu0 0.0
        %1809 = vmatmul.mubr.f32.gmra.mrb[0].mxu0 %v1712
        %v1810 = vpop.f32.mrb[0].mxu0
        %v1811 = vadd.f32 0.0, %v1810
        %v1812 = vpop.f32.mrb[0].mxu0
        %1813 = vmatprep.mubr.f32.mxu0 0.0
        %1814 = vmatmul.mubr.f32.gmra.mrb[0].mxu0 %v1714
        %v1815 = vpop.f32.mrb[0].mxu0
        %v1816 = vadd.f32 0.0, %v1815
        %v1817 = vpop.f32.mrb[0].mxu0
        %1818 = vmatprep.mubr.f32.mxu0 0.0
        %1819 = vmatmul.mubr.f32.gmra.mrb[0].mxu0 %v1716
        %v1820 = vpop.f32.mrb[0].mxu0
        %v1821 = vadd.f32 0.0, %v1820
        %v1822 = vpop.f32.mrb[0].mxu0
        %1823 = vmatprep.mubr.f32.mxu0 0.0
        %1824 = vmatmul.mubr.f32.gmra.mrb[0].mxu0 %v1718
        %v1825 = vpop.f32.mrb[0].mxu0
        %v1826 = vadd.f32 0.0, %v1825
        %v1827 = vpop.f32.mrb[0].mxu0
        %1828 = vmatprep.mubr.f32.mxu0 0.0
        %1829 = vmatmul.mubr.f32.gmra.mrb[0].mxu0 %v1720
        %v1830 = vpop.f32.mrb[0].mxu0
        %v1831 = vadd.f32 0.0, %v1830
        %v1832 = vpop.f32.mrb[0].mxu0
        %1833 = vmatprep.mubr.f32.mxu0 0.0
        %1834 = vmatmul.mubr.f32.gmra.mrb[0].mxu0 %v1722
        %v1835 = vpop.f32.mrb[0].mxu0
        %v1836 = vadd.f32 0.0, %v1835
        %v1837 = vpop.f32.mrb[0].mxu0
        %1838 = vmatprep.mubr.f32.mxu0 0.0
        %1839 = vmatmul.mubr.f32.gmra.mrb[0].mxu0 %v1724
        %v1840 = vpop.f32.mrb[0].mxu0
        %v1841 = vadd.f32 0.0, %v1840
        %v1842 = vpop.f32.mrb[0].mxu0
        %1843 = vmatprep.mubr.f32.mxu0 0.0
        %1844 = vmatmul.mubr.f32.gmra.mrb[0].mxu0 %v1726
        %v1845 = vpop.f32.mrb[0].mxu0
        %v1846 = vadd.f32 0.0, %v1845
        %v1847 = vpop.f32.mrb[0].mxu0
        %1848 = vdwg.mxu0
        %v1849 = vmul.f32 %v1811, 0.17677669
        %v1850 = vmul.f32 %v1816, 0.17677669
        %v1851 = vmul.f32 %v1821, 0.17677669
        %v1852 = vmul.f32 %v1826, 0.17677669
        %v1853 = vmul.f32 %v1831, 0.17677669
        %v1854 = vmul.f32 %v1836, 0.17677669
        %v1855 = vmul.f32 %v1841, 0.17677669
        %v1856 = vmul.f32 %v1846, 0.17677669
        %v1857 = vadd.f32 %v1849, %v567
        %v1858 = vadd.f32 %v1850, %v568
        %v1859 = vadd.f32 %v1851, %v569
        %v1860 = vadd.f32 %v1852, %v570
        %v1861 = vadd.f32 %v1853, %v571
        %v1862 = vadd.f32 %v1854, %v572
        %v1863 = vadd.f32 %v1855, %v573
        %v1864 = vadd.f32 %v1856, %v574
        %v1865 = vsel %vm1028, %v1857, -inf
        %1866 = vmax.xlane.f32.xlu0 %v1865
        %v1867 = vpop.xlane.xlu0 %1866
        %v1868 = vsel %vm1028, %v1858, -inf
        %1869 = vmax.xlane.f32.xlu0 %v1868
        %v1870 = vpop.xlane.xlu0 %1869
        %v1871 = vsel %vm1028, %v1859, -inf
        %1872 = vmax.xlane.f32.xlu0 %v1871
        %v1873 = vpop.xlane.xlu0 %1872
        %v1874 = vsel %vm1028, %v1860, -inf
        %1875 = vmax.xlane.f32.xlu0 %v1874
        %v1876 = vpop.xlane.xlu0 %1875
        %v1877 = vsel %vm1028, %v1861, -inf
        %1878 = vmax.xlane.f32.xlu0 %v1877
        %v1879 = vpop.xlane.xlu0 %1878
        %v1880 = vsel %vm1028, %v1862, -inf
        %1881 = vmax.xlane.f32.xlu0 %v1880
        %v1882 = vpop.xlane.xlu0 %1881
        %v1883 = vsel %vm1028, %v1863, -inf
        %1884 = vmax.xlane.f32.xlu0 %v1883
        %v1885 = vpop.xlane.xlu0 %1884
        %v1886 = vsel %vm1028, %v1864, -inf
        %1887 = vmax.xlane.f32.xlu0 %v1886
        %v1888 = vpop.xlane.xlu0 %1887
        %v1889 = vsub.f32 %v1857, %v1867
        %v1890 = vsub.f32 %v1858, %v1870
        %v1891 = vsub.f32 %v1859, %v1873
        %v1892 = vsub.f32 %v1860, %v1876
        %v1893 = vsub.f32 %v1861, %v1879
        %v1894 = vsub.f32 %v1862, %v1882
        %v1895 = vsub.f32 %v1863, %v1885
        %v1896 = vsub.f32 %v1864, %v1888
        %v1897 = vmul.f32 %v1889, 1.442695
        %v1898 = vpow.pop %v1897
        %v1899 = vmul.f32 %v1890, 1.442695
        %v1900 = vpow.pop %v1899
        %v1901 = vmul.f32 %v1891, 1.442695
        %v1902 = vpow.pop %v1901
        %v1903 = vmul.f32 %v1892, 1.442695
        %v1904 = vpow.pop %v1903
        %v1905 = vmul.f32 %v1893, 1.442695
        %v1906 = vpow.pop %v1905
        %v1907 = vmul.f32 %v1894, 1.442695
        %v1908 = vpow.pop %v1907
        %v1909 = vmul.f32 %v1895, 1.442695
        %v1910 = vpow.pop %v1909
        %v1911 = vmul.f32 %v1896, 1.442695
        %v1912 = vpow.pop %v1911
        %v1913 = vsel %vm1028, %v1898, 0.0
        %1914 = vadd.xlane.f32.xlu0 %v1913
        %v1915 = vpop.xlane.xlu0 %1914
        %v1916 = vsel %vm1028, %v1900, 0.0
        %1917 = vadd.xlane.f32.xlu0 %v1916
        %v1918 = vpop.xlane.xlu0 %1917
        %v1919 = vsel %vm1028, %v1902, 0.0
        %1920 = vadd.xlane.f32.xlu0 %v1919
        %v1921 = vpop.xlane.xlu0 %1920
        %v1922 = vsel %vm1028, %v1904, 0.0
        %1923 = vadd.xlane.f32.xlu0 %v1922
        %v1924 = vpop.xlane.xlu0 %1923
        %v1925 = vsel %vm1028, %v1906, 0.0
        %1926 = vadd.xlane.f32.xlu0 %v1925
        %v1927 = vpop.xlane.xlu0 %1926
        %v1928 = vsel %vm1028, %v1908, 0.0
        %1929 = vadd.xlane.f32.xlu0 %v1928
        %v1930 = vpop.xlane.xlu0 %1929
        %v1931 = vsel %vm1028, %v1910, 0.0
        %1932 = vadd.xlane.f32.xlu0 %v1931
        %v1933 = vpop.xlane.xlu0 %1932
        %v1934 = vsel %vm1028, %v1912, 0.0
        %1935 = vadd.xlane.f32.xlu0 %v1934
        %v1936 = vpop.xlane.xlu0 %1935
        %v1937 = vrcp.pop %v1915
        %v1938 = vrcp.pop %v1918
        %v1939 = vrcp.pop %v1921
        %v1940 = vrcp.pop %v1924
        %v1941 = vrcp.pop %v1927
        %v1942 = vrcp.pop %v1930
        %v1943 = vrcp.pop %v1933
        %v1944 = vrcp.pop %v1936
        %v1945 = vmul.f32 %v1898, %v1937
        %v1946 = vmul.f32 %v1900, %v1938
        %v1947 = vmul.f32 %v1902, %v1939
        %v1948 = vmul.f32 %v1904, %v1940
        %v1949 = vmul.f32 %v1906, %v1941
        %v1950 = vmul.f32 %v1908, %v1942
        %v1951 = vmul.f32 %v1910, %v1943
        %v1952 = vmul.f32 %v1912, %v1944
        %1953 = vrot.lane.b32.xlu0 %v820, 64
        %v1954 = vpop.permute.xlu0 %1953
        %1955 = vrot.lane.b32.xlu0 %v825, 64
        %v1956 = vpop.permute.xlu0 %1955
        %1957 = vrot.lane.b32.xlu0 %v830, 64
        %v1958 = vpop.permute.xlu0 %1957
        %1959 = vrot.lane.b32.xlu0 %v835, 64
        %v1960 = vpop.permute.xlu0 %1959
        %1961 = vrot.lane.b32.xlu0 %v840, 64
        %v1962 = vpop.permute.xlu0 %1961
        %1963 = vrot.lane.b32.xlu0 %v845, 64
        %v1964 = vpop.permute.xlu0 %1963
        %1965 = vrot.lane.b32.xlu0 %v850, 64
        %v1966 = vpop.permute.xlu0 %1965
        %1967 = vrot.lane.b32.xlu0 %v855, 64
        %v1968 = vpop.permute.xlu0 %1967
        %v1978 = vsel %vm1028, %v1945, 0
        %v1981 = vsel %vm1028, %v1946, 0
        %v1984 = vsel %vm1028, %v1947, 0
        %v1987 = vsel %vm1028, %v1948, 0
        %v1990 = vsel %vm1028, %v1949, 0
        %v1993 = vsel %vm1028, %v1950, 0
        %v1996 = vsel %vm1028, %v1951, 0
        %v1999 = vsel %vm1028, %v1952, 0
        %2001 = vmatprep.subr.mxu0 0.0
        %2002 = vmatpush1.msra.mxu0 %v1954
        %2003 = vmatprep.subr.mxu0 0.0
        %2004 = vmatpush1.msra.mxu0 %v1956
        %2005 = vmatprep.subr.mxu0 0.0
        %2006 = vmatpush1.msra.mxu0 %v1958
        %2007 = vmatprep.subr.mxu0 0.0
        %2008 = vmatpush1.msra.mxu0 %v1960
        %2009 = vmatprep.subr.mxu0 0.0
        %2010 = vmatpush1.msra.mxu0 %v1962
        %2011 = vmatprep.subr.mxu0 0.0
        %2012 = vmatpush1.msra.mxu0 %v1964
        %2013 = vmatprep.subr.mxu0 0.0
        %2014 = vmatpush1.msra.mxu0 %v1966
        %2015 = vmatprep.subr.mxu0 0.0
        %2016 = vmatpush1.msra.mxu0 %v1968
        %2017 = vmatprep.subr.mxu0 0.0
        %2018 = vmatpush1.msra.mxu0 0.0
        %2019 = vmatprep.subr.mxu0 0.0
        %2020 = vmatpush1.msra.mxu0 0.0
        %2021 = vmatprep.subr.mxu0 0.0
        %2022 = vmatpush1.msra.mxu0 0.0
        %2023 = vmatprep.subr.mxu0 0.0
        %2024 = vmatpush1.msra.mxu0 0.0
        %2025 = vmatprep.subr.mxu0 0.0
        %2026 = vmatpush1.msra.mxu0 0.0
        %2027 = vmatprep.subr.mxu0 0.0
        %2028 = vmatpush1.msra.mxu0 0.0
        %2029 = vmatprep.subr.mxu0 0.0
        %2030 = vmatpush1.msra.mxu0 0.0
        %2031 = vmatprep.subr.mxu0 0.0
        %2032 = vmatpush1.msra.mxu0 0.0
        %2033 = vmatprep.subr.mxu0 0.0
        %2034 = vmatpush1.msra.mxu0 0.0
        %2035 = vmatprep.subr.mxu0 0.0
        %2036 = vmatpush1.msra.mxu0 0.0
        %2037 = vmatprep.subr.mxu0 0.0
        %2038 = vmatpush1.msra.mxu0 0.0
        %2039 = vmatprep.subr.mxu0 0.0
        %2040 = vmatpush1.msra.mxu0 0.0
        %2041 = vmatprep.subr.mxu0 0.0
        %2042 = vmatpush1.msra.mxu0 0.0
        %2043 = vmatprep.subr.mxu0 0.0
        %2044 = vmatpush1.msra.mxu0 0.0
        %2045 = vmatprep.subr.mxu0 0.0
        %2046 = vmatpush1.msra.mxu0 0.0
        %2047 = vmatprep.subr.mxu0 0.0
        %2048 = vmatpush1.msra.mxu0 0.0
        %2049 = vmatprep.subr.mxu0 0.0
        %2050 = vmatpush1.msra.mxu0 0.0
        %2051 = vmatprep.subr.mxu0 0.0
        %2052 = vmatpush1.msra.mxu0 0.0
        %2053 = vmatprep.subr.mxu0 0.0
        %2054 = vmatpush1.msra.mxu0 0.0
        %2055 = vmatprep.subr.mxu0 0.0
        %2056 = vmatpush1.msra.mxu0 0.0
        %2057 = vmatprep.subr.mxu0 0.0
        %2058 = vmatpush1.msra.mxu0 0.0
        %2059 = vmatprep.subr.mxu0 0.0
        %2060 = vmatpush1.msra.mxu0 0.0
        %2061 = vmatprep.subr.mxu0 0.0
        %2062 = vmatpush1.msra.mxu0 0.0
        %2063 = vmatprep.subr.mxu0 0.0
        %2064 = vmatpush1.msra.mxu0 0.0
        %2065 = vmatprep.mubr.f32.mxu0 0.0
        %2066 = vmatmul.mubr.f32.gmra.mrb[0].mxu0 %v1978
        %v2067 = vpop.f32.mrb[0].mxu0
        %v2068 = vadd.f32 0.0, %v2067
        %v2069 = vpop.f32.mrb[0].mxu0
        %2070 = vmatprep.mubr.f32.mxu0 0.0
        %2071 = vmatmul.mubr.f32.gmra.mrb[0].mxu0 %v1981
        %v2072 = vpop.f32.mrb[0].mxu0
        %v2073 = vadd.f32 0.0, %v2072
        %v2074 = vpop.f32.mrb[0].mxu0
        %2075 = vmatprep.mubr.f32.mxu0 0.0
        %2076 = vmatmul.mubr.f32.gmra.mrb[0].mxu0 %v1984
        %v2077 = vpop.f32.mrb[0].mxu0
        %v2078 = vadd.f32 0.0, %v2077
        %v2079 = vpop.f32.mrb[0].mxu0
        %2080 = vmatprep.mubr.f32.mxu0 0.0
        %2081 = vmatmul.mubr.f32.gmra.mrb[0].mxu0 %v1987
        %v2082 = vpop.f32.mrb[0].mxu0
        %v2083 = vadd.f32 0.0, %v2082
        %v2084 = vpop.f32.mrb[0].mxu0
        %2085 = vmatprep.mubr.f32.mxu0 0.0
        %2086 = vmatmul.mubr.f32.gmra.mrb[0].mxu0 %v1990
        %v2087 = vpop.f32.mrb[0].mxu0
        %v2088 = vadd.f32 0.0, %v2087
        %v2089 = vpop.f32.mrb[0].mxu0
        %2090 = vmatprep.mubr.f32.mxu0 0.0
        %2091 = vmatmul.mubr.f32.gmra.mrb[0].mxu0 %v1993
        %v2092 = vpop.f32.mrb[0].mxu0
        %v2093 = vadd.f32 0.0, %v2092
        %v2094 = vpop.f32.mrb[0].mxu0
        %2095 = vmatprep.mubr.f32.mxu0 0.0
        %2096 = vmatmul.mubr.f32.gmra.mrb[0].mxu0 %v1996
        %v2097 = vpop.f32.mrb[0].mxu0
        %v2098 = vadd.f32 0.0, %v2097
        %v2099 = vpop.f32.mrb[0].mxu0
        %2100 = vmatprep.mubr.f32.mxu0 0.0
        %2101 = vmatmul.mubr.f32.gmra.mrb[0].mxu0 %v1999
        %v2102 = vpop.f32.mrb[0].mxu0
        %v2103 = vadd.f32 0.0, %v2102
        %v2104 = vpop.f32.mrb[0].mxu0
        %2105 = vdwg.mxu0
        %2106 = vrot.lane.b32.xlu0 %v707, 32
        %v2107 = vpop.permute.xlu0 %2106
        %2108 = vrot.lane.b32.xlu0 %v713, 32
        %v2109 = vpop.permute.xlu0 %2108
        %2110 = vrot.lane.b32.xlu0 %v719, 32
        %v2111 = vpop.permute.xlu0 %2110
        %2112 = vrot.lane.b32.xlu0 %v725, 32
        %v2113 = vpop.permute.xlu0 %2112
        %2114 = vrot.lane.b32.xlu0 %v731, 32
        %v2115 = vpop.permute.xlu0 %2114
        %2116 = vrot.lane.b32.xlu0 %v737, 32
        %v2117 = vpop.permute.xlu0 %2116
        %2118 = vrot.lane.b32.xlu0 %v743, 32
        %v2119 = vpop.permute.xlu0 %2118
        %2120 = vrot.lane.b32.xlu0 %v749, 32
        %v2121 = vpop.permute.xlu0 %2120
        %2122 = vrot.lane.b32.xlu0 %v709, 32
        %v2123 = vpop.permute.xlu0 %2122
        %2124 = vrot.lane.b32.xlu0 %v715, 32
        %v2125 = vpop.permute.xlu0 %2124
        %2126 = vrot.lane.b32.xlu0 %v721, 32
        %v2127 = vpop.permute.xlu0 %2126
        %2128 = vrot.lane.b32.xlu0 %v727, 32
        %v2129 = vpop.permute.xlu0 %2128
        %2130 = vrot.lane.b32.xlu0 %v733, 32
        %v2131 = vpop.permute.xlu0 %2130
        %2132 = vrot.lane.b32.xlu0 %v739, 32
        %v2133 = vpop.permute.xlu0 %2132
        %2134 = vrot.lane.b32.xlu0 %v745, 32
        %v2135 = vpop.permute.xlu0 %2134
        %2136 = vrot.lane.b32.xlu0 %v751, 32
        %v2137 = vpop.permute.xlu0 %2136
        %v2138 = vsel %vm858, %v2107, 0
        %v2140 = vsel %vm858, %v2109, 0
        %v2142 = vsel %vm858, %v2111, 0
        %v2144 = vsel %vm858, %v2113, 0
        %v2146 = vsel %vm858, %v2115, 0
        %v2148 = vsel %vm858, %v2117, 0
        %v2150 = vsel %vm858, %v2119, 0
        %v2152 = vsel %vm858, %v2121, 0
        %v2154 = vsel %vm858, %v2123, 0
        %v2156 = vsel %vm858, %v2125, 0
        %v2158 = vsel %vm858, %v2127, 0
        %v2160 = vsel %vm858, %v2129, 0
        %v2162 = vsel %vm858, %v2131, 0
        %v2164 = vsel %vm858, %v2133, 0
        %v2166 = vsel %vm858, %v2135, 0
        %v2168 = vsel %vm858, %v2137, 0
        %2170 = vmatprep.subr.mxu0 0.0
        %2171 = vmatpush1.xpose.msra.mxu0 %v2154
        %2172 = vmatprep.subr.mxu0 0.0
        %2173 = vmatpush1.xpose.msra.mxu0 %v2156
        %2174 = vmatprep.subr.mxu0 0.0
        %2175 = vmatpush1.xpose.msra.mxu0 %v2158
        %2176 = vmatprep.subr.mxu0 0.0
        %2177 = vmatpush1.xpose.msra.mxu0 %v2160
        %2178 = vmatprep.subr.mxu0 0.0
        %2179 = vmatpush1.xpose.msra.mxu0 %v2162
        %2180 = vmatprep.subr.mxu0 0.0
        %2181 = vmatpush1.xpose.msra.mxu0 %v2164
        %2182 = vmatprep.subr.mxu0 0.0
        %2183 = vmatpush1.xpose.msra.mxu0 %v2166
        %2184 = vmatprep.subr.mxu0 0.0
        %2185 = vmatpush1.xpose.msra.mxu0 %v2168
        %2186 = vmatprep.subr.mxu0 0.0
        %2187 = vmatpush1.xpose.msra.mxu0 0.0
        %2188 = vmatprep.subr.mxu0 0.0
        %2189 = vmatpush1.xpose.msra.mxu0 0.0
        %2190 = vmatprep.subr.mxu0 0.0
        %2191 = vmatpush1.xpose.msra.mxu0 0.0
        %2192 = vmatprep.subr.mxu0 0.0
        %2193 = vmatpush1.xpose.msra.mxu0 0.0
        %2194 = vmatprep.subr.mxu0 0.0
        %2195 = vmatpush1.xpose.msra.mxu0 0.0
        %2196 = vmatprep.subr.mxu0 0.0
        %2197 = vmatpush1.xpose.msra.mxu0 0.0
        %2198 = vmatprep.subr.mxu0 0.0
        %2199 = vmatpush1.xpose.msra.mxu0 0.0
        %2200 = vmatprep.subr.mxu0 0.0
        %2201 = vmatpush1.xpose.msra.mxu0 0.0
        %2202 = vmatprep.subr.mxu0 0.0
        %2203 = vmatpush1.xpose.msra.mxu0 0.0
        %2204 = vmatprep.subr.mxu0 0.0
        %2205 = vmatpush1.xpose.msra.mxu0 0.0
        %2206 = vmatprep.subr.mxu0 0.0
        %2207 = vmatpush1.xpose.msra.mxu0 0.0
        %2208 = vmatprep.subr.mxu0 0.0
        %2209 = vmatpush1.xpose.msra.mxu0 0.0
        %2210 = vmatprep.subr.mxu0 0.0
        %2211 = vmatpush1.xpose.msra.mxu0 0.0
        %2212 = vmatprep.subr.mxu0 0.0
        %2213 = vmatpush1.xpose.msra.mxu0 0.0
        %2214 = vmatprep.subr.mxu0 0.0
        %2215 = vmatpush1.xpose.msra.mxu0 0.0
        %2216 = vmatprep.subr.mxu0 0.0
        %2217 = vmatpush1.xpose.msra.mxu0 0.0
        %2218 = vmatprep.subr.mxu0 0.0
        %2219 = vmatpush1.xpose.msra.mxu0 0.0
        %2220 = vmatprep.subr.mxu0 0.0
        %2221 = vmatpush1.xpose.msra.mxu0 0.0
        %2222 = vmatprep.subr.mxu0 0.0
        %2223 = vmatpush1.xpose.msra.mxu0 0.0
        %2224 = vmatprep.subr.mxu0 0.0
        %2225 = vmatpush1.xpose.msra.mxu0 0.0
        %2226 = vmatprep.subr.mxu0 0.0
        %2227 = vmatpush1.xpose.msra.mxu0 0.0
        %2228 = vmatprep.subr.mxu0 0.0
        %2229 = vmatpush1.xpose.msra.mxu0 0.0
        %2230 = vmatprep.subr.mxu0 0.0
        %2231 = vmatpush1.xpose.msra.mxu0 0.0
        %2232 = vmatprep.subr.mxu0 0.0
        %2233 = vmatpush1.xpose.msra.mxu0 0.0
        %2234 = vmatprep.mubr.f32.mxu0 0.0
        %2235 = vmatmul.mubr.f32.gmra.mrb[0].mxu0 %v2138
        %v2236 = vpop.f32.mrb[0].mxu0
        %v2237 = vadd.f32 0.0, %v2236
        %v2238 = vpop.f32.mrb[0].mxu0
        %2239 = vmatprep.mubr.f32.mxu0 0.0
        %2240 = vmatmul.mubr.f32.gmra.mrb[0].mxu0 %v2140
        %v2241 = vpop.f32.mrb[0].mxu0
        %v2242 = vadd.f32 0.0, %v2241
        %v2243 = vpop.f32.mrb[0].mxu0
        %2244 = vmatprep.mubr.f32.mxu0 0.0
        %2245 = vmatmul.mubr.f32.gmra.mrb[0].mxu0 %v2142
        %v2246 = vpop.f32.mrb[0].mxu0
        %v2247 = vadd.f32 0.0, %v2246
        %v2248 = vpop.f32.mrb[0].mxu0
        %2249 = vmatprep.mubr.f32.mxu0 0.0
        %2250 = vmatmul.mubr.f32.gmra.mrb[0].mxu0 %v2144
        %v2251 = vpop.f32.mrb[0].mxu0
        %v2252 = vadd.f32 0.0, %v2251
        %v2253 = vpop.f32.mrb[0].mxu0
        %2254 = vmatprep.mubr.f32.mxu0 0.0
        %2255 = vmatmul.mubr.f32.gmra.mrb[0].mxu0 %v2146
        %v2256 = vpop.f32.mrb[0].mxu0
        %v2257 = vadd.f32 0.0, %v2256
        %v2258 = vpop.f32.mrb[0].mxu0
        %2259 = vmatprep.mubr.f32.mxu0 0.0
        %2260 = vmatmul.mubr.f32.gmra.mrb[0].mxu0 %v2148
        %v2261 = vpop.f32.mrb[0].mxu0
        %v2262 = vadd.f32 0.0, %v2261
        %v2263 = vpop.f32.mrb[0].mxu0
        %2264 = vmatprep.mubr.f32.mxu0 0.0
        %2265 = vmatmul.mubr.f32.gmra.mrb[0].mxu0 %v2150
        %v2266 = vpop.f32.mrb[0].mxu0
        %v2267 = vadd.f32 0.0, %v2266
        %v2268 = vpop.f32.mrb[0].mxu0
        %2269 = vmatprep.mubr.f32.mxu0 0.0
        %2270 = vmatmul.mubr.f32.gmra.mrb[0].mxu0 %v2152
        %v2271 = vpop.f32.mrb[0].mxu0
        %v2272 = vadd.f32 0.0, %v2271
        %v2273 = vpop.f32.mrb[0].mxu0
        %2274 = vdwg.mxu0
        %v2275 = vmul.f32 %v2237, 0.17677669
        %v2276 = vmul.f32 %v2242, 0.17677669
        %v2277 = vmul.f32 %v2247, 0.17677669
        %v2278 = vmul.f32 %v2252, 0.17677669
        %v2279 = vmul.f32 %v2257, 0.17677669
        %v2280 = vmul.f32 %v2262, 0.17677669
        %v2281 = vmul.f32 %v2267, 0.17677669
        %v2282 = vmul.f32 %v2272, 0.17677669
        %v2283 = vadd.f32 %v2275, %v567
        %v2284 = vadd.f32 %v2276, %v568
        %v2285 = vadd.f32 %v2277, %v569
        %v2286 = vadd.f32 %v2278, %v570
        %v2287 = vadd.f32 %v2279, %v571
        %v2288 = vadd.f32 %v2280, %v572
        %v2289 = vadd.f32 %v2281, %v573
        %v2290 = vadd.f32 %v2282, %v574
        %v2291 = vsel %vm1028, %v2283, -inf
        %2292 = vmax.xlane.f32.xlu0 %v2291
        %v2293 = vpop.xlane.xlu0 %2292
        %v2294 = vsel %vm1028, %v2284, -inf
        %2295 = vmax.xlane.f32.xlu0 %v2294
        %v2296 = vpop.xlane.xlu0 %2295
        %v2297 = vsel %vm1028, %v2285, -inf
        %2298 = vmax.xlane.f32.xlu0 %v2297
        %v2299 = vpop.xlane.xlu0 %2298
        %v2300 = vsel %vm1028, %v2286, -inf
        %2301 = vmax.xlane.f32.xlu0 %v2300
        %v2302 = vpop.xlane.xlu0 %2301
        %v2303 = vsel %vm1028, %v2287, -inf
        %2304 = vmax.xlane.f32.xlu0 %v2303
        %v2305 = vpop.xlane.xlu0 %2304
        %v2306 = vsel %vm1028, %v2288, -inf
        %2307 = vmax.xlane.f32.xlu0 %v2306
        %v2308 = vpop.xlane.xlu0 %2307
        %v2309 = vsel %vm1028, %v2289, -inf
        %2310 = vmax.xlane.f32.xlu0 %v2309
        %v2311 = vpop.xlane.xlu0 %2310
        %v2312 = vsel %vm1028, %v2290, -inf
        %2313 = vmax.xlane.f32.xlu0 %v2312
        %v2314 = vpop.xlane.xlu0 %2313
        %v2315 = vsub.f32 %v2283, %v2293
        %v2316 = vsub.f32 %v2284, %v2296
        %v2317 = vsub.f32 %v2285, %v2299
        %v2318 = vsub.f32 %v2286, %v2302
        %v2319 = vsub.f32 %v2287, %v2305
        %v2320 = vsub.f32 %v2288, %v2308
        %v2321 = vsub.f32 %v2289, %v2311
        %v2322 = vsub.f32 %v2290, %v2314
        %v2323 = vmul.f32 %v2315, 1.442695
        %v2324 = vpow.pop %v2323
        %v2325 = vmul.f32 %v2316, 1.442695
        %v2326 = vpow.pop %v2325
        %v2327 = vmul.f32 %v2317, 1.442695
        %v2328 = vpow.pop %v2327
        %v2329 = vmul.f32 %v2318, 1.442695
        %v2330 = vpow.pop %v2329
        %v2331 = vmul.f32 %v2319, 1.442695
        %v2332 = vpow.pop %v2331
        %v2333 = vmul.f32 %v2320, 1.442695
        %v2334 = vpow.pop %v2333
        %v2335 = vmul.f32 %v2321, 1.442695
        %v2336 = vpow.pop %v2335
        %v2337 = vmul.f32 %v2322, 1.442695
        %v2338 = vpow.pop %v2337
        %v2339 = vsel %vm1028, %v2324, 0.0
        %2340 = vadd.xlane.f32.xlu0 %v2339
        %v2341 = vpop.xlane.xlu0 %2340
        %v2342 = vsel %vm1028, %v2326, 0.0
        %2343 = vadd.xlane.f32.xlu0 %v2342
        %v2344 = vpop.xlane.xlu0 %2343
        %v2345 = vsel %vm1028, %v2328, 0.0
        %2346 = vadd.xlane.f32.xlu0 %v2345
        %v2347 = vpop.xlane.xlu0 %2346
        %v2348 = vsel %vm1028, %v2330, 0.0
        %2349 = vadd.xlane.f32.xlu0 %v2348
        %v2350 = vpop.xlane.xlu0 %2349
        %v2351 = vsel %vm1028, %v2332, 0.0
        %2352 = vadd.xlane.f32.xlu0 %v2351
        %v2353 = vpop.xlane.xlu0 %2352
        %v2354 = vsel %vm1028, %v2334, 0.0
        %2355 = vadd.xlane.f32.xlu0 %v2354
        %v2356 = vpop.xlane.xlu0 %2355
        %v2357 = vsel %vm1028, %v2336, 0.0
        %2358 = vadd.xlane.f32.xlu0 %v2357
        %v2359 = vpop.xlane.xlu0 %2358
        %v2360 = vsel %vm1028, %v2338, 0.0
        %2361 = vadd.xlane.f32.xlu0 %v2360
        %v2362 = vpop.xlane.xlu0 %2361
        %v2363 = vrcp.pop %v2341
        %v2364 = vrcp.pop %v2344
        %v2365 = vrcp.pop %v2347
        %v2366 = vrcp.pop %v2350
        %v2367 = vrcp.pop %v2353
        %v2368 = vrcp.pop %v2356
        %v2369 = vrcp.pop %v2359
        %v2370 = vrcp.pop %v2362
        %v2371 = vmul.f32 %v2324, %v2363
        %v2372 = vmul.f32 %v2326, %v2364
        %v2373 = vmul.f32 %v2328, %v2365
        %v2374 = vmul.f32 %v2330, %v2366
        %v2375 = vmul.f32 %v2332, %v2367
        %v2376 = vmul.f32 %v2334, %v2368
        %v2377 = vmul.f32 %v2336, %v2369
        %v2378 = vmul.f32 %v2338, %v2370
        %2379 = vrot.lane.b32.xlu0 %v820, 32
        %v2380 = vpop.permute.xlu0 %2379
        %2381 = vrot.lane.b32.xlu0 %v825, 32
        %v2382 = vpop.permute.xlu0 %2381
        %2383 = vrot.lane.b32.xlu0 %v830, 32
        %v2384 = vpop.permute.xlu0 %2383
        %2385 = vrot.lane.b32.xlu0 %v835, 32
        %v2386 = vpop.permute.xlu0 %2385
        %2387 = vrot.lane.b32.xlu0 %v840, 32
        %v2388 = vpop.permute.xlu0 %2387
        %2389 = vrot.lane.b32.xlu0 %v845, 32
        %v2390 = vpop.permute.xlu0 %2389
        %2391 = vrot.lane.b32.xlu0 %v850, 32
        %v2392 = vpop.permute.xlu0 %2391
        %2393 = vrot.lane.b32.xlu0 %v855, 32
        %v2394 = vpop.permute.xlu0 %2393
        %v2404 = vsel %vm1028, %v2371, 0
        %v2407 = vsel %vm1028, %v2372, 0
        %v2410 = vsel %vm1028, %v2373, 0
        %v2413 = vsel %vm1028, %v2374, 0
        %v2416 = vsel %vm1028, %v2375, 0
        %v2419 = vsel %vm1028, %v2376, 0
        %v2422 = vsel %vm1028, %v2377, 0
        %v2425 = vsel %vm1028, %v2378, 0
        %2427 = vmatprep.subr.mxu0 0.0
        %2428 = vmatpush1.msra.mxu0 %v2380
        %2429 = vmatprep.subr.mxu0 0.0
        %2430 = vmatpush1.msra.mxu0 %v2382
        %2431 = vmatprep.subr.mxu0 0.0
        %2432 = vmatpush1.msra.mxu0 %v2384
        %2433 = vmatprep.subr.mxu0 0.0
        %2434 = vmatpush1.msra.mxu0 %v2386
        %2435 = vmatprep.subr.mxu0 0.0
        %2436 = vmatpush1.msra.mxu0 %v2388
        %2437 = vmatprep.subr.mxu0 0.0
        %2438 = vmatpush1.msra.mxu0 %v2390
        %2439 = vmatprep.subr.mxu0 0.0
        %2440 = vmatpush1.msra.mxu0 %v2392
        %2441 = vmatprep.subr.mxu0 0.0
        %2442 = vmatpush1.msra.mxu0 %v2394
        %2443 = vmatprep.subr.mxu0 0.0
        %2444 = vmatpush1.msra.mxu0 0.0
        %2445 = vmatprep.subr.mxu0 0.0
        %2446 = vmatpush1.msra.mxu0 0.0
        %2447 = vmatprep.subr.mxu0 0.0
        %2448 = vmatpush1.msra.mxu0 0.0
        %2449 = vmatprep.subr.mxu0 0.0
        %2450 = vmatpush1.msra.mxu0 0.0
        %2451 = vmatprep.subr.mxu0 0.0
        %2452 = vmatpush1.msra.mxu0 0.0
        %2453 = vmatprep.subr.mxu0 0.0
        %2454 = vmatpush1.msra.mxu0 0.0
        %2455 = vmatprep.subr.mxu0 0.0
        %2456 = vmatpush1.msra.mxu0 0.0
        %2457 = vmatprep.subr.mxu0 0.0
        %2458 = vmatpush1.msra.mxu0 0.0
        %2459 = vmatprep.subr.mxu0 0.0
        %2460 = vmatpush1.msra.mxu0 0.0
        %2461 = vmatprep.subr.mxu0 0.0
        %2462 = vmatpush1.msra.mxu0 0.0
        %2463 = vmatprep.subr.mxu0 0.0
        %2464 = vmatpush1.msra.mxu0 0.0
        %2465 = vmatprep.subr.mxu0 0.0
        %2466 = vmatpush1.msra.mxu0 0.0
        %2467 = vmatprep.subr.mxu0 0.0
        %2468 = vmatpush1.msra.mxu0 0.0
        %2469 = vmatprep.subr.mxu0 0.0
        %2470 = vmatpush1.msra.mxu0 0.0
        %2471 = vmatprep.subr.mxu0 0.0
        %2472 = vmatpush1.msra.mxu0 0.0
        %2473 = vmatprep.subr.mxu0 0.0
        %2474 = vmatpush1.msra.mxu0 0.0
        %2475 = vmatprep.subr.mxu0 0.0
        %2476 = vmatpush1.msra.mxu0 0.0
        %2477 = vmatprep.subr.mxu0 0.0
        %2478 = vmatpush1.msra.mxu0 0.0
        %2479 = vmatprep.subr.mxu0 0.0
        %2480 = vmatpush1.msra.mxu0 0.0
        %2481 = vmatprep.subr.mxu0 0.0
        %2482 = vmatpush1.msra.mxu0 0.0
        %2483 = vmatprep.subr.mxu0 0.0
        %2484 = vmatpush1.msra.mxu0 0.0
        %2485 = vmatprep.subr.mxu0 0.0
        %2486 = vmatpush1.msra.mxu0 0.0
        %2487 = vmatprep.subr.mxu0 0.0
        %2488 = vmatpush1.msra.mxu0 0.0
        %2489 = vmatprep.subr.mxu0 0.0
        %2490 = vmatpush1.msra.mxu0 0.0
        %2491 = vmatprep.mubr.f32.mxu0 0.0
        %2492 = vmatmul.mubr.f32.gmra.mrb[0].mxu0 %v2404
        %v2493 = vpop.f32.mrb[0].mxu0
        %v2494 = vadd.f32 0.0, %v2493
        %v2495 = vpop.f32.mrb[0].mxu0
        %2496 = vmatprep.mubr.f32.mxu0 0.0
        %2497 = vmatmul.mubr.f32.gmra.mrb[0].mxu0 %v2407
        %v2498 = vpop.f32.mrb[0].mxu0
        %v2499 = vadd.f32 0.0, %v2498
        %v2500 = vpop.f32.mrb[0].mxu0
        %2501 = vmatprep.mubr.f32.mxu0 0.0
        %2502 = vmatmul.mubr.f32.gmra.mrb[0].mxu0 %v2410
        %v2503 = vpop.f32.mrb[0].mxu0
        %v2504 = vadd.f32 0.0, %v2503
        %v2505 = vpop.f32.mrb[0].mxu0
        %2506 = vmatprep.mubr.f32.mxu0 0.0
        %2507 = vmatmul.mubr.f32.gmra.mrb[0].mxu0 %v2413
        %v2508 = vpop.f32.mrb[0].mxu0
        %v2509 = vadd.f32 0.0, %v2508
        %v2510 = vpop.f32.mrb[0].mxu0
        %2511 = vmatprep.mubr.f32.mxu0 0.0
        %2512 = vmatmul.mubr.f32.gmra.mrb[0].mxu0 %v2416
        %v2513 = vpop.f32.mrb[0].mxu0
        %v2514 = vadd.f32 0.0, %v2513
        %v2515 = vpop.f32.mrb[0].mxu0
        %2516 = vmatprep.mubr.f32.mxu0 0.0
        %2517 = vmatmul.mubr.f32.gmra.mrb[0].mxu0 %v2419
        %v2518 = vpop.f32.mrb[0].mxu0
        %v2519 = vadd.f32 0.0, %v2518
        %v2520 = vpop.f32.mrb[0].mxu0
        %2521 = vmatprep.mubr.f32.mxu0 0.0
        %2522 = vmatmul.mubr.f32.gmra.mrb[0].mxu0 %v2422
        %v2523 = vpop.f32.mrb[0].mxu0
        %v2524 = vadd.f32 0.0, %v2523
        %v2525 = vpop.f32.mrb[0].mxu0
        %2526 = vmatprep.mubr.f32.mxu0 0.0
        %2527 = vmatmul.mubr.f32.gmra.mrb[0].mxu0 %v2425
        %v2528 = vpop.f32.mrb[0].mxu0
        %v2529 = vadd.f32 0.0, %v2528
        %v2530 = vpop.f32.mrb[0].mxu0
        %2531 = vdwg.mxu0
        %2540 = vrot.lane.b32.xlu0 %v1642, 32
        %v2541 = vpop.permute.xlu0 %2540
        %2542 = vrot.lane.b32.xlu0 %v1647, 32
        %v2543 = vpop.permute.xlu0 %2542
        %2544 = vrot.lane.b32.xlu0 %v1652, 32
        %v2545 = vpop.permute.xlu0 %2544
        %2546 = vrot.lane.b32.xlu0 %v1657, 32
        %v2547 = vpop.permute.xlu0 %2546
        %2548 = vrot.lane.b32.xlu0 %v1662, 32
        %v2549 = vpop.permute.xlu0 %2548
        %2550 = vrot.lane.b32.xlu0 %v1667, 32
        %v2551 = vpop.permute.xlu0 %2550
        %2552 = vrot.lane.b32.xlu0 %v1672, 32
        %v2553 = vpop.permute.xlu0 %2552
        %2554 = vrot.lane.b32.xlu0 %v1677, 32
        %v2555 = vpop.permute.xlu0 %2554
        %2572 = vrot.lane.b32.xlu0 %v2068, 64
        %v2573 = vpop.permute.xlu0 %2572
        %2574 = vrot.lane.b32.xlu0 %v2073, 64
        %v2575 = vpop.permute.xlu0 %2574
        %2576 = vrot.lane.b32.xlu0 %v2078, 64
        %v2577 = vpop.permute.xlu0 %2576
        %2578 = vrot.lane.b32.xlu0 %v2083, 64
        %v2579 = vpop.permute.xlu0 %2578
        %2580 = vrot.lane.b32.xlu0 %v2088, 64
        %v2581 = vpop.permute.xlu0 %2580
        %2582 = vrot.lane.b32.xlu0 %v2093, 64
        %v2583 = vpop.permute.xlu0 %2582
        %2584 = vrot.lane.b32.xlu0 %v2098, 64
        %v2585 = vpop.permute.xlu0 %2584
        %2586 = vrot.lane.b32.xlu0 %v2103, 64
        %v2587 = vpop.permute.xlu0 %2586
        %2604 = vrot.lane.b32.xlu0 %v2494, 96
        %v2605 = vpop.permute.xlu0 %2604
        %2606 = vrot.lane.b32.xlu0 %v2499, 96
        %v2607 = vpop.permute.xlu0 %2606
        %2608 = vrot.lane.b32.xlu0 %v2504, 96
        %v2609 = vpop.permute.xlu0 %2608
        %2610 = vrot.lane.b32.xlu0 %v2509, 96
        %v2611 = vpop.permute.xlu0 %2610
        %2612 = vrot.lane.b32.xlu0 %v2514, 96
        %v2613 = vpop.permute.xlu0 %2612
        %2614 = vrot.lane.b32.xlu0 %v2519, 96
        %v2615 = vpop.permute.xlu0 %2614
        %2616 = vrot.lane.b32.xlu0 %v2524, 96
        %v2617 = vpop.permute.xlu0 %2616
        %2618 = vrot.lane.b32.xlu0 %v2529, 96
        %v2619 = vpop.permute.xlu0 %2618
        %v2628 = vsel %vm858, %v1208, %v2541
        %v2629 = vsel %vm858, %v1213, %v2543
        %v2630 = vsel %vm858, %v1218, %v2545
        %v2631 = vsel %vm858, %v1223, %v2547
        %v2632 = vsel %vm858, %v1228, %v2549
        %v2633 = vsel %vm858, %v1233, %v2551
        %v2634 = vsel %vm858, %v1238, %v2553
        %v2635 = vsel %vm858, %v1243, %v2555
        %v2636 = vsel %vm1028, %v2628, %v2573
        %v2637 = vsel %vm1028, %v2629, %v2575
        %v2638 = vsel %vm1028, %v2630, %v2577
        %v2639 = vsel %vm1028, %v2631, %v2579
        %v2640 = vsel %vm1028, %v2632, %v2581
        %v2641 = vsel %vm1028, %v2633, %v2583
        %v2642 = vsel %vm1028, %v2634, %v2585
        %v2643 = vsel %vm1028, %v2635, %v2587
        %vm2644 = vcmask 785408
        %v2645 = vsel %vm2644, %v2636, %v2605
        %v2646 = vsel %vm2644, %v2637, %v2607
        %v2647 = vsel %vm2644, %v2638, %v2609
        %v2648 = vsel %vm2644, %v2639, %v2611
        %v2649 = vsel %vm2644, %v2640, %v2613
        %v2650 = vsel %vm2644, %v2641, %v2615
        %v2651 = vsel %vm2644, %v2642, %v2617
        %v2652 = vsel %vm2644, %v2643, %v2619
        %v2653 = vld [vmem:[#allocation8] sm:$0xff]
        %v2654 = vld [vmem:[#allocation8 + $0x8] sm:$0xff]
        %v2655 = vld [vmem:[#allocation8 + $0x10] sm:$0xff]
        %v2656 = vld [vmem:[#allocation8 + $0x18] sm:$0xff]
        %v2657 = vld [vmem:[#allocation8 + $0x20] sm:$0xff]
        %v2658 = vld [vmem:[#allocation8 + $0x28] sm:$0xff]
        %v2659 = vld [vmem:[#allocation8 + $0x30] sm:$0xff]
        %v2660 = vld [vmem:[#allocation8 + $0x38] sm:$0xff]
        %v2661 = vld [vmem:[#allocation8 + $0x40] sm:$0xff]
        %v2662 = vld [vmem:[#allocation8 + $0x48] sm:$0xff]
        %v2663 = vld [vmem:[#allocation8 + $0x50] sm:$0xff]
        %v2664 = vld [vmem:[#allocation8 + $0x58] sm:$0xff]
        %v2665 = vld [vmem:[#allocation8 + $0x60] sm:$0xff]
        %v2666 = vld [vmem:[#allocation8 + $0x68] sm:$0xff]
        %v2667 = vld [vmem:[#allocation8 + $0x70] sm:$0xff]
        %v2668 = vld [vmem:[#allocation8 + $0x78] sm:$0xff]
        %v2669 = vld [vmem:[%s5] sm:$0x1]
        %v2671 = vlaneseq
        %v2672 = vshrl.u32 %v2671, 7
        %v2673 = vsub.s32 0, %v2672
        %v2674 = vrot.slane %v2669, %v2673
        %2676 = vmatprep.subr.mxu0 0.0
        %2677 = vmatpush1.msra.mxu0 %v2653
        %2678 = vmatprep.subr.mxu0 0.0
        %2679 = vmatpush1.msra.mxu0 %v2654
        %2680 = vmatprep.subr.mxu0 0.0
        %2681 = vmatpush1.msra.mxu0 %v2655
        %2682 = vmatprep.subr.mxu0 0.0
        %2683 = vmatpush1.msra.mxu0 %v2656
        %2684 = vmatprep.subr.mxu0 0.0
        %2685 = vmatpush1.msra.mxu0 %v2657
        %2686 = vmatprep.subr.mxu0 0.0
        %2687 = vmatpush1.msra.mxu0 %v2658
        %2688 = vmatprep.subr.mxu0 0.0
        %2689 = vmatpush1.msra.mxu0 %v2659
        %2690 = vmatprep.subr.mxu0 0.0
        %2691 = vmatpush1.msra.mxu0 %v2660
        %2692 = vmatprep.subr.mxu0 0.0
        %2693 = vmatpush1.msra.mxu0 %v2661
        %2694 = vmatprep.subr.mxu0 0.0
        %2695 = vmatpush1.msra.mxu0 %v2662
        %2696 = vmatprep.subr.mxu0 0.0
        %2697 = vmatpush1.msra.mxu0 %v2663
        %2698 = vmatprep.subr.mxu0 0.0
        %2699 = vmatpush1.msra.mxu0 %v2664
        %2700 = vmatprep.subr.mxu0 0.0
        %2701 = vmatpush1.msra.mxu0 %v2665
        %2702 = vmatprep.subr.mxu0 0.0
        %2703 = vmatpush1.msra.mxu0 %v2666
        %2704 = vmatprep.subr.mxu0 0.0
        %2705 = vmatpush1.msra.mxu0 %v2667
        %2706 = vmatprep.subr.mxu0 0.0
        %2707 = vmatpush1.msra.mxu0 %v2668
        %2708 = vmatprep.subr.mxu0 0.0
        %2709 = vmatpush1.msra.mxu0 0.0
        %2710 = vmatprep.subr.mxu0 0.0
        %2711 = vmatpush1.msra.mxu0 0.0
        %2712 = vmatprep.subr.mxu0 0.0
        %2713 = vmatpush1.msra.mxu0 0.0
        %2714 = vmatprep.subr.mxu0 0.0
        %2715 = vmatpush1.msra.mxu0 0.0
        %2716 = vmatprep.subr.mxu0 0.0
        %2717 = vmatpush1.msra.mxu0 0.0
        %2718 = vmatprep.subr.mxu0 0.0
        %2719 = vmatpush1.msra.mxu0 0.0
        %2720 = vmatprep.subr.mxu0 0.0
        %2721 = vmatpush1.msra.mxu0 0.0
        %2722 = vmatprep.subr.mxu0 0.0
        %2723 = vmatpush1.msra.mxu0 0.0
        %2724 = vmatprep.subr.mxu0 0.0
        %2725 = vmatpush1.msra.mxu0 0.0
        %2726 = vmatprep.subr.mxu0 0.0
        %2727 = vmatpush1.msra.mxu0 0.0
        %2728 = vmatprep.subr.mxu0 0.0
        %2729 = vmatpush1.msra.mxu0 0.0
        %2730 = vmatprep.subr.mxu0 0.0
        %2731 = vmatpush1.msra.mxu0 0.0
        %2732 = vmatprep.subr.mxu0 0.0
        %2733 = vmatpush1.msra.mxu0 0.0
        %2734 = vmatprep.subr.mxu0 0.0
        %2735 = vmatpush1.msra.mxu0 0.0
        %2736 = vmatprep.subr.mxu0 0.0
        %2737 = vmatpush1.msra.mxu0 0.0
        %2738 = vmatprep.subr.mxu0 0.0
        %2739 = vmatpush1.msra.mxu0 0.0
        %2740 = vmatprep.mubr.f32.mxu0 0.0
        %2741 = vmatmul.mubr.f32.gmra.mrb[0].mxu0 %v2645
        %v2742 = vpop.f32.mrb[0].mxu0
        %v2743 = vadd.f32 %v2674, %v2742
        %v2744 = vpop.f32.mrb[0].mxu0
        %2745 = vmatprep.mubr.f32.mxu0 0.0
        %2746 = vmatmul.mubr.f32.gmra.mrb[0].mxu0 %v2646
        %v2747 = vpop.f32.mrb[0].mxu0
        %v2748 = vadd.f32 %v2674, %v2747
        %v2749 = vpop.f32.mrb[0].mxu0
        %2750 = vmatprep.mubr.f32.mxu0 0.0
        %2751 = vmatmul.mubr.f32.gmra.mrb[0].mxu0 %v2647
        %v2752 = vpop.f32.mrb[0].mxu0
        %v2753 = vadd.f32 %v2674, %v2752
        %v2754 = vpop.f32.mrb[0].mxu0
        %2755 = vmatprep.mubr.f32.mxu0 0.0
        %2756 = vmatmul.mubr.f32.gmra.mrb[0].mxu0 %v2648
        %v2757 = vpop.f32.mrb[0].mxu0
        %v2758 = vadd.f32 %v2674, %v2757
        %v2759 = vpop.f32.mrb[0].mxu0
        %2760 = vmatprep.mubr.f32.mxu0 0.0
        %2761 = vmatmul.mubr.f32.gmra.mrb[0].mxu0 %v2649
        %v2762 = vpop.f32.mrb[0].mxu0
        %v2763 = vadd.f32 %v2674, %v2762
        %v2764 = vpop.f32.mrb[0].mxu0
        %2765 = vmatprep.mubr.f32.mxu0 0.0
        %2766 = vmatmul.mubr.f32.gmra.mrb[0].mxu0 %v2650
        %v2767 = vpop.f32.mrb[0].mxu0
        %v2768 = vadd.f32 %v2674, %v2767
        %v2769 = vpop.f32.mrb[0].mxu0
        %2770 = vmatprep.mubr.f32.mxu0 0.0
        %2771 = vmatmul.mubr.f32.gmra.mrb[0].mxu0 %v2651
        %v2772 = vpop.f32.mrb[0].mxu0
        %v2773 = vadd.f32 %v2674, %v2772
        %v2774 = vpop.f32.mrb[0].mxu0
        %2775 = vmatprep.mubr.f32.mxu0 0.0
        %2776 = vmatmul.mubr.f32.gmra.mrb[0].mxu0 %v2652
        %v2777 = vpop.f32.mrb[0].mxu0
        %v2778 = vadd.f32 %v2674, %v2777
        %v2779 = vpop.f32.mrb[0].mxu0
        %2780 = vdwg.mxu0
        %v2781 = vadd.f32 %v559, %v2743
        %v2782 = vadd.f32 %v560, %v2748
        %v2783 = vadd.f32 %v561, %v2753
        %v2784 = vadd.f32 %v562, %v2758
        %v2785 = vadd.f32 %v563, %v2763
        %v2786 = vadd.f32 %v564, %v2768
        %v2787 = vadd.f32 %v565, %v2773
        %v2788 = vadd.f32 %v566, %v2778
        %v2789 = vld [vmem:[%s6] sm:$0x1]
        %v2790 = vld [vmem:[%s7] sm:$0x1]
        %2791 = vadd.xlane.f32.xlu0 %v2781
        %v2792 = vpop.xlane.xlu0 %2791
        %2793 = vadd.xlane.f32.xlu0 %v2782
        %v2794 = vpop.xlane.xlu0 %2793
        %2795 = vadd.xlane.f32.xlu0 %v2783
        %v2796 = vpop.xlane.xlu0 %2795
        %2797 = vadd.xlane.f32.xlu0 %v2784
        %v2798 = vpop.xlane.xlu0 %2797
        %2799 = vadd.xlane.f32.xlu0 %v2785
        %v2800 = vpop.xlane.xlu0 %2799
        %2801 = vadd.xlane.f32.xlu0 %v2786
        %v2802 = vpop.xlane.xlu0 %2801
        %2803 = vadd.xlane.f32.xlu0 %v2787
        %v2804 = vpop.xlane.xlu0 %2803
        %2805 = vadd.xlane.f32.xlu0 %v2788
        %v2806 = vpop.xlane.xlu0 %2805
        %v2807 = vrcp.pop 128.0
        %v2808 = vmul.f32 %v2792, %v2807
        %v2809 = vmul.f32 %v2794, %v2807
        %v2810 = vmul.f32 %v2796, %v2807
        %v2811 = vmul.f32 %v2798, %v2807
        %v2812 = vmul.f32 %v2800, %v2807
        %v2813 = vmul.f32 %v2802, %v2807
        %v2814 = vmul.f32 %v2804, %v2807
        %v2815 = vmul.f32 %v2806, %v2807
        %v2816 = vsub.f32 %v2781, %v2808
        %v2817 = vsub.f32 %v2782, %v2809
        %v2818 = vsub.f32 %v2783, %v2810
        %v2819 = vsub.f32 %v2784, %v2811
        %v2820 = vsub.f32 %v2785, %v2812
        %v2821 = vsub.f32 %v2786, %v2813
        %v2822 = vsub.f32 %v2787, %v2814
        %v2823 = vsub.f32 %v2788, %v2815
        %v2824 = vmul.f32 %v2816, %v2816
        %v2825 = vmul.f32 %v2817, %v2817
        %v2826 = vmul.f32 %v2818, %v2818
        %v2827 = vmul.f32 %v2819, %v2819
        %v2828 = vmul.f32 %v2820, %v2820
        %v2829 = vmul.f32 %v2821, %v2821
        %v2830 = vmul.f32 %v2822, %v2822
        %v2831 = vmul.f32 %v2823, %v2823
        %2832 = vadd.xlane.f32.xlu0 %v2824
        %v2833 = vpop.xlane.xlu0 %2832
        %2834 = vadd.xlane.f32.xlu0 %v2825
        %v2835 = vpop.xlane.xlu0 %2834
        %2836 = vadd.xlane.f32.xlu0 %v2826
        %v2837 = vpop.xlane.xlu0 %2836
        %2838 = vadd.xlane.f32.xlu0 %v2827
        %v2839 = vpop.xlane.xlu0 %2838
        %2840 = vadd.xlane.f32.xlu0 %v2828
        %v2841 = vpop.xlane.xlu0 %2840
        %2842 = vadd.xlane.f32.xlu0 %v2829
        %v2843 = vpop.xlane.xlu0 %2842
        %2844 = vadd.xlane.f32.xlu0 %v2830
        %v2845 = vpop.xlane.xlu0 %2844
        %2846 = vadd.xlane.f32.xlu0 %v2831
        %v2847 = vpop.xlane.xlu0 %2846
        %v2848 = vmul.f32 %v2833, %v2807
        %v2849 = vmul.f32 %v2835, %v2807
        %v2850 = vmul.f32 %v2837, %v2807
        %v2851 = vmul.f32 %v2839, %v2807
        %v2852 = vmul.f32 %v2841, %v2807
        %v2853 = vmul.f32 %v2843, %v2807
        %v2854 = vmul.f32 %v2845, %v2807
        %v2855 = vmul.f32 %v2847, %v2807
        %v2856 = vadd.f32 %v2848, 1e-05
        %v2857 = vadd.f32 %v2849, 1e-05
        %v2858 = vadd.f32 %v2850, 1e-05
        %v2859 = vadd.f32 %v2851, 1e-05
        %v2860 = vadd.f32 %v2852, 1e-05
        %v2861 = vadd.f32 %v2853, 1e-05
        %v2862 = vadd.f32 %v2854, 1e-05
        %v2863 = vadd.f32 %v2855, 1e-05
        %v2864 = vrsqrt.pop %v2856
        %v2865 = vrsqrt.pop %v2857
        %v2866 = vrsqrt.pop %v2858
        %v2867 = vrsqrt.pop %v2859
        %v2868 = vrsqrt.pop %v2860
        %v2869 = vrsqrt.pop %v2861
        %v2870 = vrsqrt.pop %v2862
        %v2871 = vrsqrt.pop %v2863
        %v2872 = vmul.f32 %v2816, %v2864
        %v2873 = vmul.f32 %v2817, %v2865
        %v2874 = vmul.f32 %v2818, %v2866
        %v2875 = vmul.f32 %v2819, %v2867
        %v2876 = vmul.f32 %v2820, %v2868
        %v2877 = vmul.f32 %v2821, %v2869
        %v2878 = vmul.f32 %v2822, %v2870
        %v2879 = vmul.f32 %v2823, %v2871
        %v2881 = vlaneseq
        %v2882 = vshrl.u32 %v2881, 7
        %v2883 = vsub.s32 0, %v2882
        %v2884 = vrot.slane %v2789, %v2883
        %v2886 = vmul.f32 %v2872, %v2884
        %v2887 = vmul.f32 %v2873, %v2884
        %v2888 = vmul.f32 %v2874, %v2884
        %v2889 = vmul.f32 %v2875, %v2884
        %v2890 = vmul.f32 %v2876, %v2884
        %v2891 = vmul.f32 %v2877, %v2884
        %v2892 = vmul.f32 %v2878, %v2884
        %v2893 = vmul.f32 %v2879, %v2884
        %v2895 = vlaneseq
        %v2896 = vshrl.u32 %v2895, 7
        %v2897 = vsub.s32 0, %v2896
        %v2898 = vrot.slane %v2790, %v2897
        %v2900 = vadd.f32 %v2886, %v2898
        %v2901 = vadd.f32 %v2887, %v2898
        %v2902 = vadd.f32 %v2888, %v2898
        %v2903 = vadd.f32 %v2889, %v2898
        %v2904 = vadd.f32 %v2890, %v2898
        %v2905 = vadd.f32 %v2891, %v2898
        %v2906 = vadd.f32 %v2892, %v2898
        %v2907 = vadd.f32 %v2893, %v2898
        %v2908 = vld [vmem:[#allocation10] sm:$0xff]
        %v2909 = vld [vmem:[#allocation10 + $0x8] sm:$0xff]
        %v2910 = vld [vmem:[#allocation10 + $0x10] sm:$0xff]
        %v2911 = vld [vmem:[#allocation10 + $0x18] sm:$0xff]
        %v2912 = vld [vmem:[#allocation10 + $0x20] sm:$0xff]
        %v2913 = vld [vmem:[#allocation10 + $0x28] sm:$0xff]
        %v2914 = vld [vmem:[#allocation10 + $0x30] sm:$0xff]
        %v2915 = vld [vmem:[#allocation10 + $0x38] sm:$0xff]
        %v2916 = vld [vmem:[#allocation10 + $0x40] sm:$0xff]
        %v2917 = vld [vmem:[#allocation10 + $0x48] sm:$0xff]
        %v2918 = vld [vmem:[#allocation10 + $0x50] sm:$0xff]
        %v2919 = vld [vmem:[#allocation10 + $0x58] sm:$0xff]
        %v2920 = vld [vmem:[#allocation10 + $0x60] sm:$0xff]
        %v2921 = vld [vmem:[#allocation10 + $0x68] sm:$0xff]
        %v2922 = vld [vmem:[#allocation10 + $0x70] sm:$0xff]
        %v2923 = vld [vmem:[#allocation10 + $0x78] sm:$0xff]
        %v2924 = vld [vmem:[#allocation10 + $0x80] sm:$0xff]
        %v2925 = vld [vmem:[#allocation10 + $0x88] sm:$0xff]
        %v2926 = vld [vmem:[#allocation10 + $0x90] sm:$0xff]
        %v2927 = vld [vmem:[#allocation10 + $0x98] sm:$0xff]
        %v2928 = vld [vmem:[#allocation10 + $0xa0] sm:$0xff]
        %v2929 = vld [vmem:[#allocation10 + $0xa8] sm:$0xff]
        %v2930 = vld [vmem:[#allocation10 + $0xb0] sm:$0xff]
        %v2931 = vld [vmem:[#allocation10 + $0xb8] sm:$0xff]
        %v2932 = vld [vmem:[#allocation10 + $0xc0] sm:$0xff]
        %v2933 = vld [vmem:[#allocation10 + $0xc8] sm:$0xff]
        %v2934 = vld [vmem:[#allocation10 + $0xd0] sm:$0xff]
        %v2935 = vld [vmem:[#allocation10 + $0xd8] sm:$0xff]
        %v2936 = vld [vmem:[#allocation10 + $0xe0] sm:$0xff]
        %v2937 = vld [vmem:[#allocation10 + $0xe8] sm:$0xff]
        %v2938 = vld [vmem:[#allocation10 + $0xf0] sm:$0xff]
        %v2939 = vld [vmem:[#allocation10 + $0xf8] sm:$0xff]
        %v2940 = vld [vmem:[%s9] sm:$0x3]
        %v2942 = vlaneseq
        %v2943 = vshrl.u32 %v2942, 7
        %v2944 = vsub.s32 0, %v2943
        %v2945 = vrot.slane %v2940, %v2944
        %v2946 = vlaneseq
        %v2947 = vshrl.u32 %v2946, 7
        %v2948 = vsub.s32 1, %v2947
        %v2949 = vrot.slane %v2940, %v2948
        %2952 = vmatprep.subr.mxu0 %v2909
        %2953 = vmatpush1.msra.mxu0 %v2908
        %2954 = vmatprep.subr.mxu0 %v2911
        %2955 = vmatpush1.msra.mxu0 %v2910
        %2956 = vmatprep.subr.mxu0 %v2913
        %2957 = vmatpush1.msra.mxu0 %v2912
        %2958 = vmatprep.subr.mxu0 %v2915
        %2959 = vmatpush1.msra.mxu0 %v2914
        %2960 = vmatprep.subr.mxu0 %v2917
        %2961 = vmatpush1.msra.mxu0 %v2916
        %2962 = vmatprep.subr.mxu0 %v2919
        %2963 = vmatpush1.msra.mxu0 %v2918
        %2964 = vmatprep.subr.mxu0 %v2921
        %2965 = vmatpush1.msra.mxu0 %v2920
        %2966 = vmatprep.subr.mxu0 %v2923
        %2967 = vmatpush1.msra.mxu0 %v2922
        %2968 = vmatprep.subr.mxu0 %v2925
        %2969 = vmatpush1.msra.mxu0 %v2924
        %2970 = vmatprep.subr.mxu0 %v2927
        %2971 = vmatpush1.msra.mxu0 %v2926
        %2972 = vmatprep.subr.mxu0 %v2929
        %2973 = vmatpush1.msra.mxu0 %v2928
        %2974 = vmatprep.subr.mxu0 %v2931
        %2975 = vmatpush1.msra.mxu0 %v2930
        %2976 = vmatprep.subr.mxu0 %v2933
        %2977 = vmatpush1.msra.mxu0 %v2932
        %2978 = vmatprep.subr.mxu0 %v2935
        %2979 = vmatpush1.msra.mxu0 %v2934
        %2980 = vmatprep.subr.mxu0 %v2937
        %2981 = vmatpush1.msra.mxu0 %v2936
        %2982 = vmatprep.subr.mxu0 %v2939
        %2983 = vmatpush1.msra.mxu0 %v2938
        %2984 = vmatprep.subr.mxu0 0.0
        %2985 = vmatpush1.msra.mxu0 0.0
        %2986 = vmatprep.subr.mxu0 0.0
        %2987 = vmatpush1.msra.mxu0 0.0
        %2988 = vmatprep.subr.mxu0 0.0
        %2989 = vmatpush1.msra.mxu0 0.0
        %2990 = vmatprep.subr.mxu0 0.0
        %2991 = vmatpush1.msra.mxu0 0.0
        %2992 = vmatprep.subr.mxu0 0.0
        %2993 = vmatpush1.msra.mxu0 0.0
        %2994 = vmatprep.subr.mxu0 0.0
        %2995 = vmatpush1.msra.mxu0 0.0
        %2996 = vmatprep.subr.mxu0 0.0
        %2997 = vmatpush1.msra.mxu0 0.0
        %2998 = vmatprep.subr.mxu0 0.0
        %2999 = vmatpush1.msra.mxu0 0.0
        %3000 = vmatprep.subr.mxu0 0.0
        %3001 = vmatpush1.msra.mxu0 0.0
        %3002 = vmatprep.subr.mxu0 0.0
        %3003 = vmatpush1.msra.mxu0 0.0
        %3004 = vmatprep.subr.mxu0 0.0
        %3005 = vmatpush1.msra.mxu0 0.0
        %3006 = vmatprep.subr.mxu0 0.0
        %3007 = vmatpush1.msra.mxu0 0.0
        %3008 = vmatprep.subr.mxu0 0.0
        %3009 = vmatpush1.msra.mxu0 0.0
        %3010 = vmatprep.subr.mxu0 0.0
        %3011 = vmatpush1.msra.mxu0 0.0
        %3012 = vmatprep.subr.mxu0 0.0
        %3013 = vmatpush1.msra.mxu0 0.0
        %3014 = vmatprep.subr.mxu0 0.0
        %3015 = vmatpush1.msra.mxu0 0.0
        %3016 = vmatprep.mubr.f32.mxu0 0.0
        %3017 = vmatmul.mubr.f32.gmra.mrb[0].mxu0 %v2900
        %v3018 = vpop.f32.mrb[0].mxu0
        %v3019 = vadd.f32 %v2945, %v3018
        %v3020 = vpop.f32.mrb[0].mxu0
        %v3021 = vadd.f32 %v2949, %v3020
        %3022 = vmatprep.mubr.f32.mxu0 0.0
        %3023 = vmatmul.mubr.f32.gmra.mrb[0].mxu0 %v2901
        %v3024 = vpop.f32.mrb[0].mxu0
        %v3025 = vadd.f32 %v2945, %v3024
        %v3026 = vpop.f32.mrb[0].mxu0
        %v3027 = vadd.f32 %v2949, %v3026
        %3028 = vmatprep.mubr.f32.mxu0 0.0
        %3029 = vmatmul.mubr.f32.gmra.mrb[0].mxu0 %v2902
        %v3030 = vpop.f32.mrb[0].mxu0
        %v3031 = vadd.f32 %v2945, %v3030
        %v3032 = vpop.f32.mrb[0].mxu0
        %v3033 = vadd.f32 %v2949, %v3032
        %3034 = vmatprep.mubr.f32.mxu0 0.0
        %3035 = vmatmul.mubr.f32.gmra.mrb[0].mxu0 %v2903
        %v3036 = vpop.f32.mrb[0].mxu0
        %v3037 = vadd.f32 %v2945, %v3036
        %v3038 = vpop.f32.mrb[0].mxu0
        %v3039 = vadd.f32 %v2949, %v3038
        %3040 = vmatprep.mubr.f32.mxu0 0.0
        %3041 = vmatmul.mubr.f32.gmra.mrb[0].mxu0 %v2904
        %v3042 = vpop.f32.mrb[0].mxu0
        %v3043 = vadd.f32 %v2945, %v3042
        %v3044 = vpop.f32.mrb[0].mxu0
        %v3045 = vadd.f32 %v2949, %v3044
        %3046 = vmatprep.mubr.f32.mxu0 0.0
        %3047 = vmatmul.mubr.f32.gmra.mrb[0].mxu0 %v2905
        %v3048 = vpop.f32.mrb[0].mxu0
        %v3049 = vadd.f32 %v2945, %v3048
        %v3050 = vpop.f32.mrb[0].mxu0
        %v3051 = vadd.f32 %v2949, %v3050
        %3052 = vmatprep.mubr.f32.mxu0 0.0
        %3053 = vmatmul.mubr.f32.gmra.mrb[0].mxu0 %v2906
        %v3054 = vpop.f32.mrb[0].mxu0
        %v3055 = vadd.f32 %v2945, %v3054
        %v3056 = vpop.f32.mrb[0].mxu0
        %v3057 = vadd.f32 %v2949, %v3056
        %3058 = vmatprep.mubr.f32.mxu0 0.0
        %3059 = vmatmul.mubr.f32.gmra.mrb[0].mxu0 %v2907
        %v3060 = vpop.f32.mrb[0].mxu0
        %v3061 = vadd.f32 %v2945, %v3060
        %v3062 = vpop.f32.mrb[0].mxu0
        %v3063 = vadd.f32 %v2949, %v3062
        %3064 = vdwg.mxu0
        %v3065 = vmul.f32 %v3019, 0.5
        %v3066 = vmul.f32 %v3021, 0.5
        %v3067 = vmul.f32 %v3025, 0.5
        %v3068 = vmul.f32 %v3027, 0.5
        %v3069 = vmul.f32 %v3031, 0.5
        %v3070 = vmul.f32 %v3033, 0.5
        %v3071 = vmul.f32 %v3037, 0.5
        %v3072 = vmul.f32 %v3039, 0.5
        %v3073 = vmul.f32 %v3043, 0.5
        %v3074 = vmul.f32 %v3045, 0.5
        %v3075 = vmul.f32 %v3049, 0.5
        %v3076 = vmul.f32 %v3051, 0.5
        %v3077 = vmul.f32 %v3055, 0.5
        %v3078 = vmul.f32 %v3057, 0.5
        %v3079 = vmul.f32 %v3061, 0.5
        %v3080 = vmul.f32 %v3063, 0.5
        %v3081 = vmul.f32 %v3019, 0.044715
        %v3082 = vmul.f32 %v3021, 0.044715
        %v3083 = vmul.f32 %v3025, 0.044715
        %v3084 = vmul.f32 %v3027, 0.044715
        %v3085 = vmul.f32 %v3031, 0.044715
        %v3086 = vmul.f32 %v3033, 0.044715
        %v3087 = vmul.f32 %v3037, 0.044715
        %v3088 = vmul.f32 %v3039, 0.044715
        %v3089 = vmul.f32 %v3043, 0.044715
        %v3090 = vmul.f32 %v3045, 0.044715
        %v3091 = vmul.f32 %v3049, 0.044715
        %v3092 = vmul.f32 %v3051, 0.044715
        %v3093 = vmul.f32 %v3055, 0.044715
        %v3094 = vmul.f32 %v3057, 0.044715
        %v3095 = vmul.f32 %v3061, 0.044715
        %v3096 = vmul.f32 %v3063, 0.044715
        %v3097 = vmul.f32 %v3081, %v3019
        %v3098 = vmul.f32 %v3082, %v3021
        %v3099 = vmul.f32 %v3083, %v3025
        %v3100 = vmul.f32 %v3084, %v3027
        %v3101 = vmul.f32 %v3085, %v3031
        %v3102 = vmul.f32 %v3086, %v3033
        %v3103 = vmul.f32 %v3087, %v3037
        %v3104 = vmul.f32 %v3088, %v3039
        %v3105 = vmul.f32 %v3089, %v3043
        %v3106 = vmul.f32 %v3090, %v3045
        %v3107 = vmul.f32 %v3091, %v3049
        %v3108 = vmul.f32 %v3092, %v3051
        %v3109 = vmul.f32 %v3093, %v3055
        %v3110 = vmul.f32 %v3094, %v3057
        %v3111 = vmul.f32 %v3095, %v3061
        %v3112 = vmul.f32 %v3096, %v3063
        %v3113 = vmul.f32 %v3097, %v3019
        %v3114 = vmul.f32 %v3098, %v3021
        %v3115 = vmul.f32 %v3099, %v3025
        %v3116 = vmul.f32 %v3100, %v3027
        %v3117 = vmul.f32 %v3101, %v3031
        %v3118 = vmul.f32 %v3102, %v3033
        %v3119 = vmul.f32 %v3103, %v3037
        %v3120 = vmul.f32 %v3104, %v3039
        %v3121 = vmul.f32 %v3105, %v3043
        %v3122 = vmul.f32 %v3106, %v3045
        %v3123 = vmul.f32 %v3107, %v3049
        %v3124 = vmul.f32 %v3108, %v3051
        %v3125 = vmul.f32 %v3109, %v3055
        %v3126 = vmul.f32 %v3110, %v3057
        %v3127 = vmul.f32 %v3111, %v3061
        %v3128 = vmul.f32 %v3112, %v3063
        %v3129 = vadd.f32 %v3019, %v3113
        %v3130 = vadd.f32 %v3021, %v3114
        %v3131 = vadd.f32 %v3025, %v3115
        %v3132 = vadd.f32 %v3027, %v3116
        %v3133 = vadd.f32 %v3031, %v3117
        %v3134 = vadd.f32 %v3033, %v3118
        %v3135 = vadd.f32 %v3037, %v3119
        %v3136 = vadd.f32 %v3039, %v3120
        %v3137 = vadd.f32 %v3043, %v3121
        %v3138 = vadd.f32 %v3045, %v3122
        %v3139 = vadd.f32 %v3049, %v3123
        %v3140 = vadd.f32 %v3051, %v3124
        %v3141 = vadd.f32 %v3055, %v3125
        %v3142 = vadd.f32 %v3057, %v3126
        %v3143 = vadd.f32 %v3061, %v3127
        %v3144 = vadd.f32 %v3063, %v3128
        %v3145 = vmul.f32 %v3129, 0.7978846
        %v3146 = vmul.f32 %v3130, 0.7978846
        %v3147 = vmul.f32 %v3131, 0.7978846
        %v3148 = vmul.f32 %v3132, 0.7978846
        %v3149 = vmul.f32 %v3133, 0.7978846
        %v3150 = vmul.f32 %v3134, 0.7978846
        %v3151 = vmul.f32 %v3135, 0.7978846
        %v3152 = vmul.f32 %v3136, 0.7978846
        %v3153 = vmul.f32 %v3137, 0.7978846
        %v3154 = vmul.f32 %v3138, 0.7978846
        %v3155 = vmul.f32 %v3139, 0.7978846
        %v3156 = vmul.f32 %v3140, 0.7978846
        %v3157 = vmul.f32 %v3141, 0.7978846
        %v3158 = vmul.f32 %v3142, 0.7978846
        %v3159 = vmul.f32 %v3143, 0.7978846
        %v3160 = vmul.f32 %v3144, 0.7978846
        %v3161 = vtanh.pop %v3145
        %v3162 = vtanh.pop %v3146
        %v3163 = vtanh.pop %v3147
        %v3164 = vtanh.pop %v3148
        %v3165 = vtanh.pop %v3149
        %v3166 = vtanh.pop %v3150
        %v3167 = vtanh.pop %v3151
        %v3168 = vtanh.pop %v3152
        %v3169 = vtanh.pop %v3153
        %v3170 = vtanh.pop %v3154
        %v3171 = vtanh.pop %v3155
        %v3172 = vtanh.pop %v3156
        %v3173 = vtanh.pop %v3157
        %v3174 = vtanh.pop %v3158
        %v3175 = vtanh.pop %v3159
        %v3176 = vtanh.pop %v3160
        %v3177 = vadd.f32 %v3161, 1.0
        %v3178 = vadd.f32 %v3162, 1.0
        %v3179 = vadd.f32 %v3163, 1.0
        %v3180 = vadd.f32 %v3164, 1.0
        %v3181 = vadd.f32 %v3165, 1.0
        %v3182 = vadd.f32 %v3166, 1.0
        %v3183 = vadd.f32 %v3167, 1.0
        %v3184 = vadd.f32 %v3168, 1.0
        %v3185 = vadd.f32 %v3169, 1.0
        %v3186 = vadd.f32 %v3170, 1.0
        %v3187 = vadd.f32 %v3171, 1.0
        %v3188 = vadd.f32 %v3172, 1.0
        %v3189 = vadd.f32 %v3173, 1.0
        %v3190 = vadd.f32 %v3174, 1.0
        %v3191 = vadd.f32 %v3175, 1.0
        %v3192 = vadd.f32 %v3176, 1.0
        %v3193 = vmul.f32 %v3065, %v3177
        %v3194 = vmul.f32 %v3066, %v3178
        %v3195 = vmul.f32 %v3067, %v3179
        %v3196 = vmul.f32 %v3068, %v3180
        %v3197 = vmul.f32 %v3069, %v3181
        %v3198 = vmul.f32 %v3070, %v3182
        %v3199 = vmul.f32 %v3071, %v3183
        %v3200 = vmul.f32 %v3072, %v3184
        %v3201 = vmul.f32 %v3073, %v3185
        %v3202 = vmul.f32 %v3074, %v3186
        %v3203 = vmul.f32 %v3075, %v3187
        %v3204 = vmul.f32 %v3076, %v3188
        %v3205 = vmul.f32 %v3077, %v3189
        %v3206 = vmul.f32 %v3078, %v3190
        %v3207 = vmul.f32 %v3079, %v3191
        %v3208 = vmul.f32 %v3080, %v3192
        %v3209 = vld [vmem:[#allocation11] sm:$0xff]
        %v3210 = vld [vmem:[#allocation11 + $0x8] sm:$0xff]
        %v3211 = vld [vmem:[#allocation11 + $0x10] sm:$0xff]
        %v3212 = vld [vmem:[#allocation11 + $0x18] sm:$0xff]
        %v3213 = vld [vmem:[#allocation11 + $0x20] sm:$0xff]
        %v3214 = vld [vmem:[#allocation11 + $0x28] sm:$0xff]
        %v3215 = vld [vmem:[#allocation11 + $0x30] sm:$0xff]
        %v3216 = vld [vmem:[#allocation11 + $0x38] sm:$0xff]
        %v3217 = vld [vmem:[#allocation11 + $0x40] sm:$0xff]
        %v3218 = vld [vmem:[#allocation11 + $0x48] sm:$0xff]
        %v3219 = vld [vmem:[#allocation11 + $0x50] sm:$0xff]
        %v3220 = vld [vmem:[#allocation11 + $0x58] sm:$0xff]
        %v3221 = vld [vmem:[#allocation11 + $0x60] sm:$0xff]
        %v3222 = vld [vmem:[#allocation11 + $0x68] sm:$0xff]
        %v3223 = vld [vmem:[#allocation11 + $0x70] sm:$0xff]
        %v3224 = vld [vmem:[#allocation11 + $0x78] sm:$0xff]
        %v3225 = vld [vmem:[#allocation11 + $0x80] sm:$0xff]
        %v3226 = vld [vmem:[#allocation11 + $0x88] sm:$0xff]
        %v3227 = vld [vmem:[#allocation11 + $0x90] sm:$0xff]
        %v3228 = vld [vmem:[#allocation11 + $0x98] sm:$0xff]
        %v3229 = vld [vmem:[#allocation11 + $0xa0] sm:$0xff]
        %v3230 = vld [vmem:[#allocation11 + $0xa8] sm:$0xff]
        %v3231 = vld [vmem:[#allocation11 + $0xb0] sm:$0xff]
        %v3232 = vld [vmem:[#allocation11 + $0xb8] sm:$0xff]
        %v3233 = vld [vmem:[#allocation11 + $0xc0] sm:$0xff]
        %v3234 = vld [vmem:[#allocation11 + $0xc8] sm:$0xff]
        %v3235 = vld [vmem:[#allocation11 + $0xd0] sm:$0xff]
        %v3236 = vld [vmem:[#allocation11 + $0xd8] sm:$0xff]
        %v3237 = vld [vmem:[#allocation11 + $0xe0] sm:$0xff]
        %v3238 = vld [vmem:[#allocation11 + $0xe8] sm:$0xff]
        %v3239 = vld [vmem:[#allocation11 + $0xf0] sm:$0xff]
        %v3240 = vld [vmem:[#allocation11 + $0xf8] sm:$0xff]
        %v3241 = vld [vmem:[%s11] sm:$0x1]
        %v3243 = vlaneseq
        %v3244 = vshrl.u32 %v3243, 7
        %v3245 = vsub.s32 0, %v3244
        %v3246 = vrot.slane %v3241, %v3245
        %3248 = vmatprep.subr.mxu0 0.0
        %3249 = vmatpush1.msra.mxu0 %v3209
        %3250 = vmatprep.subr.mxu0 0.0
        %3251 = vmatpush1.msra.mxu0 %v3210
        %3252 = vmatprep.subr.mxu0 0.0
        %3253 = vmatpush1.msra.mxu0 %v3211
        %3254 = vmatprep.subr.mxu0 0.0
        %3255 = vmatpush1.msra.mxu0 %v3212
        %3256 = vmatprep.subr.mxu0 0.0
        %3257 = vmatpush1.msra.mxu0 %v3213
        %3258 = vmatprep.subr.mxu0 0.0
        %3259 = vmatpush1.msra.mxu0 %v3214
        %3260 = vmatprep.subr.mxu0 0.0
        %3261 = vmatpush1.msra.mxu0 %v3215
        %3262 = vmatprep.subr.mxu0 0.0
        %3263 = vmatpush1.msra.mxu0 %v3216
        %3264 = vmatprep.subr.mxu0 0.0
        %3265 = vmatpush1.msra.mxu0 %v3217
        %3266 = vmatprep.subr.mxu0 0.0
        %3267 = vmatpush1.msra.mxu0 %v3218
        %3268 = vmatprep.subr.mxu0 0.0
        %3269 = vmatpush1.msra.mxu0 %v3219
        %3270 = vmatprep.subr.mxu0 0.0
        %3271 = vmatpush1.msra.mxu0 %v3220
        %3272 = vmatprep.subr.mxu0 0.0
        %3273 = vmatpush1.msra.mxu0 %v3221
        %3274 = vmatprep.subr.mxu0 0.0
        %3275 = vmatpush1.msra.mxu0 %v3222
        %3276 = vmatprep.subr.mxu0 0.0
        %3277 = vmatpush1.msra.mxu0 %v3223
        %3278 = vmatprep.subr.mxu0 0.0
        %3279 = vmatpush1.msra.mxu0 %v3224
        %3280 = vmatprep.subr.mxu0 0.0
        %3281 = vmatpush1.msra.mxu0 %v3225
        %3282 = vmatprep.subr.mxu0 0.0
        %3283 = vmatpush1.msra.mxu0 %v3226
        %3284 = vmatprep.subr.mxu0 0.0
        %3285 = vmatpush1.msra.mxu0 %v3227
        %3286 = vmatprep.subr.mxu0 0.0
        %3287 = vmatpush1.msra.mxu0 %v3228
        %3288 = vmatprep.subr.mxu0 0.0
        %3289 = vmatpush1.msra.mxu0 %v3229
        %3290 = vmatprep.subr.mxu0 0.0
        %3291 = vmatpush1.msra.mxu0 %v3230
        %3292 = vmatprep.subr.mxu0 0.0
        %3293 = vmatpush1.msra.mxu0 %v3231
        %3294 = vmatprep.subr.mxu0 0.0
        %3295 = vmatpush1.msra.mxu0 %v3232
        %3296 = vmatprep.subr.mxu0 0.0
        %3297 = vmatpush1.msra.mxu0 %v3233
        %3298 = vmatprep.subr.mxu0 0.0
        %3299 = vmatpush1.msra.mxu0 %v3234
        %3300 = vmatprep.subr.mxu0 0.0
        %3301 = vmatpush1.msra.mxu0 %v3235
        %3302 = vmatprep.subr.mxu0 0.0
        %3303 = vmatpush1.msra.mxu0 %v3236
        %3304 = vmatprep.subr.mxu0 0.0
        %3305 = vmatpush1.msra.mxu0 %v3237
        %3306 = vmatprep.subr.mxu0 0.0
        %3307 = vmatpush1.msra.mxu0 %v3238
        %3308 = vmatprep.subr.mxu0 0.0
        %3309 = vmatpush1.msra.mxu0 %v3239
        %3310 = vmatprep.subr.mxu0 0.0
        %3311 = vmatpush1.msra.mxu0 %v3240
        %3312 = vmatprep.mubr.f32.mxu0 %v3194
        %3313 = vmatmul.mubr.f32.gmra.mrb[0].mxu0 %v3193
        %v3314 = vpop.f32.mrb[0].mxu0
        %v3315 = vadd.f32 %v3246, %v3314
        %v3316 = vpop.f32.mrb[0].mxu0
        %3317 = vmatprep.mubr.f32.mxu0 %v3196
        %3318 = vmatmul.mubr.f32.gmra.mrb[0].mxu0 %v3195
        %v3319 = vpop.f32.mrb[0].mxu0
        %v3320 = vadd.f32 %v3246, %v3319
        %v3321 = vpop.f32.mrb[0].mxu0
        %3322 = vmatprep.mubr.f32.mxu0 %v3198
        %3323 = vmatmul.mubr.f32.gmra.mrb[0].mxu0 %v3197
        %v3324 = vpop.f32.mrb[0].mxu0
        %v3325 = vadd.f32 %v3246, %v3324
        %v3326 = vpop.f32.mrb[0].mxu0
        %3327 = vmatprep.mubr.f32.mxu0 %v3200
        %3328 = vmatmul.mubr.f32.gmra.mrb[0].mxu0 %v3199
        %v3329 = vpop.f32.mrb[0].mxu0
        %v3330 = vadd.f32 %v3246, %v3329
        %v3331 = vpop.f32.mrb[0].mxu0
        %3332 = vmatprep.mubr.f32.mxu0 %v3202
        %3333 = vmatmul.mubr.f32.gmra.mrb[0].mxu0 %v3201
        %v3334 = vpop.f32.mrb[0].mxu0
        %v3335 = vadd.f32 %v3246, %v3334
        %v3336 = vpop.f32.mrb[0].mxu0
        %3337 = vmatprep.mubr.f32.mxu0 %v3204
        %3338 = vmatmul.mubr.f32.gmra.mrb[0].mxu0 %v3203
        %v3339 = vpop.f32.mrb[0].mxu0
        %v3340 = vadd.f32 %v3246, %v3339
        %v3341 = vpop.f32.mrb[0].mxu0
        %3342 = vmatprep.mubr.f32.mxu0 %v3206
        %3343 = vmatmul.mubr.f32.gmra.mrb[0].mxu0 %v3205
        %v3344 = vpop.f32.mrb[0].mxu0
        %v3345 = vadd.f32 %v3246, %v3344
        %v3346 = vpop.f32.mrb[0].mxu0
        %3347 = vmatprep.mubr.f32.mxu0 %v3208
        %3348 = vmatmul.mubr.f32.gmra.mrb[0].mxu0 %v3207
        %v3349 = vpop.f32.mrb[0].mxu0
        %v3350 = vadd.f32 %v3246, %v3349
        %v3351 = vpop.f32.mrb[0].mxu0
        %3352 = vdwg.mxu0
        %v3353 = vadd.f32 %v2900, %v3315
        %v3354 = vadd.f32 %v2901, %v3320
        %v3355 = vadd.f32 %v2902, %v3325
        %v3356 = vadd.f32 %v2903, %v3330
        %v3357 = vadd.f32 %v2904, %v3335
        %v3358 = vadd.f32 %v2905, %v3340
        %v3359 = vadd.f32 %v2906, %v3345
        %v3360 = vadd.f32 %v2907, %v3350
        %v3361 = vld [vmem:[%s12] sm:$0x1]
        %v3362 = vld [vmem:[%s13] sm:$0x1]
        %3363 = vadd.xlane.f32.xlu0 %v3353
        %v3364 = vpop.xlane.xlu0 %3363
        %3365 = vadd.xlane.f32.xlu0 %v3354
        %v3366 = vpop.xlane.xlu0 %3365
        %3367 = vadd.xlane.f32.xlu0 %v3355
        %v3368 = vpop.xlane.xlu0 %3367
        %3369 = vadd.xlane.f32.xlu0 %v3356
        %v3370 = vpop.xlane.xlu0 %3369
        %3371 = vadd.xlane.f32.xlu0 %v3357
        %v3372 = vpop.xlane.xlu0 %3371
        %3373 = vadd.xlane.f32.xlu0 %v3358
        %v3374 = vpop.xlane.xlu0 %3373
        %3375 = vadd.xlane.f32.xlu0 %v3359
        %v3376 = vpop.xlane.xlu0 %3375
        %3377 = vadd.xlane.f32.xlu0 %v3360
        %v3378 = vpop.xlane.xlu0 %3377
        %v3379 = vmul.f32 %v3364, %v2807
        %v3380 = vmul.f32 %v3366, %v2807
        %v3381 = vmul.f32 %v3368, %v2807
        %v3382 = vmul.f32 %v3370, %v2807
        %v3383 = vmul.f32 %v3372, %v2807
        %v3384 = vmul.f32 %v3374, %v2807
        %v3385 = vmul.f32 %v3376, %v2807
        %v3386 = vmul.f32 %v3378, %v2807
        %v3387 = vsub.f32 %v3353, %v3379
        %v3388 = vsub.f32 %v3354, %v3380
        %v3389 = vsub.f32 %v3355, %v3381
        %v3390 = vsub.f32 %v3356, %v3382
        %v3391 = vsub.f32 %v3357, %v3383
        %v3392 = vsub.f32 %v3358, %v3384
        %v3393 = vsub.f32 %v3359, %v3385
        %v3394 = vsub.f32 %v3360, %v3386
        %v3395 = vmul.f32 %v3387, %v3387
        %v3396 = vmul.f32 %v3388, %v3388
        %v3397 = vmul.f32 %v3389, %v3389
        %v3398 = vmul.f32 %v3390, %v3390
        %v3399 = vmul.f32 %v3391, %v3391
        %v3400 = vmul.f32 %v3392, %v3392
        %v3401 = vmul.f32 %v3393, %v3393
        %v3402 = vmul.f32 %v3394, %v3394
        %3403 = vadd.xlane.f32.xlu0 %v3395
        %v3404 = vpop.xlane.xlu0 %3403
        %3405 = vadd.xlane.f32.xlu0 %v3396
        %v3406 = vpop.xlane.xlu0 %3405
        %3407 = vadd.xlane.f32.xlu0 %v3397
        %v3408 = vpop.xlane.xlu0 %3407
        %3409 = vadd.xlane.f32.xlu0 %v3398
        %v3410 = vpop.xlane.xlu0 %3409
        %3411 = vadd.xlane.f32.xlu0 %v3399
        %v3412 = vpop.xlane.xlu0 %3411
        %3413 = vadd.xlane.f32.xlu0 %v3400
        %v3414 = vpop.xlane.xlu0 %3413
        %3415 = vadd.xlane.f32.xlu0 %v3401
        %v3416 = vpop.xlane.xlu0 %3415
        %3417 = vadd.xlane.f32.xlu0 %v3402
        %v3418 = vpop.xlane.xlu0 %3417
        %v3419 = vmul.f32 %v3404, %v2807
        %v3420 = vmul.f32 %v3406, %v2807
        %v3421 = vmul.f32 %v3408, %v2807
        %v3422 = vmul.f32 %v3410, %v2807
        %v3423 = vmul.f32 %v3412, %v2807
        %v3424 = vmul.f32 %v3414, %v2807
        %v3425 = vmul.f32 %v3416, %v2807
        %v3426 = vmul.f32 %v3418, %v2807
        %v3427 = vadd.f32 %v3419, 1e-05
        %v3428 = vadd.f32 %v3420, 1e-05
        %v3429 = vadd.f32 %v3421, 1e-05
        %v3430 = vadd.f32 %v3422, 1e-05
        %v3431 = vadd.f32 %v3423, 1e-05
        %v3432 = vadd.f32 %v3424, 1e-05
        %v3433 = vadd.f32 %v3425, 1e-05
        %v3434 = vadd.f32 %v3426, 1e-05
        %v3435 = vrsqrt.pop %v3427
        %v3436 = vrsqrt.pop %v3428
        %v3437 = vrsqrt.pop %v3429
        %v3438 = vrsqrt.pop %v3430
        %v3439 = vrsqrt.pop %v3431
        %v3440 = vrsqrt.pop %v3432
        %v3441 = vrsqrt.pop %v3433
        %v3442 = vrsqrt.pop %v3434
        %v3443 = vmul.f32 %v3387, %v3435
        %v3444 = vmul.f32 %v3388, %v3436
        %v3445 = vmul.f32 %v3389, %v3437
        %v3446 = vmul.f32 %v3390, %v3438
        %v3447 = vmul.f32 %v3391, %v3439
        %v3448 = vmul.f32 %v3392, %v3440
        %v3449 = vmul.f32 %v3393, %v3441
        %v3450 = vmul.f32 %v3394, %v3442
        %v3452 = vlaneseq
        %v3453 = vshrl.u32 %v3452, 7
        %v3454 = vsub.s32 0, %v3453
        %v3455 = vrot.slane %v3361, %v3454
        %v3457 = vmul.f32 %v3443, %v3455
        %v3458 = vmul.f32 %v3444, %v3455
        %v3459 = vmul.f32 %v3445, %v3455
        %v3460 = vmul.f32 %v3446, %v3455
        %v3461 = vmul.f32 %v3447, %v3455
        %v3462 = vmul.f32 %v3448, %v3455
        %v3463 = vmul.f32 %v3449, %v3455
        %v3464 = vmul.f32 %v3450, %v3455
        %v3466 = vlaneseq
        %v3467 = vshrl.u32 %v3466, 7
        %v3468 = vsub.s32 0, %v3467
        %v3469 = vrot.slane %v3362, %v3468
        %v3471 = vadd.f32 %v3457, %v3469
        %v3472 = vadd.f32 %v3458, %v3469
        %v3473 = vadd.f32 %v3459, %v3469
        %v3474 = vadd.f32 %v3460, %v3469
        %v3475 = vadd.f32 %v3461, %v3469
        %v3476 = vadd.f32 %v3462, %v3469
        %v3477 = vadd.f32 %v3463, %v3469
        %v3478 = vadd.f32 %v3464, %v3469
        %3479 = vst [vmem:[%s558] sm:$0xff] %v3471
        %3480 = vst [vmem:[%s558 + $0x8] sm:$0xff] %v3472
        %3481 = vst [vmem:[%s558 + $0x10] sm:$0xff] %v3473
        %3482 = vst [vmem:[%s558 + $0x18] sm:$0xff] %v3474
        %3483 = vst [vmem:[%s558 + $0x20] sm:$0xff] %v3475
        %3484 = vst [vmem:[%s558 + $0x28] sm:$0xff] %v3476
        %3485 = vst [vmem:[%s558 + $0x30] sm:$0xff] %v3477
        %3486 = vst [vmem:[%s558 + $0x38] sm:$0xff] %v3478
        %s3487 = sand.u32 %s341, 1
        %s3488 = scalar_lea.sflag [#allocation4], %s3487
        %s3489 = sand.u32 %s341, 1
        %s3490 = smul.addr %s3489, 64
        %s3491 = scalar_lea.vmem [#allocation13], %s3490
        // Predicated region
        $region101: #{tpu_custom_call.1} parent=75 // pred_check
          %p3492 = pneg %p351
        $region102: #{tpu_custom_call.1} parent=75 // pred_check_branch
          %3494 = sbr.rel (%p3492) target = $region104
        $region103: #{tpu_custom_call.1} parent=75 // pred_region
          %s3496 = ssub.s32 1024, 1024
          %3497 = vsyncadd %s3488, %s3496
          %s3498 = smul.addr %s34, 8
          %s3499 = smul.addr %s3498, 128
          %s3500 = scalar_lea.hbm %s14, %s3499
          %s3501 = sshll.u32 %s3491, 4
          %s3502 = int_to_ptr.vmem [resolvable:$true] %s3501
          %3507 = dma.vmem_to_hbm [thread:$0]  %s3502, 1024, %s3500, %s3488, 128, 128, 8
        $region104: #{tpu_custom_call.1} parent=75 // pred_fallthru
          _
      $region76: #{tpu_custom_call.1} parent=5 // pred_fallthru
        _
      %p3508 = scmp.le.s32.totalorder 2, %s29
      // Predicated region
      $region105: #{tpu_custom_call.1} parent=5 // pred_check
        %p3509 = pneg %p3508
      $region106: #{tpu_custom_call.1} parent=5 // pred_check_branch
        %3511 = sbr.rel (%p3509) target = $region108
      $region107: #{tpu_custom_call.1} parent=5 // pred_region
        %s3512 = ssub.s32 %s29, 2
        // Predicated region
        $region109: #{tpu_custom_call.1} parent=107 // pred_check
          %p3513 = pneg %p357
        $region110: #{tpu_custom_call.1} parent=107 // pred_check_branch
          %3515 = sbr.rel (%p3513) target = $region112
        $region111: #{tpu_custom_call.1} parent=107 // pred_region
          %s3516 = sand.u32 %s342, 1
          %s3517 = scalar_lea.sflag [#allocation4], %s3516
          %s3518 = sand.u32 %s342, 1
          %s3519 = smul.addr %s3518, 64
          %s3520 = scalar_lea.vmem [#allocation13], %s3519
          %3521 = dma.done %s3517, 1024
        $region112: #{tpu_custom_call.1} parent=107 // pred_fallthru
          _
      $region108: #{tpu_custom_call.1} parent=5 // pred_fallthru
        _
    $region6: #{tpu_custom_call.1} parent=1 // loop_footer
      %s33 = sadd.s32 1, %s29
    $region7: #{tpu_custom_call.1} parent=1 // loop_footer_branch
      %28 = sbr.rel target = $region3
    $region8: #{tpu_custom_call.1} parent=1 // loop_exit
      _
    %3522 = vsyncpa [#allocation3], 1
    %s3523 = scalar_lea.sflag [#allocation3], 1
    %3524 = vsyncpa %s3523, 1
    %3525 = vsyncpa [#allocation6], 1
    %3526 = vsyncpa [#allocation9], 1
    %3527 = vsyncpa [#allocation12], 1
    %3528 = vsyncpa [#allocation4], 1
    %s3529 = scalar_lea.sflag [#allocation4], 1
    %3530 = vsyncpa %s3529, 1

</llo_original>
